<compile_context>
chip_gen: v7x
topology: tpu7x:2x2x1
jax: 0.10.0
libtpu: 0.0.40
codegen_flags: <defaults>
</compile_context>

<pallas_src>
import jax
import jax.numpy as jnp
from jax import lax
from jax.experimental import pallas as pl
from jax.experimental.pallas import tpu as pltpu


# ----------------------------- parameter construction -----------------------------

def init_params(key, num_of_feature, n_classes, dense_size, kernal_size, flat_features):
    keys = iter(jax.random.split(key, 64))

    def nrm(shape, s=0.1):
        return jax.random.normal(next(keys), shape, jnp.float32) * s

    def conv_params(cin, cout, k):
        return dict(w=nrm((cout, cin, k)), b=nrm((cout,)),
                    gamma=1.0 + nrm((cout,), 0.05), beta=nrm((cout,), 0.05),
                    mean=nrm((cout,), 0.05), var=1.0 + jnp.abs(nrm((cout,), 0.05)))

    return dict(
        conv1=conv_params(num_of_feature, 64, kernal_size[0]),
        conv2=conv_params(64, 64, kernal_size[1]),
        conv3=conv_params(64, 128, kernal_size[1]),
        conv4=conv_params(128, 128, kernal_size[2]),
        conv5=conv_params(128, 128, kernal_size[3]),
        attn=dict(wq=nrm((128, 128)), bq=nrm((128,)),
                  wk=nrm((128, 128)), bk=nrm((128,)),
                  wv=nrm((128, 128)), bv=nrm((128,))),
        fc=dict(w1=nrm((flat_features, dense_size)), b1=nrm((dense_size,)),
                w2=nrm((dense_size, n_classes)), b2=nrm((n_classes,))),
    )


def prepare_params(params, kernal_size, eps=1e-5, mxu_dtype=jnp.bfloat16):
    """One-time rearrangement into kernel-ready layouts (done outside the kernel)."""
    out = {"kernal_size": tuple(int(k) for k in kernal_size)}

    def conv(name, p):
        # BatchNorm1d (eval) folded to per-channel scale/shift; bias kept separate
        # because the torch order is Conv -> bias -> ReLU -> BN.
        scale = p["gamma"] / jnp.sqrt(p["var"] + eps)
        shift = p["beta"] - p["mean"] * scale
        out["wt" + name] = jnp.transpose(p["w"], (2, 1, 0)).astype(mxu_dtype)   # (k, Cin, Cout)
        out["p" + name] = jnp.stack([p["b"], scale, shift], axis=0).astype(jnp.float32)  # (3, Cout)

    conv("1", params["conv1"])
    conv("2", params["conv2"])
    conv("3", params["conv3"])
    conv("4", params["conv4"])
    conv("5", params["conv5"])

    a = params["attn"]
    out["wqkv"] = jnp.concatenate([a["wq"], a["wk"], a["wv"]], axis=1).astype(mxu_dtype)  # (E, 3E)
    out["bqkv"] = jnp.concatenate([a["bq"], a["bk"], a["bv"]], axis=0)[None, :].astype(jnp.float32)

    f = params["fc"]
    flat, dense = f["w1"].shape
    E = a["wq"].shape[0]
    Lf = flat // E
    # torch flattens attention output channel-major (permute(0,2,1).view(B,-1)):
    # flat index = c*Lf + l.  Rearrange w1 so the flatten becomes a sum of
    # per-position (1,E)@(E,dense) matmuls inside the kernel (no in-kernel reshape).
    out["w1r"] = f["w1"].reshape(E, Lf, dense).transpose(1, 0, 2).astype(mxu_dtype)  # (Lf, E, dense)
    out["b1"] = f["b1"][None, :].astype(jnp.float32)
    out["w2"] = f["w2"].astype(mxu_dtype)
    out["b2"] = f["b2"][None, :].astype(jnp.float32)
    return out


# ----------------------------- fused forward -----------------------------

def pid_cnn1d_forward(prepared, x_ncw):
    ks = prepared["kernal_size"]
    B, Cin, L0 = x_ncw.shape
    pad = 1                                   # torch: padding=1 on every conv

    C1 = prepared["wt1"].shape[2]
    C2 = prepared["wt2"].shape[2]
    C3 = prepared["wt3"].shape[2]
    C4 = prepared["wt4"].shape[2]
    C5 = prepared["wt5"].shape[2]
    E = prepared["wqkv"].shape[0]
    n_classes = prepared["b2"].shape[-1]
    cdt = prepared["wt1"].dtype               # MXU operand dtype (bf16)

    # length bookkeeping (matches nn.Sequential above)
    Lc1 = L0 + 2 * pad - ks[0] + 1
    Lc2 = Lc1 + 2 * pad - ks[1] + 1
    Lp1 = (Lc2 - ks[1]) // ks[1] + 1
    Lc3 = Lp1 + 2 * pad - ks[1] + 1
    Lc4 = Lc3 + 2 * pad - ks[2] + 1
    Lp2 = (Lc4 - ks[2]) // ks[2] + 1
    Lc5 = Lp2 + 2 * pad - ks[3] + 1
    Lp3 = (Lc5 - ks[3]) // ks[3] + 1

    inv_sqrt_e = 1.0 / (float(E) ** 0.5)

    # ---------------- kernel helpers (traced, static shapes) ----------------
    def conv_relu_bn(src_ref, wt_ref, p_ref, k, lout):
        # out = scale * ReLU(conv(x) + b) + shift ; conv = sum_k shifted matmuls
        acc = jnp.dot(src_ref[0:lout, :].astype(cdt), wt_ref[0],
                      preferred_element_type=jnp.float32)
        for kk in range(1, k):
            acc = acc + jnp.dot(src_ref[kk:kk + lout, :].astype(cdt), wt_ref[kk],
                                preferred_element_type=jnp.float32)
        acc = jnp.maximum(acc + p_ref[0:1, :], 0.0)         # bias -> ReLU
        return acc * p_ref[1:2, :] + p_ref[2:3, :]          # BatchNorm (eval) affine

    def store_padded(dst_ref, val, lval):
        c = val.shape[-1]
        dst_ref[0:pad, :] = jnp.zeros((pad, c), jnp.float32)
        dst_ref[pad + lval:pad + lval + pad, :] = jnp.zeros((pad, c), jnp.float32)
        dst_ref[pad:pad + lval, :] = val

    def pool(src_ref, w, lp, mode):
        taps = [src_ref[pl.ds(j, lp, w), :] for j in range(w)]   # strided VMEM reads
        out = taps[0]
        for t in taps[1:]:
            out = jnp.maximum(out, t) if mode == "max" else out + t
        return out if mode == "max" else out * (1.0 / w)

    # ---------------- the fused kernel (one batch element per grid step) ----------------
    def kernel(x_ref, wt1, p1, wt2, p2, wt3, p3, wt4, p4, wt5, p5,
               wqkv, bqkv, w1r, b1, w2, b2, o_ref,
               xp1, xp2, cb2, xp3, xp4, cb4, xp5, cb5):
        # ---- convnet ----
        store_padded(xp1, x_ref[0], L0)
        store_padded(xp2, conv_relu_bn(xp1, wt1, p1, ks[0], Lc1), Lc1)
        cb2[...] = conv_relu_bn(xp2, wt2, p2, ks[1], Lc2)
        store_padded(xp3, pool(cb2, ks[1], Lp1, "max"), Lp1)          # MaxPool + Dropout(id)
        store_padded(xp4, conv_relu_bn(xp3, wt3, p3, ks[1], Lc3), Lc3)
        cb4[...] = conv_relu_bn(xp4, wt4, p4, ks[2], Lc4)
        store_padded(xp5, pool(cb4, ks[2], Lp2, "max"), Lp2)          # MaxPool + Dropout(id)
        cb5[...] = conv_relu_bn(xp5, wt5, p5, ks[3], Lc5)
        z = pool(cb5, ks[3], Lp3, "avg")                              # AvgPool -> (Lp3, E)

        # ---- self-attention (fused QKV, no explicit k.T) ----
        qkv = jnp.dot(z.astype(cdt), wqkv[...],
                      preferred_element_type=jnp.float32) + bqkv[...]
        q = qkv[:, 0:E]
        kk = qkv[:, E:2 * E]
        v = qkv[:, 2 * E:3 * E]
        s = lax.dot_general(q, kk, (((1,), (1,)), ((), ())),
                            preferred_element_type=jnp.float32) * inv_sqrt_e
        s = s - jnp.max(s, axis=-1, keepdims=True)
        pr = jnp.exp(s)
        pr = pr * pl.reciprocal(jnp.sum(pr, axis=-1, keepdims=True), approx=True)
        att = jnp.dot(pr.astype(cdt), v.astype(cdt),
                      preferred_element_type=jnp.float32)             # (Lp3, E)

        # ---- fc head: Linear -> Dropout(id) -> ReLU -> Linear -> Softmax ----
        h = b1[...]
        for l in range(Lp3):
            h = h + jnp.dot(att[l:l + 1, :].astype(cdt), w1r[l],
                            preferred_element_type=jnp.float32)
        h = jnp.maximum(h, 0.0)
        logits = jnp.dot(h.astype(cdt), w2[...],
                         preferred_element_type=jnp.float32) + b2[...]
        logits = logits - jnp.max(logits, axis=-1, keepdims=True)
        pz = jnp.exp(logits)
        o_ref[0] = pz / jnp.sum(pz, axis=-1, keepdims=True)           # exact normalisation

    # ---------------- specs ----------------
    def full2(a):
        return pl.BlockSpec(a.shape, lambda b: (0, 0))

    def full3(a):
        return pl.BlockSpec(a.shape, lambda b: (0, 0, 0))

    in_specs = [
        pl.BlockSpec((1, L0, Cin), lambda b: (b, 0, 0)),
        full3(prepared["wt1"]), full2(prepared["p1"]),
        full3(prepared["wt2"]), full2(prepared["p2"]),
        full3(prepared["wt3"]), full2(prepared["p3"]),
        full3(prepared["wt4"]), full2(prepared["p4"]),
        full3(prepared["wt5"]), full2(prepared["p5"]),
        full2(prepared["wqkv"]), full2(prepared["bqkv"]),
        full3(prepared["w1r"]), full2(prepared["b1"]),
        full2(prepared["w2"]), full2(prepared["b2"]),
    ]
    out_specs = pl.BlockSpec((1, 1, n_classes), lambda b: (b, 0, 0))
    out_shape = jax.ShapeDtypeStruct((B, 1, n_classes), jnp.float32)

    scratch_shapes = [
        pltpu.VMEM((L0 + 2 * pad, Cin), jnp.float32),    # xp1: padded input
        pltpu.VMEM((Lc1 + 2 * pad, C1), jnp.float32),    # xp2: padded conv1 out
        pltpu.VMEM((Lc2, C2), jnp.float32),              # cb2: conv2 out (pre-pool)
        pltpu.VMEM((Lp1 + 2 * pad, C2), jnp.float32),    # xp3: padded pool1 out
        pltpu.VMEM((Lc3 + 2 * pad, C3), jnp.float32),    # xp4: padded conv3 out
        pltpu.VMEM((Lc4, C4), jnp.float32),              # cb4: conv4 out (pre-pool)
        pltpu.VMEM((Lp2 + 2 * pad, C4), jnp.float32),    # xp5: padded pool2 out
        pltpu.VMEM((Lc5, C5), jnp.float32),              # cb5: conv5 out (pre-pool)
    ]

    x_ble = jnp.transpose(x_ncw, (0, 2, 1)).astype(jnp.float32)   # NCW -> (B, L, C)

    out = pl.pallas_call(
        kernel,
        out_shape=out_shape,
        grid_spec=pltpu.PrefetchScalarGridSpec(
            num_scalar_prefetch=0,
            grid=(B,),
            in_specs=in_specs,
            out_specs=out_specs,
            scratch_shapes=scratch_shapes),
        compiler_params=pltpu.CompilerParams(
            dimension_semantics=("parallel",)),
    )(x_ble,
      prepared["wt1"], prepared["p1"], prepared["wt2"], prepared["p2"],
      prepared["wt3"], prepared["p3"], prepared["wt4"], prepared["p4"],
      prepared["wt5"], prepared["p5"],
      prepared["wqkv"], prepared["bqkv"],
      prepared["w1r"], prepared["b1"], prepared["w2"], prepared["b2"])

    return out.reshape(B, n_classes)


# ----------------------------- main -----------------------------

if __name__ == "__main__":
    B, num_of_feature, max_len = 2, 4, 83
    n_classes, dense_size = 6, 512
    kernal_size = [5, 3, 3, 3]

    # replicate the torch __init__ dummy-shape computation
    L = max_len
    L = L + 2 - kernal_size[0] + 1                      # conv1 (pad=1)
    L = L + 2 - kernal_size[1] + 1                      # conv2
    L = (L - kernal_size[1]) // kernal_size[1] + 1      # maxpool
    L = L + 2 - kernal_size[1] + 1                      # conv3
    L = L + 2 - kernal_size[2] + 1                      # conv4
    L = (L - kernal_size[2]) // kernal_size[2] + 1      # maxpool
    L = L + 2 - kernal_size[3] + 1                      # conv5
    L = (L - kernal_size[3]) // kernal_size[3] + 1      # avgpool
    flat_features = 128 * L

    key = jax.random.PRNGKey(0)
    pkey, xkey = jax.random.split(key)
    params = init_params(pkey, num_of_feature, n_classes, dense_size,
                         kernal_size, flat_features)
    prepared = prepare_params(params, kernal_size)
    x = jax.random.normal(xkey, (B, num_of_feature, max_len), jnp.float32)

    out = pid_cnn1d_forward(prepared, x)
    out = jax.block_until_ready(out)

    assert out.shape == (B, n_classes)
    assert bool(jnp.all(jnp.isfinite(out)))
    # class-probability rows should sum to ~1 (final Softmax(dim=1))
    assert bool(jnp.all(jnp.abs(jnp.sum(out, axis=1) - 1.0) < 1e-4))
    print("KERNEL_OK")
</pallas_src>

<mosaic_0001>
module attributes {stable_mosaic.version = 11 : i64} {
  func.func @kernel(%arg0: i32, %arg1: memref<1x83x4xf32, #tpu.memory_space<vmem>>, %arg2: memref<5x4x64xbf16, #tpu.memory_space<vmem>>, %arg3: memref<3x64xf32, #tpu.memory_space<vmem>>, %arg4: memref<3x64x64xbf16, #tpu.memory_space<vmem>>, %arg5: memref<3x64xf32, #tpu.memory_space<vmem>>, %arg6: memref<3x64x128xbf16, #tpu.memory_space<vmem>>, %arg7: memref<3x128xf32, #tpu.memory_space<vmem>>, %arg8: memref<3x128x128xbf16, #tpu.memory_space<vmem>>, %arg9: memref<3x128xf32, #tpu.memory_space<vmem>>, %arg10: memref<3x128x128xbf16, #tpu.memory_space<vmem>>, %arg11: memref<3x128xf32, #tpu.memory_space<vmem>>, %arg12: memref<128x384xbf16, #tpu.memory_space<vmem>>, %arg13: memref<1x384xf32, #tpu.memory_space<vmem>>, %arg14: memref<3x128x512xbf16, #tpu.memory_space<vmem>>, %arg15: memref<1x512xf32, #tpu.memory_space<vmem>>, %arg16: memref<512x6xbf16, #tpu.memory_space<vmem>>, %arg17: memref<1x6xf32, #tpu.memory_space<vmem>>, %arg18: memref<1x1x6xf32, #tpu.memory_space<vmem>>, %arg19: memref<85x4xf32, #tpu.memory_space<vmem>>, %arg20: memref<83x64xf32, #tpu.memory_space<vmem>>, %arg21: memref<81x64xf32, #tpu.memory_space<vmem>>, %arg22: memref<29x64xf32, #tpu.memory_space<vmem>>, %arg23: memref<29x128xf32, #tpu.memory_space<vmem>>, %arg24: memref<27x128xf32, #tpu.memory_space<vmem>>, %arg25: memref<11x128xf32, #tpu.memory_space<vmem>>, %arg26: memref<9x128xf32, #tpu.memory_space<vmem>>) attributes {dimension_semantics = [#tpu.dimension_semantics<parallel>], iteration_bounds = array<i64: 2>, scalar_prefetch = 0 : i64, scratch_operands = 8 : i64, tpu.core_type = #tpu.core_type<tc>, window_params = [{transform_indices = @transform_0, window_bounds = array<i64: 1, 83, 4>}, {pipeline_mode = #tpu.pipeline_mode<synchronous>, transform_indices = @transform_1, window_bounds = array<i64: 5, 4, 64>}, {pipeline_mode = #tpu.pipeline_mode<synchronous>, transform_indices = @transform_2, window_bounds = array<i64: 3, 64>}, {pipeline_mode = #tpu.pipeline_mode<synchronous>, transform_indices = @transform_3, window_bounds = array<i64: 3, 64, 64>}, {pipeline_mode = #tpu.pipeline_mode<synchronous>, transform_indices = @transform_4, window_bounds = array<i64: 3, 64>}, {pipeline_mode = #tpu.pipeline_mode<synchronous>, transform_indices = @transform_5, window_bounds = array<i64: 3, 64, 128>}, {pipeline_mode = #tpu.pipeline_mode<synchronous>, transform_indices = @transform_6, window_bounds = array<i64: 3, 128>}, {pipeline_mode = #tpu.pipeline_mode<synchronous>, transform_indices = @transform_7, window_bounds = array<i64: 3, 128, 128>}, {pipeline_mode = #tpu.pipeline_mode<synchronous>, transform_indices = @transform_8, window_bounds = array<i64: 3, 128>}, {pipeline_mode = #tpu.pipeline_mode<synchronous>, transform_indices = @transform_9, window_bounds = array<i64: 3, 128, 128>}, {pipeline_mode = #tpu.pipeline_mode<synchronous>, transform_indices = @transform_10, window_bounds = array<i64: 3, 128>}, {pipeline_mode = #tpu.pipeline_mode<synchronous>, transform_indices = @transform_11, window_bounds = array<i64: 128, 384>}, {pipeline_mode = #tpu.pipeline_mode<synchronous>, transform_indices = @transform_12, window_bounds = array<i64: 1, 384>}, {pipeline_mode = #tpu.pipeline_mode<synchronous>, transform_indices = @transform_13, window_bounds = array<i64: 3, 128, 512>}, {pipeline_mode = #tpu.pipeline_mode<synchronous>, transform_indices = @transform_14, window_bounds = array<i64: 1, 512>}, {pipeline_mode = #tpu.pipeline_mode<synchronous>, transform_indices = @transform_15, window_bounds = array<i64: 512, 6>}, {pipeline_mode = #tpu.pipeline_mode<synchronous>, transform_indices = @transform_16, window_bounds = array<i64: 1, 6>}, {transform_indices = @transform_17, window_bounds = array<i64: 1, 1, 6>}]} {
    %c0 = arith.constant 0 : index
    %c0_0 = arith.constant 0 : index
    %c0_1 = arith.constant 0 : index
    %0 = vector.load %arg1[%c0, %c0_0, %c0_1] : memref<1x83x4xf32, #tpu.memory_space<vmem>>, vector<1x83x4xf32>
    %1 = vector.shape_cast %0 : vector<1x83x4xf32> to vector<83x4xf32>
    %cst = arith.constant 0.000000e+00 : f32
    %2 = vector.broadcast %cst : f32 to vector<1x4xf32>
    %c0_2 = arith.constant 0 : index
    %c0_3 = arith.constant 0 : index
    %3 = vector.load %arg19[%c0_2, %c0_3] : memref<85x4xf32, #tpu.memory_space<vmem>>, vector<1x4xf32>
    tpu.vector_store %arg19[%c0_2, %c0_3], %2 {strides = array<i32>} : memref<85x4xf32, #tpu.memory_space<vmem>>, vector<1x4xf32>,
    %cst_4 = arith.constant 0.000000e+00 : f32
    %4 = vector.broadcast %cst_4 : f32 to vector<1x4xf32>
    %c84 = arith.constant 84 : index
    %c0_5 = arith.constant 0 : index
    %5 = vector.load %arg19[%c84, %c0_5] : memref<85x4xf32, #tpu.memory_space<vmem>>, vector<1x4xf32>
    tpu.vector_store %arg19[%c84, %c0_5], %4 {strides = array<i32>} : memref<85x4xf32, #tpu.memory_space<vmem>>, vector<1x4xf32>,
    %c1 = arith.constant 1 : index
    %c0_6 = arith.constant 0 : index
    %6 = vector.load %arg19[%c1, %c0_6] : memref<85x4xf32, #tpu.memory_space<vmem>>, vector<83x4xf32>
    tpu.vector_store %arg19[%c1, %c0_6], %1 {strides = array<i32>} : memref<85x4xf32, #tpu.memory_space<vmem>>, vector<83x4xf32>,
    %c0_7 = arith.constant 0 : index
    %c0_8 = arith.constant 0 : index
    %7 = vector.load %arg19[%c0_7, %c0_8] : memref<85x4xf32, #tpu.memory_space<vmem>>, vector<81x4xf32>
    %8 = arith.truncf %7 : vector<81x4xf32> to vector<81x4xbf16>
    %c0_9 = arith.constant 0 : index
    %c0_10 = arith.constant 0 : index
    %c0_11 = arith.constant 0 : index
    %9 = vector.load %arg2[%c0_9, %c0_10, %c0_11] : memref<5x4x64xbf16, #tpu.memory_space<vmem>>, vector<1x4x64xbf16>
    %10 = vector.shape_cast %9 : vector<1x4x64xbf16> to vector<4x64xbf16>
    %cst_12 = arith.constant dense<0.000000e+00> : vector<81x64xf32>
    %11 = tpu.matmul %8, %10, %cst_12 {dimension_numbers = #tpu.dot_dimension_numbers<[1], [0], [0], [1], [0, 0, 1, 1], [], []>} : vector<81x4xbf16>, vector<4x64xbf16>, vector<81x64xf32> -> vector<81x64xf32>
    %c1_13 = arith.constant 1 : index
    %c0_14 = arith.constant 0 : index
    %12 = vector.load %arg19[%c1_13, %c0_14] : memref<85x4xf32, #tpu.memory_space<vmem>>, vector<81x4xf32>
    %13 = arith.truncf %12 : vector<81x4xf32> to vector<81x4xbf16>
    %c1_15 = arith.constant 1 : index
    %c0_16 = arith.constant 0 : index
    %c0_17 = arith.constant 0 : index
    %14 = vector.load %arg2[%c1_15, %c0_16, %c0_17] : memref<5x4x64xbf16, #tpu.memory_space<vmem>>, vector<1x4x64xbf16>
    %15 = vector.shape_cast %14 : vector<1x4x64xbf16> to vector<4x64xbf16>
    %cst_18 = arith.constant dense<0.000000e+00> : vector<81x64xf32>
    %16 = tpu.matmul %13, %15, %cst_18 {dimension_numbers = #tpu.dot_dimension_numbers<[1], [0], [0], [1], [0, 0, 1, 1], [], []>} : vector<81x4xbf16>, vector<4x64xbf16>, vector<81x64xf32> -> vector<81x64xf32>
    %17 = arith.addf %11, %16 : vector<81x64xf32>
    %c2 = arith.constant 2 : index
    %c0_19 = arith.constant 0 : index
    %18 = vector.load %arg19[%c2, %c0_19] : memref<85x4xf32, #tpu.memory_space<vmem>>, vector<81x4xf32>
    %19 = arith.truncf %18 : vector<81x4xf32> to vector<81x4xbf16>
    %c2_20 = arith.constant 2 : index
    %c0_21 = arith.constant 0 : index
    %c0_22 = arith.constant 0 : index
    %20 = vector.load %arg2[%c2_20, %c0_21, %c0_22] : memref<5x4x64xbf16, #tpu.memory_space<vmem>>, vector<1x4x64xbf16>
    %21 = vector.shape_cast %20 : vector<1x4x64xbf16> to vector<4x64xbf16>
    %cst_23 = arith.constant dense<0.000000e+00> : vector<81x64xf32>
    %22 = tpu.matmul %19, %21, %cst_23 {dimension_numbers = #tpu.dot_dimension_numbers<[1], [0], [0], [1], [0, 0, 1, 1], [], []>} : vector<81x4xbf16>, vector<4x64xbf16>, vector<81x64xf32> -> vector<81x64xf32>
    %23 = arith.addf %17, %22 : vector<81x64xf32>
    %c3 = arith.constant 3 : index
    %c0_24 = arith.constant 0 : index
    %24 = vector.load %arg19[%c3, %c0_24] : memref<85x4xf32, #tpu.memory_space<vmem>>, vector<81x4xf32>
    %25 = arith.truncf %24 : vector<81x4xf32> to vector<81x4xbf16>
    %c3_25 = arith.constant 3 : index
    %c0_26 = arith.constant 0 : index
    %c0_27 = arith.constant 0 : index
    %26 = vector.load %arg2[%c3_25, %c0_26, %c0_27] : memref<5x4x64xbf16, #tpu.memory_space<vmem>>, vector<1x4x64xbf16>
    %27 = vector.shape_cast %26 : vector<1x4x64xbf16> to vector<4x64xbf16>
    %cst_28 = arith.constant dense<0.000000e+00> : vector<81x64xf32>
    %28 = tpu.matmul %25, %27, %cst_28 {dimension_numbers = #tpu.dot_dimension_numbers<[1], [0], [0], [1], [0, 0, 1, 1], [], []>} : vector<81x4xbf16>, vector<4x64xbf16>, vector<81x64xf32> -> vector<81x64xf32>
    %29 = arith.addf %23, %28 : vector<81x64xf32>
    %c4 = arith.constant 4 : index
    %c0_29 = arith.constant 0 : index
    %30 = vector.load %arg19[%c4, %c0_29] : memref<85x4xf32, #tpu.memory_space<vmem>>, vector<81x4xf32>
    %31 = arith.truncf %30 : vector<81x4xf32> to vector<81x4xbf16>
    %c4_30 = arith.constant 4 : index
    %c0_31 = arith.constant 0 : index
    %c0_32 = arith.constant 0 : index
    %32 = vector.load %arg2[%c4_30, %c0_31, %c0_32] : memref<5x4x64xbf16, #tpu.memory_space<vmem>>, vector<1x4x64xbf16>
    %33 = vector.shape_cast %32 : vector<1x4x64xbf16> to vector<4x64xbf16>
    %cst_33 = arith.constant dense<0.000000e+00> : vector<81x64xf32>
    %34 = tpu.matmul %31, %33, %cst_33 {dimension_numbers = #tpu.dot_dimension_numbers<[1], [0], [0], [1], [0, 0, 1, 1], [], []>} : vector<81x4xbf16>, vector<4x64xbf16>, vector<81x64xf32> -> vector<81x64xf32>
    %35 = arith.addf %29, %34 : vector<81x64xf32>
    %c0_34 = arith.constant 0 : index
    %c0_35 = arith.constant 0 : index
    %36 = vector.load %arg3[%c0_34, %c0_35] : memref<3x64xf32, #tpu.memory_space<vmem>>, vector<1x64xf32>
    %37 = vector.broadcast %36 : vector<1x64xf32> to vector<81x64xf32>
    %38 = arith.addf %35, %37 : vector<81x64xf32>
    %cst_36 = arith.constant 0.000000e+00 : f32
    %39 = vector.broadcast %cst_36 : f32 to vector<81x64xf32>
    %40 = arith.maximumf %38, %39 : vector<81x64xf32>
    %c1_37 = arith.constant 1 : index
    %c0_38 = arith.constant 0 : index
    %41 = vector.load %arg3[%c1_37, %c0_38] : memref<3x64xf32, #tpu.memory_space<vmem>>, vector<1x64xf32>
    %42 = vector.broadcast %41 : vector<1x64xf32> to vector<81x64xf32>
    %43 = arith.mulf %40, %42 : vector<81x64xf32>
    %c2_39 = arith.constant 2 : index
    %c0_40 = arith.constant 0 : index
    %44 = vector.load %arg3[%c2_39, %c0_40] : memref<3x64xf32, #tpu.memory_space<vmem>>, vector<1x64xf32>
    %45 = vector.broadcast %44 : vector<1x64xf32> to vector<81x64xf32>
    %46 = arith.addf %43, %45 : vector<81x64xf32>
    %cst_41 = arith.constant 0.000000e+00 : f32
    %47 = vector.broadcast %cst_41 : f32 to vector<1x64xf32>
    %c0_42 = arith.constant 0 : index
    %c0_43 = arith.constant 0 : index
    %48 = vector.load %arg20[%c0_42, %c0_43] : memref<83x64xf32, #tpu.memory_space<vmem>>, vector<1x64xf32>
    tpu.vector_store %arg20[%c0_42, %c0_43], %47 {strides = array<i32>} : memref<83x64xf32, #tpu.memory_space<vmem>>, vector<1x64xf32>,
    %cst_44 = arith.constant 0.000000e+00 : f32
    %49 = vector.broadcast %cst_44 : f32 to vector<1x64xf32>
    %c82 = arith.constant 82 : index
    %c0_45 = arith.constant 0 : index
    %50 = vector.load %arg20[%c82, %c0_45] : memref<83x64xf32, #tpu.memory_space<vmem>>, vector<1x64xf32>
    tpu.vector_store %arg20[%c82, %c0_45], %49 {strides = array<i32>} : memref<83x64xf32, #tpu.memory_space<vmem>>, vector<1x64xf32>,
    %c1_46 = arith.constant 1 : index
    %c0_47 = arith.constant 0 : index
    %51 = vector.load %arg20[%c1_46, %c0_47] : memref<83x64xf32, #tpu.memory_space<vmem>>, vector<81x64xf32>
    tpu.vector_store %arg20[%c1_46, %c0_47], %46 {strides = array<i32>} : memref<83x64xf32, #tpu.memory_space<vmem>>, vector<81x64xf32>,
    %c0_48 = arith.constant 0 : index
    %c0_49 = arith.constant 0 : index
    %52 = vector.load %arg20[%c0_48, %c0_49] : memref<83x64xf32, #tpu.memory_space<vmem>>, vector<81x64xf32>
    %53 = arith.truncf %52 : vector<81x64xf32> to vector<81x64xbf16>
    %c0_50 = arith.constant 0 : index
    %c0_51 = arith.constant 0 : index
    %c0_52 = arith.constant 0 : index
    %54 = vector.load %arg4[%c0_50, %c0_51, %c0_52] : memref<3x64x64xbf16, #tpu.memory_space<vmem>>, vector<1x64x64xbf16>
    %55 = vector.shape_cast %54 : vector<1x64x64xbf16> to vector<64x64xbf16>
    %cst_53 = arith.constant dense<0.000000e+00> : vector<81x64xf32>
    %56 = tpu.matmul %53, %55, %cst_53 {dimension_numbers = #tpu.dot_dimension_numbers<[1], [0], [0], [1], [0, 0, 1, 1], [], []>} : vector<81x64xbf16>, vector<64x64xbf16>, vector<81x64xf32> -> vector<81x64xf32>
    %c1_54 = arith.constant 1 : index
    %c0_55 = arith.constant 0 : index
    %57 = vector.load %arg20[%c1_54, %c0_55] : memref<83x64xf32, #tpu.memory_space<vmem>>, vector<81x64xf32>
    %58 = arith.truncf %57 : vector<81x64xf32> to vector<81x64xbf16>
    %c1_56 = arith.constant 1 : index
    %c0_57 = arith.constant 0 : index
    %c0_58 = arith.constant 0 : index
    %59 = vector.load %arg4[%c1_56, %c0_57, %c0_58] : memref<3x64x64xbf16, #tpu.memory_space<vmem>>, vector<1x64x64xbf16>
    %60 = vector.shape_cast %59 : vector<1x64x64xbf16> to vector<64x64xbf16>
    %cst_59 = arith.constant dense<0.000000e+00> : vector<81x64xf32>
    %61 = tpu.matmul %58, %60, %cst_59 {dimension_numbers = #tpu.dot_dimension_numbers<[1], [0], [0], [1], [0, 0, 1, 1], [], []>} : vector<81x64xbf16>, vector<64x64xbf16>, vector<81x64xf32> -> vector<81x64xf32>
    %62 = arith.addf %56, %61 : vector<81x64xf32>
    %c2_60 = arith.constant 2 : index
    %c0_61 = arith.constant 0 : index
    %63 = vector.load %arg20[%c2_60, %c0_61] : memref<83x64xf32, #tpu.memory_space<vmem>>, vector<81x64xf32>
    %64 = arith.truncf %63 : vector<81x64xf32> to vector<81x64xbf16>
    %c2_62 = arith.constant 2 : index
    %c0_63 = arith.constant 0 : index
    %c0_64 = arith.constant 0 : index
    %65 = vector.load %arg4[%c2_62, %c0_63, %c0_64] : memref<3x64x64xbf16, #tpu.memory_space<vmem>>, vector<1x64x64xbf16>
    %66 = vector.shape_cast %65 : vector<1x64x64xbf16> to vector<64x64xbf16>
    %cst_65 = arith.constant dense<0.000000e+00> : vector<81x64xf32>
    %67 = tpu.matmul %64, %66, %cst_65 {dimension_numbers = #tpu.dot_dimension_numbers<[1], [0], [0], [1], [0, 0, 1, 1], [], []>} : vector<81x64xbf16>, vector<64x64xbf16>, vector<81x64xf32> -> vector<81x64xf32>
    %68 = arith.addf %62, %67 : vector<81x64xf32>
    %c0_66 = arith.constant 0 : index
    %c0_67 = arith.constant 0 : index
    %69 = vector.load %arg5[%c0_66, %c0_67] : memref<3x64xf32, #tpu.memory_space<vmem>>, vector<1x64xf32>
    %70 = vector.broadcast %69 : vector<1x64xf32> to vector<81x64xf32>
    %71 = arith.addf %68, %70 : vector<81x64xf32>
    %cst_68 = arith.constant 0.000000e+00 : f32
    %72 = vector.broadcast %cst_68 : f32 to vector<81x64xf32>
    %73 = arith.maximumf %71, %72 : vector<81x64xf32>
    %c1_69 = arith.constant 1 : index
    %c0_70 = arith.constant 0 : index
    %74 = vector.load %arg5[%c1_69, %c0_70] : memref<3x64xf32, #tpu.memory_space<vmem>>, vector<1x64xf32>
    %75 = vector.broadcast %74 : vector<1x64xf32> to vector<81x64xf32>
    %76 = arith.mulf %73, %75 : vector<81x64xf32>
    %c2_71 = arith.constant 2 : index
    %c0_72 = arith.constant 0 : index
    %77 = vector.load %arg5[%c2_71, %c0_72] : memref<3x64xf32, #tpu.memory_space<vmem>>, vector<1x64xf32>
    %78 = vector.broadcast %77 : vector<1x64xf32> to vector<81x64xf32>
    %79 = arith.addf %76, %78 : vector<81x64xf32>
    %c0_73 = arith.constant 0 : index
    %c0_74 = arith.constant 0 : index
    %80 = vector.load %arg21[%c0_73, %c0_74] : memref<81x64xf32, #tpu.memory_space<vmem>>, vector<81x64xf32>
    tpu.vector_store %arg21[%c0_73, %c0_74], %79 {strides = array<i32>} : memref<81x64xf32, #tpu.memory_space<vmem>>, vector<81x64xf32>,
    %c0_75 = arith.constant 0 : index
    %c0_76 = arith.constant 0 : index
    %81 = tpu.strided_load %arg21[%c0_75, %c0_76] {strides = array<i32: 3, 1>} : memref<81x64xf32, #tpu.memory_space<vmem>>, vector<27x64xf32>
    %c1_77 = arith.constant 1 : index
    %c0_78 = arith.constant 0 : index
    %82 = tpu.strided_load %arg21[%c1_77, %c0_78] {strides = array<i32: 3, 1>} : memref<81x64xf32, #tpu.memory_space<vmem>>, vector<27x64xf32>
    %c2_79 = arith.constant 2 : index
    %c0_80 = arith.constant 0 : index
    %83 = tpu.strided_load %arg21[%c2_79, %c0_80] {strides = array<i32: 3, 1>} : memref<81x64xf32, #tpu.memory_space<vmem>>, vector<27x64xf32>
    %84 = arith.maximumf %81, %82 : vector<27x64xf32>
    %85 = arith.maximumf %84, %83 : vector<27x64xf32>
    %cst_81 = arith.constant 0.000000e+00 : f32
    %86 = vector.broadcast %cst_81 : f32 to vector<1x64xf32>
    %c0_82 = arith.constant 0 : index
    %c0_83 = arith.constant 0 : index
    %87 = vector.load %arg22[%c0_82, %c0_83] : memref<29x64xf32, #tpu.memory_space<vmem>>, vector<1x64xf32>
    tpu.vector_store %arg22[%c0_82, %c0_83], %86 {strides = array<i32>} : memref<29x64xf32, #tpu.memory_space<vmem>>, vector<1x64xf32>,
    %cst_84 = arith.constant 0.000000e+00 : f32
    %88 = vector.broadcast %cst_84 : f32 to vector<1x64xf32>
    %c28 = arith.constant 28 : index
    %c0_85 = arith.constant 0 : index
    %89 = vector.load %arg22[%c28, %c0_85] : memref<29x64xf32, #tpu.memory_space<vmem>>, vector<1x64xf32>
    tpu.vector_store %arg22[%c28, %c0_85], %88 {strides = array<i32>} : memref<29x64xf32, #tpu.memory_space<vmem>>, vector<1x64xf32>,
    %c1_86 = arith.constant 1 : index
    %c0_87 = arith.constant 0 : index
    %90 = vector.load %arg22[%c1_86, %c0_87] : memref<29x64xf32, #tpu.memory_space<vmem>>, vector<27x64xf32>
    tpu.vector_store %arg22[%c1_86, %c0_87], %85 {strides = array<i32>} : memref<29x64xf32, #tpu.memory_space<vmem>>, vector<27x64xf32>,
    %c0_88 = arith.constant 0 : index
    %c0_89 = arith.constant 0 : index
    %91 = vector.load %arg22[%c0_88, %c0_89] : memref<29x64xf32, #tpu.memory_space<vmem>>, vector<27x64xf32>
    %92 = arith.truncf %91 : vector<27x64xf32> to vector<27x64xbf16>
    %c0_90 = arith.constant 0 : index
    %c0_91 = arith.constant 0 : index
    %c0_92 = arith.constant 0 : index
    %93 = vector.load %arg6[%c0_90, %c0_91, %c0_92] : memref<3x64x128xbf16, #tpu.memory_space<vmem>>, vector<1x64x128xbf16>
    %94 = vector.shape_cast %93 : vector<1x64x128xbf16> to vector<64x128xbf16>
    %cst_93 = arith.constant dense<0.000000e+00> : vector<27x128xf32>
    %95 = tpu.matmul %92, %94, %cst_93 {dimension_numbers = #tpu.dot_dimension_numbers<[1], [0], [0], [1], [0, 0, 1, 1], [], []>} : vector<27x64xbf16>, vector<64x128xbf16>, vector<27x128xf32> -> vector<27x128xf32>
    %c1_94 = arith.constant 1 : index
    %c0_95 = arith.constant 0 : index
    %96 = vector.load %arg22[%c1_94, %c0_95] : memref<29x64xf32, #tpu.memory_space<vmem>>, vector<27x64xf32>
    %97 = arith.truncf %96 : vector<27x64xf32> to vector<27x64xbf16>
    %c1_96 = arith.constant 1 : index
    %c0_97 = arith.constant 0 : index
    %c0_98 = arith.constant 0 : index
    %98 = vector.load %arg6[%c1_96, %c0_97, %c0_98] : memref<3x64x128xbf16, #tpu.memory_space<vmem>>, vector<1x64x128xbf16>
    %99 = vector.shape_cast %98 : vector<1x64x128xbf16> to vector<64x128xbf16>
    %cst_99 = arith.constant dense<0.000000e+00> : vector<27x128xf32>
    %100 = tpu.matmul %97, %99, %cst_99 {dimension_numbers = #tpu.dot_dimension_numbers<[1], [0], [0], [1], [0, 0, 1, 1], [], []>} : vector<27x64xbf16>, vector<64x128xbf16>, vector<27x128xf32> -> vector<27x128xf32>
    %101 = arith.addf %95, %100 : vector<27x128xf32>
    %c2_100 = arith.constant 2 : index
    %c0_101 = arith.constant 0 : index
    %102 = vector.load %arg22[%c2_100, %c0_101] : memref<29x64xf32, #tpu.memory_space<vmem>>, vector<27x64xf32>
    %103 = arith.truncf %102 : vector<27x64xf32> to vector<27x64xbf16>
    %c2_102 = arith.constant 2 : index
    %c0_103 = arith.constant 0 : index
    %c0_104 = arith.constant 0 : index
    %104 = vector.load %arg6[%c2_102, %c0_103, %c0_104] : memref<3x64x128xbf16, #tpu.memory_space<vmem>>, vector<1x64x128xbf16>
    %105 = vector.shape_cast %104 : vector<1x64x128xbf16> to vector<64x128xbf16>
    %cst_105 = arith.constant dense<0.000000e+00> : vector<27x128xf32>
    %106 = tpu.matmul %103, %105, %cst_105 {dimension_numbers = #tpu.dot_dimension_numbers<[1], [0], [0], [1], [0, 0, 1, 1], [], []>} : vector<27x64xbf16>, vector<64x128xbf16>, vector<27x128xf32> -> vector<27x128xf32>
    %107 = arith.addf %101, %106 : vector<27x128xf32>
    %c0_106 = arith.constant 0 : index
    %c0_107 = arith.constant 0 : index
    %108 = vector.load %arg7[%c0_106, %c0_107] : memref<3x128xf32, #tpu.memory_space<vmem>>, vector<1x128xf32>
    %109 = vector.broadcast %108 : vector<1x128xf32> to vector<27x128xf32>
    %110 = arith.addf %107, %109 : vector<27x128xf32>
    %cst_108 = arith.constant 0.000000e+00 : f32
    %111 = vector.broadcast %cst_108 : f32 to vector<27x128xf32>
    %112 = arith.maximumf %110, %111 : vector<27x128xf32>
    %c1_109 = arith.constant 1 : index
    %c0_110 = arith.constant 0 : index
    %113 = vector.load %arg7[%c1_109, %c0_110] : memref<3x128xf32, #tpu.memory_space<vmem>>, vector<1x128xf32>
    %114 = vector.broadcast %113 : vector<1x128xf32> to vector<27x128xf32>
    %115 = arith.mulf %112, %114 : vector<27x128xf32>
    %c2_111 = arith.constant 2 : index
    %c0_112 = arith.constant 0 : index
    %116 = vector.load %arg7[%c2_111, %c0_112] : memref<3x128xf32, #tpu.memory_space<vmem>>, vector<1x128xf32>
    %117 = vector.broadcast %116 : vector<1x128xf32> to vector<27x128xf32>
    %118 = arith.addf %115, %117 : vector<27x128xf32>
    %cst_113 = arith.constant 0.000000e+00 : f32
    %119 = vector.broadcast %cst_113 : f32 to vector<1x128xf32>
    %c0_114 = arith.constant 0 : index
    %c0_115 = arith.constant 0 : index
    %120 = vector.load %arg23[%c0_114, %c0_115] : memref<29x128xf32, #tpu.memory_space<vmem>>, vector<1x128xf32>
    tpu.vector_store %arg23[%c0_114, %c0_115], %119 {strides = array<i32>} : memref<29x128xf32, #tpu.memory_space<vmem>>, vector<1x128xf32>,
    %cst_116 = arith.constant 0.000000e+00 : f32
    %121 = vector.broadcast %cst_116 : f32 to vector<1x128xf32>
    %c28_117 = arith.constant 28 : index
    %c0_118 = arith.constant 0 : index
    %122 = vector.load %arg23[%c28_117, %c0_118] : memref<29x128xf32, #tpu.memory_space<vmem>>, vector<1x128xf32>
    tpu.vector_store %arg23[%c28_117, %c0_118], %121 {strides = array<i32>} : memref<29x128xf32, #tpu.memory_space<vmem>>, vector<1x128xf32>,
    %c1_119 = arith.constant 1 : index
    %c0_120 = arith.constant 0 : index
    %123 = vector.load %arg23[%c1_119, %c0_120] : memref<29x128xf32, #tpu.memory_space<vmem>>, vector<27x128xf32>
    tpu.vector_store %arg23[%c1_119, %c0_120], %118 {strides = array<i32>} : memref<29x128xf32, #tpu.memory_space<vmem>>, vector<27x128xf32>,
    %c0_121 = arith.constant 0 : index
    %c0_122 = arith.constant 0 : index
    %124 = vector.load %arg23[%c0_121, %c0_122] : memref<29x128xf32, #tpu.memory_space<vmem>>, vector<27x128xf32>
    %125 = arith.truncf %124 : vector<27x128xf32> to vector<27x128xbf16>
    %c0_123 = arith.constant 0 : index
    %c0_124 = arith.constant 0 : index
    %c0_125 = arith.constant 0 : index
    %126 = vector.load %arg8[%c0_123, %c0_124, %c0_125] : memref<3x128x128xbf16, #tpu.memory_space<vmem>>, vector<1x128x128xbf16>
    %127 = vector.shape_cast %126 : vector<1x128x128xbf16> to vector<128x128xbf16>
    %cst_126 = arith.constant dense<0.000000e+00> : vector<27x128xf32>
    %128 = tpu.matmul %125, %127, %cst_126 {dimension_numbers = #tpu.dot_dimension_numbers<[1], [0], [0], [1], [0, 0, 1, 1], [], []>} : vector<27x128xbf16>, vector<128x128xbf16>, vector<27x128xf32> -> vector<27x128xf32>
    %c1_127 = arith.constant 1 : index
    %c0_128 = arith.constant 0 : index
    %129 = vector.load %arg23[%c1_127, %c0_128] : memref<29x128xf32, #tpu.memory_space<vmem>>, vector<27x128xf32>
    %130 = arith.truncf %129 : vector<27x128xf32> to vector<27x128xbf16>
    %c1_129 = arith.constant 1 : index
    %c0_130 = arith.constant 0 : index
    %c0_131 = arith.constant 0 : index
    %131 = vector.load %arg8[%c1_129, %c0_130, %c0_131] : memref<3x128x128xbf16, #tpu.memory_space<vmem>>, vector<1x128x128xbf16>
    %132 = vector.shape_cast %131 : vector<1x128x128xbf16> to vector<128x128xbf16>
    %cst_132 = arith.constant dense<0.000000e+00> : vector<27x128xf32>
    %133 = tpu.matmul %130, %132, %cst_132 {dimension_numbers = #tpu.dot_dimension_numbers<[1], [0], [0], [1], [0, 0, 1, 1], [], []>} : vector<27x128xbf16>, vector<128x128xbf16>, vector<27x128xf32> -> vector<27x128xf32>
    %134 = arith.addf %128, %133 : vector<27x128xf32>
    %c2_133 = arith.constant 2 : index
    %c0_134 = arith.constant 0 : index
    %135 = vector.load %arg23[%c2_133, %c0_134] : memref<29x128xf32, #tpu.memory_space<vmem>>, vector<27x128xf32>
    %136 = arith.truncf %135 : vector<27x128xf32> to vector<27x128xbf16>
    %c2_135 = arith.constant 2 : index
    %c0_136 = arith.constant 0 : index
    %c0_137 = arith.constant 0 : index
    %137 = vector.load %arg8[%c2_135, %c0_136, %c0_137] : memref<3x128x128xbf16, #tpu.memory_space<vmem>>, vector<1x128x128xbf16>
    %138 = vector.shape_cast %137 : vector<1x128x128xbf16> to vector<128x128xbf16>
    %cst_138 = arith.constant dense<0.000000e+00> : vector<27x128xf32>
    %139 = tpu.matmul %136, %138, %cst_138 {dimension_numbers = #tpu.dot_dimension_numbers<[1], [0], [0], [1], [0, 0, 1, 1], [], []>} : vector<27x128xbf16>, vector<128x128xbf16>, vector<27x128xf32> -> vector<27x128xf32>
    %140 = arith.addf %134, %139 : vector<27x128xf32>
    %c0_139 = arith.constant 0 : index
    %c0_140 = arith.constant 0 : index
    %141 = vector.load %arg9[%c0_139, %c0_140] : memref<3x128xf32, #tpu.memory_space<vmem>>, vector<1x128xf32>
    %142 = vector.broadcast %141 : vector<1x128xf32> to vector<27x128xf32>
    %143 = arith.addf %140, %142 : vector<27x128xf32>
    %cst_141 = arith.constant 0.000000e+00 : f32
    %144 = vector.broadcast %cst_141 : f32 to vector<27x128xf32>
    %145 = arith.maximumf %143, %144 : vector<27x128xf32>
    %c1_142 = arith.constant 1 : index
    %c0_143 = arith.constant 0 : index
    %146 = vector.load %arg9[%c1_142, %c0_143] : memref<3x128xf32, #tpu.memory_space<vmem>>, vector<1x128xf32>
    %147 = vector.broadcast %146 : vector<1x128xf32> to vector<27x128xf32>
    %148 = arith.mulf %145, %147 : vector<27x128xf32>
    %c2_144 = arith.constant 2 : index
    %c0_145 = arith.constant 0 : index
    %149 = vector.load %arg9[%c2_144, %c0_145] : memref<3x128xf32, #tpu.memory_space<vmem>>, vector<1x128xf32>
    %150 = vector.broadcast %149 : vector<1x128xf32> to vector<27x128xf32>
    %151 = arith.addf %148, %150 : vector<27x128xf32>
    %c0_146 = arith.constant 0 : index
    %c0_147 = arith.constant 0 : index
    %152 = vector.load %arg24[%c0_146, %c0_147] : memref<27x128xf32, #tpu.memory_space<vmem>>, vector<27x128xf32>
    tpu.vector_store %arg24[%c0_146, %c0_147], %151 {strides = array<i32>} : memref<27x128xf32, #tpu.memory_space<vmem>>, vector<27x128xf32>,
    %c0_148 = arith.constant 0 : index
    %c0_149 = arith.constant 0 : index
    %153 = tpu.strided_load %arg24[%c0_148, %c0_149] {strides = array<i32: 3, 1>} : memref<27x128xf32, #tpu.memory_space<vmem>>, vector<9x128xf32>
    %c1_150 = arith.constant 1 : index
    %c0_151 = arith.constant 0 : index
    %154 = tpu.strided_load %arg24[%c1_150, %c0_151] {strides = array<i32: 3, 1>} : memref<27x128xf32, #tpu.memory_space<vmem>>, vector<9x128xf32>
    %c2_152 = arith.constant 2 : index
    %c0_153 = arith.constant 0 : index
    %155 = tpu.strided_load %arg24[%c2_152, %c0_153] {strides = array<i32: 3, 1>} : memref<27x128xf32, #tpu.memory_space<vmem>>, vector<9x128xf32>
    %156 = arith.maximumf %153, %154 : vector<9x128xf32>
    %157 = arith.maximumf %156, %155 : vector<9x128xf32>
    %cst_154 = arith.constant 0.000000e+00 : f32
    %158 = vector.broadcast %cst_154 : f32 to vector<1x128xf32>
    %c0_155 = arith.constant 0 : index
    %c0_156 = arith.constant 0 : index
    %159 = vector.load %arg25[%c0_155, %c0_156] : memref<11x128xf32, #tpu.memory_space<vmem>>, vector<1x128xf32>
    tpu.vector_store %arg25[%c0_155, %c0_156], %158 {strides = array<i32>} : memref<11x128xf32, #tpu.memory_space<vmem>>, vector<1x128xf32>,
    %cst_157 = arith.constant 0.000000e+00 : f32
    %160 = vector.broadcast %cst_157 : f32 to vector<1x128xf32>
    %c10 = arith.constant 10 : index
    %c0_158 = arith.constant 0 : index
    %161 = vector.load %arg25[%c10, %c0_158] : memref<11x128xf32, #tpu.memory_space<vmem>>, vector<1x128xf32>
    tpu.vector_store %arg25[%c10, %c0_158], %160 {strides = array<i32>} : memref<11x128xf32, #tpu.memory_space<vmem>>, vector<1x128xf32>,
    %c1_159 = arith.constant 1 : index
    %c0_160 = arith.constant 0 : index
    %162 = vector.load %arg25[%c1_159, %c0_160] : memref<11x128xf32, #tpu.memory_space<vmem>>, vector<9x128xf32>
    tpu.vector_store %arg25[%c1_159, %c0_160], %157 {strides = array<i32>} : memref<11x128xf32, #tpu.memory_space<vmem>>, vector<9x128xf32>,
    %c0_161 = arith.constant 0 : index
    %c0_162 = arith.constant 0 : index
    %163 = vector.load %arg25[%c0_161, %c0_162] : memref<11x128xf32, #tpu.memory_space<vmem>>, vector<9x128xf32>
    %164 = arith.truncf %163 : vector<9x128xf32> to vector<9x128xbf16>
    %c0_163 = arith.constant 0 : index
    %c0_164 = arith.constant 0 : index
    %c0_165 = arith.constant 0 : index
    %165 = vector.load %arg10[%c0_163, %c0_164, %c0_165] : memref<3x128x128xbf16, #tpu.memory_space<vmem>>, vector<1x128x128xbf16>
    %166 = vector.shape_cast %165 : vector<1x128x128xbf16> to vector<128x128xbf16>
    %cst_166 = arith.constant dense<0.000000e+00> : vector<9x128xf32>
    %167 = tpu.matmul %164, %166, %cst_166 {dimension_numbers = #tpu.dot_dimension_numbers<[1], [0], [0], [1], [0, 0, 1, 1], [], []>} : vector<9x128xbf16>, vector<128x128xbf16>, vector<9x128xf32> -> vector<9x128xf32>
    %c1_167 = arith.constant 1 : index
    %c0_168 = arith.constant 0 : index
    %168 = vector.load %arg25[%c1_167, %c0_168] : memref<11x128xf32, #tpu.memory_space<vmem>>, vector<9x128xf32>
    %169 = arith.truncf %168 : vector<9x128xf32> to vector<9x128xbf16>
    %c1_169 = arith.constant 1 : index
    %c0_170 = arith.constant 0 : index
    %c0_171 = arith.constant 0 : index
    %170 = vector.load %arg10[%c1_169, %c0_170, %c0_171] : memref<3x128x128xbf16, #tpu.memory_space<vmem>>, vector<1x128x128xbf16>
    %171 = vector.shape_cast %170 : vector<1x128x128xbf16> to vector<128x128xbf16>
    %cst_172 = arith.constant dense<0.000000e+00> : vector<9x128xf32>
    %172 = tpu.matmul %169, %171, %cst_172 {dimension_numbers = #tpu.dot_dimension_numbers<[1], [0], [0], [1], [0, 0, 1, 1], [], []>} : vector<9x128xbf16>, vector<128x128xbf16>, vector<9x128xf32> -> vector<9x128xf32>
    %173 = arith.addf %167, %172 : vector<9x128xf32>
    %c2_173 = arith.constant 2 : index
    %c0_174 = arith.constant 0 : index
    %174 = vector.load %arg25[%c2_173, %c0_174] : memref<11x128xf32, #tpu.memory_space<vmem>>, vector<9x128xf32>
    %175 = arith.truncf %174 : vector<9x128xf32> to vector<9x128xbf16>
    %c2_175 = arith.constant 2 : index
    %c0_176 = arith.constant 0 : index
    %c0_177 = arith.constant 0 : index
    %176 = vector.load %arg10[%c2_175, %c0_176, %c0_177] : memref<3x128x128xbf16, #tpu.memory_space<vmem>>, vector<1x128x128xbf16>
    %177 = vector.shape_cast %176 : vector<1x128x128xbf16> to vector<128x128xbf16>
    %cst_178 = arith.constant dense<0.000000e+00> : vector<9x128xf32>
    %178 = tpu.matmul %175, %177, %cst_178 {dimension_numbers = #tpu.dot_dimension_numbers<[1], [0], [0], [1], [0, 0, 1, 1], [], []>} : vector<9x128xbf16>, vector<128x128xbf16>, vector<9x128xf32> -> vector<9x128xf32>
    %179 = arith.addf %173, %178 : vector<9x128xf32>
    %c0_179 = arith.constant 0 : index
    %c0_180 = arith.constant 0 : index
    %180 = vector.load %arg11[%c0_179, %c0_180] : memref<3x128xf32, #tpu.memory_space<vmem>>, vector<1x128xf32>
    %181 = vector.broadcast %180 : vector<1x128xf32> to vector<9x128xf32>
    %182 = arith.addf %179, %181 : vector<9x128xf32>
    %cst_181 = arith.constant 0.000000e+00 : f32
    %183 = vector.broadcast %cst_181 : f32 to vector<9x128xf32>
    %184 = arith.maximumf %182, %183 : vector<9x128xf32>
    %c1_182 = arith.constant 1 : index
    %c0_183 = arith.constant 0 : index
    %185 = vector.load %arg11[%c1_182, %c0_183] : memref<3x128xf32, #tpu.memory_space<vmem>>, vector<1x128xf32>
    %186 = vector.broadcast %185 : vector<1x128xf32> to vector<9x128xf32>
    %187 = arith.mulf %184, %186 : vector<9x128xf32>
    %c2_184 = arith.constant 2 : index
    %c0_185 = arith.constant 0 : index
    %188 = vector.load %arg11[%c2_184, %c0_185] : memref<3x128xf32, #tpu.memory_space<vmem>>, vector<1x128xf32>
    %189 = vector.broadcast %188 : vector<1x128xf32> to vector<9x128xf32>
    %190 = arith.addf %187, %189 : vector<9x128xf32>
    %c0_186 = arith.constant 0 : index
    %c0_187 = arith.constant 0 : index
    %191 = vector.load %arg26[%c0_186, %c0_187] : memref<9x128xf32, #tpu.memory_space<vmem>>, vector<9x128xf32>
    tpu.vector_store %arg26[%c0_186, %c0_187], %190 {strides = array<i32>} : memref<9x128xf32, #tpu.memory_space<vmem>>, vector<9x128xf32>,
    %c0_188 = arith.constant 0 : index
    %c0_189 = arith.constant 0 : index
    %192 = tpu.strided_load %arg26[%c0_188, %c0_189] {strides = array<i32: 3, 1>} : memref<9x128xf32, #tpu.memory_space<vmem>>, vector<3x128xf32>
    %c1_190 = arith.constant 1 : index
    %c0_191 = arith.constant 0 : index
    %193 = tpu.strided_load %arg26[%c1_190, %c0_191] {strides = array<i32: 3, 1>} : memref<9x128xf32, #tpu.memory_space<vmem>>, vector<3x128xf32>
    %c2_192 = arith.constant 2 : index
    %c0_193 = arith.constant 0 : index
    %194 = tpu.strided_load %arg26[%c2_192, %c0_193] {strides = array<i32: 3, 1>} : memref<9x128xf32, #tpu.memory_space<vmem>>, vector<3x128xf32>
    %195 = arith.addf %192, %193 : vector<3x128xf32>
    %196 = arith.addf %195, %194 : vector<3x128xf32>
    %cst_194 = arith.constant 0.333333343 : f32
    %197 = vector.broadcast %cst_194 : f32 to vector<3x128xf32>
    %198 = arith.mulf %196, %197 : vector<3x128xf32>
    %199 = arith.truncf %198 : vector<3x128xf32> to vector<3x128xbf16>
    %c0_195 = arith.constant 0 : index
    %c0_196 = arith.constant 0 : index
    %200 = vector.load %arg12[%c0_195, %c0_196] : memref<128x384xbf16, #tpu.memory_space<vmem>>, vector<128x384xbf16>
    %cst_197 = arith.constant dense<0.000000e+00> : vector<3x384xf32>
    %201 = tpu.matmul %199, %200, %cst_197 {dimension_numbers = #tpu.dot_dimension_numbers<[1], [0], [0], [1], [0, 0, 1, 1], [], []>} : vector<3x128xbf16>, vector<128x384xbf16>, vector<3x384xf32> -> vector<3x384xf32>
    %c0_198 = arith.constant 0 : index
    %c0_199 = arith.constant 0 : index
    %202 = vector.load %arg13[%c0_198, %c0_199] : memref<1x384xf32, #tpu.memory_space<vmem>>, vector<1x384xf32>
    %203 = vector.broadcast %202 : vector<1x384xf32> to vector<3x384xf32>
    %204 = arith.addf %201, %203 : vector<3x384xf32>
    %205 = vector.extract_strided_slice %204 {offsets = [0, 0], sizes = [3, 128], strides = [1, 1]} : vector<3x384xf32> to vector<3x128xf32>
    %206 = vector.extract_strided_slice %204 {offsets = [0, 128], sizes = [3, 128], strides = [1, 1]} : vector<3x384xf32> to vector<3x128xf32>
    %207 = vector.extract_strided_slice %204 {offsets = [0, 256], sizes = [3, 128], strides = [1, 1]} : vector<3x384xf32> to vector<3x128xf32>
    %cst_200 = arith.constant dense<0.000000e+00> : vector<3x3xf32>
    %208 = tpu.matmul %205, %206, %cst_200 {dimension_numbers = #tpu.dot_dimension_numbers<[1], [1], [0], [0], [0, 0, 1, 0], [], []>} : vector<3x128xf32>, vector<3x128xf32>, vector<3x3xf32> -> vector<3x3xf32>
    %cst_201 = arith.constant 0.0883883461 : f32
    %209 = vector.broadcast %cst_201 : f32 to vector<3x3xf32>
    %210 = arith.mulf %208, %209 : vector<3x3xf32>
    %cst_202 = arith.constant dense<0xFF800000> : vector<3xf32>
    %211 = vector.multi_reduction <maximumf>, %210, %cst_202 [1] : vector<3x3xf32> to vector<3xf32>
    %212 = vector.shape_cast %211 : vector<3xf32> to vector<3x1xf32>
    %213 = vector.broadcast %212 : vector<3x1xf32> to vector<3x3xf32>
    %214 = arith.subf %210, %213 : vector<3x3xf32>
    %215 = math.exp %214 : vector<3x3xf32>
    %cst_203 = arith.constant dense<0.000000e+00> : vector<3xf32>
    %216 = vector.multi_reduction <add>, %215, %cst_203 [1] : vector<3x3xf32> to vector<3xf32>
    %217 = vector.shape_cast %216 : vector<3xf32> to vector<3x1xf32>
    %218 = tpu.reciprocal %217 {approx = true} : vector<3x1xf32> -> vector<3x1xf32>
    %219 = vector.broadcast %218 : vector<3x1xf32> to vector<3x3xf32>
    %220 = arith.mulf %215, %219 : vector<3x3xf32>
    %221 = arith.truncf %220 : vector<3x3xf32> to vector<3x3xbf16>
    %222 = arith.truncf %207 : vector<3x128xf32> to vector<3x128xbf16>
    %cst_204 = arith.constant dense<0.000000e+00> : vector<3x128xf32>
    %223 = tpu.matmul %221, %222, %cst_204 {dimension_numbers = #tpu.dot_dimension_numbers<[1], [0], [0], [1], [0, 0, 1, 1], [], []>} : vector<3x3xbf16>, vector<3x128xbf16>, vector<3x128xf32> -> vector<3x128xf32>
    %c0_205 = arith.constant 0 : index
    %c0_206 = arith.constant 0 : index
    %224 = vector.load %arg15[%c0_205, %c0_206] : memref<1x512xf32, #tpu.memory_space<vmem>>, vector<1x512xf32>
    %225 = vector.extract_strided_slice %223 {offsets = [0, 0], sizes = [1, 128], strides = [1, 1]} : vector<3x128xf32> to vector<1x128xf32>
    %226 = arith.truncf %225 : vector<1x128xf32> to vector<1x128xbf16>
    %c0_207 = arith.constant 0 : index
    %c0_208 = arith.constant 0 : index
    %c0_209 = arith.constant 0 : index
    %227 = vector.load %arg14[%c0_207, %c0_208, %c0_209] : memref<3x128x512xbf16, #tpu.memory_space<vmem>>, vector<1x128x512xbf16>
    %228 = vector.shape_cast %227 : vector<1x128x512xbf16> to vector<128x512xbf16>
    %cst_210 = arith.constant dense<0.000000e+00> : vector<1x512xf32>
    %229 = tpu.matmul %226, %228, %cst_210 {dimension_numbers = #tpu.dot_dimension_numbers<[1], [0], [0], [1], [0, 0, 1, 1], [], []>} : vector<1x128xbf16>, vector<128x512xbf16>, vector<1x512xf32> -> vector<1x512xf32>
    %230 = arith.addf %224, %229 : vector<1x512xf32>
    %231 = vector.extract_strided_slice %223 {offsets = [1, 0], sizes = [1, 128], strides = [1, 1]} : vector<3x128xf32> to vector<1x128xf32>
    %232 = arith.truncf %231 : vector<1x128xf32> to vector<1x128xbf16>
    %c1_211 = arith.constant 1 : index
    %c0_212 = arith.constant 0 : index
    %c0_213 = arith.constant 0 : index
    %233 = vector.load %arg14[%c1_211, %c0_212, %c0_213] : memref<3x128x512xbf16, #tpu.memory_space<vmem>>, vector<1x128x512xbf16>
    %234 = vector.shape_cast %233 : vector<1x128x512xbf16> to vector<128x512xbf16>
    %cst_214 = arith.constant dense<0.000000e+00> : vector<1x512xf32>
    %235 = tpu.matmul %232, %234, %cst_214 {dimension_numbers = #tpu.dot_dimension_numbers<[1], [0], [0], [1], [0, 0, 1, 1], [], []>} : vector<1x128xbf16>, vector<128x512xbf16>, vector<1x512xf32> -> vector<1x512xf32>
    %236 = arith.addf %230, %235 : vector<1x512xf32>
    %237 = vector.extract_strided_slice %223 {offsets = [2, 0], sizes = [1, 128], strides = [1, 1]} : vector<3x128xf32> to vector<1x128xf32>
    %238 = arith.truncf %237 : vector<1x128xf32> to vector<1x128xbf16>
    %c2_215 = arith.constant 2 : index
    %c0_216 = arith.constant 0 : index
    %c0_217 = arith.constant 0 : index
    %239 = vector.load %arg14[%c2_215, %c0_216, %c0_217] : memref<3x128x512xbf16, #tpu.memory_space<vmem>>, vector<1x128x512xbf16>
    %240 = vector.shape_cast %239 : vector<1x128x512xbf16> to vector<128x512xbf16>
    %cst_218 = arith.constant dense<0.000000e+00> : vector<1x512xf32>
    %241 = tpu.matmul %238, %240, %cst_218 {dimension_numbers = #tpu.dot_dimension_numbers<[1], [0], [0], [1], [0, 0, 1, 1], [], []>} : vector<1x128xbf16>, vector<128x512xbf16>, vector<1x512xf32> -> vector<1x512xf32>
    %242 = arith.addf %236, %241 : vector<1x512xf32>
    %cst_219 = arith.constant 0.000000e+00 : f32
    %243 = vector.broadcast %cst_219 : f32 to vector<1x512xf32>
    %244 = arith.maximumf %242, %243 : vector<1x512xf32>
    %245 = arith.truncf %244 : vector<1x512xf32> to vector<1x512xbf16>
    %c0_220 = arith.constant 0 : index
    %c0_221 = arith.constant 0 : index
    %246 = vector.load %arg16[%c0_220, %c0_221] : memref<512x6xbf16, #tpu.memory_space<vmem>>, vector<512x6xbf16>
    %cst_222 = arith.constant dense<0.000000e+00> : vector<1x6xf32>
    %247 = tpu.matmul %245, %246, %cst_222 {dimension_numbers = #tpu.dot_dimension_numbers<[1], [0], [0], [1], [0, 0, 1, 1], [], []>} : vector<1x512xbf16>, vector<512x6xbf16>, vector<1x6xf32> -> vector<1x6xf32>
    %c0_223 = arith.constant 0 : index
    %c0_224 = arith.constant 0 : index
    %248 = vector.load %arg17[%c0_223, %c0_224] : memref<1x6xf32, #tpu.memory_space<vmem>>, vector<1x6xf32>
    %249 = arith.addf %247, %248 : vector<1x6xf32>
    %cst_225 = arith.constant dense<0xFF800000> : vector<1xf32>
    %250 = vector.multi_reduction <maximumf>, %249, %cst_225 [1] : vector<1x6xf32> to vector<1xf32>
    %251 = vector.shape_cast %250 : vector<1xf32> to vector<1x1xf32>
    %252 = vector.broadcast %251 : vector<1x1xf32> to vector<1x6xf32>
    %253 = arith.subf %249, %252 : vector<1x6xf32>
    %254 = math.exp %253 : vector<1x6xf32>
    %cst_226 = arith.constant dense<0.000000e+00> : vector<1xf32>
    %255 = vector.multi_reduction <add>, %254, %cst_226 [1] : vector<1x6xf32> to vector<1xf32>
    %256 = vector.shape_cast %255 : vector<1xf32> to vector<1x1xf32>
    %257 = vector.broadcast %256 : vector<1x1xf32> to vector<1x6xf32>
    %258 = arith.divf %254, %257 : vector<1x6xf32>
    %c0_227 = arith.constant 0 : index
    %c0_228 = arith.constant 0 : index
    %c0_229 = arith.constant 0 : index
    %259 = vector.load %arg18[%c0_227, %c0_228, %c0_229] : memref<1x1x6xf32, #tpu.memory_space<vmem>>, vector<1x1x6xf32>
    %260 = vector.shape_cast %259 : vector<1x1x6xf32> to vector<1x6xf32>
    %261 = vector.shape_cast %258 : vector<1x6xf32> to vector<1x1x6xf32>
    tpu.vector_store %arg18[%c0_227, %c0_228, %c0_229], %261 {strides = array<i32>} : memref<1x1x6xf32, #tpu.memory_space<vmem>>, vector<1x1x6xf32>,
    return
  }
  func.func @transform_0(%arg0: i32) -> (i32, i32, i32) {
    %c0_i32 = arith.constant 0 : i32
    %c0_i32_0 = arith.constant 0 : i32
    %c0_i32_1 = arith.constant 0 : i32
    return %arg0, %c0_i32, %c0_i32_0 : i32, i32, i32
  }
  func.func @transform_1(%arg0: i32) -> (i32, i32, i32) {
    %c0_i32 = arith.constant 0 : i32
    %c0_i32_0 = arith.constant 0 : i32
    %c0_i32_1 = arith.constant 0 : i32
    %c0_i32_2 = arith.constant 0 : i32
    return %c0_i32, %c0_i32_0, %c0_i32_1 : i32, i32, i32
  }
  func.func @transform_2(%arg0: i32) -> (i32, i32) {
    %c0_i32 = arith.constant 0 : i32
    %c0_i32_0 = arith.constant 0 : i32
    %c0_i32_1 = arith.constant 0 : i32
    return %c0_i32, %c0_i32_0 : i32, i32
  }
  func.func @transform_3(%arg0: i32) -> (i32, i32, i32) {
    %c0_i32 = arith.constant 0 : i32
    %c0_i32_0 = arith.constant 0 : i32
    %c0_i32_1 = arith.constant 0 : i32
    %c0_i32_2 = arith.constant 0 : i32
    return %c0_i32, %c0_i32_0, %c0_i32_1 : i32, i32, i32
  }
  func.func @transform_4(%arg0: i32) -> (i32, i32) {
    %c0_i32 = arith.constant 0 : i32
    %c0_i32_0 = arith.constant 0 : i32
    %c0_i32_1 = arith.constant 0 : i32
    return %c0_i32, %c0_i32_0 : i32, i32
  }
  func.func @transform_5(%arg0: i32) -> (i32, i32, i32) {
    %c0_i32 = arith.constant 0 : i32
    %c0_i32_0 = arith.constant 0 : i32
    %c0_i32_1 = arith.constant 0 : i32
    %c0_i32_2 = arith.constant 0 : i32
    return %c0_i32, %c0_i32_0, %c0_i32_1 : i32, i32, i32
  }
  func.func @transform_6(%arg0: i32) -> (i32, i32) {
    %c0_i32 = arith.constant 0 : i32
    %c0_i32_0 = arith.constant 0 : i32
    %c0_i32_1 = arith.constant 0 : i32
    return %c0_i32, %c0_i32_0 : i32, i32
  }
  func.func @transform_7(%arg0: i32) -> (i32, i32, i32) {
    %c0_i32 = arith.constant 0 : i32
    %c0_i32_0 = arith.constant 0 : i32
    %c0_i32_1 = arith.constant 0 : i32
    %c0_i32_2 = arith.constant 0 : i32
    return %c0_i32, %c0_i32_0, %c0_i32_1 : i32, i32, i32
  }
  func.func @transform_8(%arg0: i32) -> (i32, i32) {
    %c0_i32 = arith.constant 0 : i32
    %c0_i32_0 = arith.constant 0 : i32
    %c0_i32_1 = arith.constant 0 : i32
    return %c0_i32, %c0_i32_0 : i32, i32
  }
  func.func @transform_9(%arg0: i32) -> (i32, i32, i32) {
    %c0_i32 = arith.constant 0 : i32
    %c0_i32_0 = arith.constant 0 : i32
    %c0_i32_1 = arith.constant 0 : i32
    %c0_i32_2 = arith.constant 0 : i32
    return %c0_i32, %c0_i32_0, %c0_i32_1 : i32, i32, i32
  }
  func.func @transform_10(%arg0: i32) -> (i32, i32) {
    %c0_i32 = arith.constant 0 : i32
    %c0_i32_0 = arith.constant 0 : i32
    %c0_i32_1 = arith.constant 0 : i32
    return %c0_i32, %c0_i32_0 : i32, i32
  }
  func.func @transform_11(%arg0: i32) -> (i32, i32) {
    %c0_i32 = arith.constant 0 : i32
    %c0_i32_0 = arith.constant 0 : i32
    %c0_i32_1 = arith.constant 0 : i32
    return %c0_i32, %c0_i32_0 : i32, i32
  }
  func.func @transform_12(%arg0: i32) -> (i32, i32) {
    %c0_i32 = arith.constant 0 : i32
    %c0_i32_0 = arith.constant 0 : i32
    %c0_i32_1 = arith.constant 0 : i32
    return %c0_i32, %c0_i32_0 : i32, i32
  }
  func.func @transform_13(%arg0: i32) -> (i32, i32, i32) {
    %c0_i32 = arith.constant 0 : i32
    %c0_i32_0 = arith.constant 0 : i32
    %c0_i32_1 = arith.constant 0 : i32
    %c0_i32_2 = arith.constant 0 : i32
    return %c0_i32, %c0_i32_0, %c0_i32_1 : i32, i32, i32
  }
  func.func @transform_14(%arg0: i32) -> (i32, i32) {
    %c0_i32 = arith.constant 0 : i32
    %c0_i32_0 = arith.constant 0 : i32
    %c0_i32_1 = arith.constant 0 : i32
    return %c0_i32, %c0_i32_0 : i32, i32
  }
  func.func @transform_15(%arg0: i32) -> (i32, i32) {
    %c0_i32 = arith.constant 0 : i32
    %c0_i32_0 = arith.constant 0 : i32
    %c0_i32_1 = arith.constant 0 : i32
    return %c0_i32, %c0_i32_0 : i32, i32
  }
  func.func @transform_16(%arg0: i32) -> (i32, i32) {
    %c0_i32 = arith.constant 0 : i32
    %c0_i32_0 = arith.constant 0 : i32
    %c0_i32_1 = arith.constant 0 : i32
    return %c0_i32, %c0_i32_0 : i32, i32
  }
  func.func @transform_17(%arg0: i32) -> (i32, i32, i32) {
    %c0_i32 = arith.constant 0 : i32
    %c0_i32_0 = arith.constant 0 : i32
    %c0_i32_1 = arith.constant 0 : i32
    return %arg0, %c0_i32, %c0_i32_0 : i32, i32, i32
  }
}

</mosaic_0001>

<llo_original>
// kernel: tpu_custom_call.1
$region0: #{tpu_custom_call.1}
  #allocation0 [shape = 'u32[]', space=smem, size = 0x4, offset = 0x4, fixed_abs, tag = 'smem constant byte address 0x4 - core index']
  #allocation1 [shape = 'u32[144,128]{1,0:T(1,128)}', space=vmem, size = 0x12000, scoped, tag = 'internal scratch']
  #allocation2 [shape = 'f32[85,4]{1,0:T(8,128)}', space=vmem, size = 0xb000, scoped, tag = 'scratch operand']
  #allocation3 [shape = 'f32[83,64]{1,0:T(8,128)}', space=vmem, size = 0xb000, scoped, tag = 'scratch operand']
  #allocation4 [shape = 'f32[81,64]{1,0:T(8,128)}', space=vmem, size = 0xb000, scoped, tag = 'scratch operand']
  #allocation5 [shape = 'f32[29,64]{1,0:T(8,128)}', space=vmem, size = 0x4000, scoped, tag = 'scratch operand']
  #allocation6 [shape = 'f32[29,128]{1,0:T(8,128)}', space=vmem, size = 0x4000, scoped, tag = 'scratch operand']
  #allocation7 [shape = 'f32[27,128]{1,0:T(8,128)}', space=vmem, size = 0x4000, scoped, tag = 'scratch operand']
  #allocation8 [shape = 'f32[11,128]{1,0:T(8,128)}', space=vmem, size = 0x2000, scoped, tag = 'scratch operand']
  #allocation9 [shape = 'f32[9,128]{1,0:T(8,128)}', space=vmem, size = 0x2000, scoped, tag = 'scratch operand']
  %s0 = inlined_call_operand.vmem [shape: f32[2,83,4], index: 0, kind: input, shape index: {}]
  %s1 = inlined_call_operand.vmem [shape: bf16[5,4,64], index: 1, kind: input, shape index: {}]
  %s2 = inlined_call_operand.vmem [shape: f32[3,64], index: 2, kind: input, shape index: {}]
  %s3 = inlined_call_operand.hbm [shape: bf16[3,64,64], index: 3, kind: input, shape index: {}]
  %s4 = inlined_call_operand.vmem [shape: f32[3,64], index: 4, kind: input, shape index: {}]
  %s5 = inlined_call_operand.hbm [shape: bf16[3,64,128], index: 5, kind: input, shape index: {}]
  %s6 = inlined_call_operand.vmem [shape: f32[3,128], index: 6, kind: input, shape index: {}]
  %s7 = inlined_call_operand.vmem [shape: bf16[3,128,128], index: 7, kind: input, shape index: {}]
  %s8 = inlined_call_operand.vmem [shape: f32[3,128], index: 8, kind: input, shape index: {}]
  %s9 = inlined_call_operand.vmem [shape: bf16[3,128,128], index: 9, kind: input, shape index: {}]
  %s10 = inlined_call_operand.vmem [shape: f32[3,128], index: 10, kind: input, shape index: {}]
  %s11 = inlined_call_operand.hbm [shape: bf16[128,384], index: 11, kind: input, shape index: {}]
  %s12 = inlined_call_operand.vmem [shape: f32[1,384], index: 12, kind: input, shape index: {}]
  %s13 = inlined_call_operand.hbm [shape: bf16[3,128,512], index: 13, kind: input, shape index: {}]
  %s14 = inlined_call_operand.vmem [shape: f32[1,512], index: 14, kind: input, shape index: {}]
  %s15 = inlined_call_operand.vmem [shape: bf16[512,6], index: 15, kind: input, shape index: {}]
  %s16 = inlined_call_operand.vmem [shape: f32[1,6], index: 16, kind: input, shape index: {}]
  %s17 = inlined_call_operand.hbm [shape: f32[2,1,6], index: 17, kind: output, shape index: {}]
  %s18 = sld [smem:[#allocation0]]
  $region117: #{tpu_custom_call.1} parent=0
    _
  %s20 = ssub.s32 1, %s18
  %s21 = scalar_select 0, %s20, %s18
  $region1: #{tpu_custom_call.1} parent=0
    #allocation10 [shape = 'u8[49152]{0}', space=vmem, size = 0xc000, scoped, tag = 'input window, operand 3, single buffered']
    #allocation11 [shape = 's32[2]{0}', space=sflag, size = 0x8, scoped, tag = 'scoped memory for tpu_custom_call.1']
    #allocation12 [shape = 's32[2]{0}', space=sflag, size = 0x8, scoped, tag = 'scoped memory for tpu_custom_call.1']
    #allocation13 [shape = 'u8[49152]{0}', space=vmem, size = 0xc000, scoped, tag = 'input window, operand 5, single buffered']
    #allocation14 [shape = 's32[1]{0}', space=sflag, size = 0x4, scoped, tag = 'scoped memory for tpu_custom_call.1']
    #allocation15 [shape = 'u8[98304]{0}', space=vmem, size = 0x18000, scoped, tag = 'input window, operand 11, single buffered']
    #allocation16 [shape = 'u8[393216]{0}', space=vmem, size = 0x60000, scoped, tag = 'input window, operand 13, single buffered']
    #allocation17 [shape = 's32[1]{0}', space=sflag, size = 0x4, scoped, tag = 'scoped memory for tpu_custom_call.1']
    #allocation18 [shape = 'u8[1024]{0}', space=vmem, size = 0x400, scoped, tag = 'output window, operand 0']
    %22 = vsyncpa [#allocation11], 0
    %23 = vsyncpa [#allocation14], 0
    %24 = vsyncpa [#allocation17], 0
    %25 = vsyncpa [#allocation12], 0
    %s26 = scalar_lea.sflag [#allocation12], 1
    %27 = vsyncpa %s26, 0
    loop: start=0, step=1, limit=4
    $region2: #{tpu_custom_call.1} parent=1 // loop_pre_header
      _
    $region3: #{tpu_custom_call.1} parent=1 // loop_header
      %s29 = sphi 0, %s33
      %p30 = scmp.ge.s32.totalorder %s29, 4
      %s39 = sphi 0, %s41
      %s42 = sphi 0, %s39
      %s43 = sphi 0, %s42
      %s59 = sphi 0, %s43
      %s63 = sphi 0, %s63
      %s65 = sphi 0, %s63
      %s66 = sphi 0, %s65
      %s80 = sphi 0, %s66
      %s84 = sphi 0, %s84
      %s86 = sphi 0, %s84
      %s87 = sphi 0, %s86
      %s101 = sphi 0, %s87
      %s105 = sphi 0, %s105
      %s107 = sphi 0, %s105
      %s108 = sphi 0, %s107
      %s122 = sphi 0, %s108
      %s126 = sphi 0, %s126
      %s128 = sphi 0, %s126
      %s129 = sphi 0, %s128
      %s143 = sphi 0, %s129
      %s147 = sphi 0, %s147
      %s149 = sphi 0, %s147
      %s150 = sphi 0, %s149
      %s164 = sphi 0, %s150
      %s168 = sphi 0, %s168
      %s170 = sphi 0, %s168
      %s171 = sphi 0, %s170
      %s185 = sphi 0, %s171
      %s189 = sphi 0, %s189
      %s191 = sphi 0, %s189
      %s192 = sphi 0, %s191
      %s206 = sphi 0, %s192
      %s210 = sphi 0, %s210
      %s212 = sphi 0, %s210
      %s213 = sphi 0, %s212
      %s227 = sphi 0, %s213
      %s231 = sphi 0, %s231
      %s233 = sphi 0, %s231
      %s234 = sphi 0, %s233
      %s248 = sphi 0, %s234
      %s252 = sphi 0, %s252
      %s254 = sphi 0, %s252
      %s255 = sphi 0, %s254
      %s269 = sphi 0, %s255
      %s273 = sphi 0, %s273
      %s275 = sphi 0, %s273
      %s276 = sphi 0, %s275
      %s290 = sphi 0, %s276
      %s294 = sphi 0, %s294
      %s296 = sphi 0, %s294
      %s297 = sphi 0, %s296
      %s311 = sphi 0, %s297
      %s315 = sphi 0, %s315
      %s317 = sphi 0, %s315
      %s318 = sphi 0, %s317
      %s332 = sphi 0, %s318
      %s336 = sphi 0, %s336
      %s338 = sphi 0, %s336
      %s339 = sphi 0, %s338
      %s353 = sphi 0, %s339
      %s357 = sphi 0, %s357
      %s359 = sphi 0, %s357
      %s360 = sphi 0, %s359
      %s374 = sphi 0, %s360
      %s378 = sphi 0, %s378
      %s380 = sphi 0, %s378
      %s381 = sphi 0, %s380
      %s395 = sphi 0, %s381
      %s401 = sphi 0, %s403
      %s404 = sphi 0, %s401
      %s405 = sphi 0, %s404
      %s421 = sphi 0, %s405
    $region4: #{tpu_custom_call.1} parent=1 // loop_header_branch
      %32 = sbr.rel (%p30) target = $region8
    $region5: #{tpu_custom_call.1} parent=1 // loop_body
      %s34 = ssub.s32 %s29, 1
      %s35 = ssub.s32 %s29, 2
      %s36 = sadd.s32 %s29, 1
      %s37 = ssub.s32 %s29, %s36
      %p38 = scmp.eq.s32.totalorder %s37, 0
      %s40 = sadd.s32 %s39, 1
      %s41 = scalar_select %p38, %s39, %s40
      %p44 = pneg %p38
      %p45 = scmp.eq.s32.totalorder %s29, 1
      %p46 = por %p44, %p45
      %p47 = scmp.ne.s32.totalorder %s39, %s42
      %p48 = scmp.eq.s32.totalorder %s29, 0
      %p49 = por %p47, %p48
      %p50 = scmp.ne.s32.totalorder %s39, %s42
      %p51 = scmp.eq.s32.totalorder %s34, 1
      %p52 = por %p50, %p51
      %p53 = scmp.ne.s32.totalorder %s42, %s43
      %p54 = scmp.eq.s32.totalorder %s34, 0
      %p55 = por %p53, %p54
      %p56 = scmp.ne.s32.totalorder %s42, %s43
      %p57 = scmp.eq.s32.totalorder %s35, 1
      %p58 = por %p56, %p57
      %p60 = scmp.ne.s32.totalorder %s43, %s59
      %p61 = scmp.eq.s32.totalorder %s35, 0
      %p62 = por %p60, %p61
      %s64 = sadd.s32 %s63, 1
      %p67 = scmp.eq.s32.totalorder %s29, 1
      %p68 = scmp.ne.s32.totalorder %s63, %s65
      %p69 = scmp.eq.s32.totalorder %s29, 0
      %p70 = por %p68, %p69
      %p71 = scmp.ne.s32.totalorder %s63, %s65
      %p72 = scmp.eq.s32.totalorder %s34, 1
      %p73 = por %p71, %p72
      %p74 = scmp.ne.s32.totalorder %s65, %s66
      %p75 = scmp.eq.s32.totalorder %s34, 0
      %p76 = por %p74, %p75
      %p77 = scmp.ne.s32.totalorder %s65, %s66
      %p78 = scmp.eq.s32.totalorder %s35, 1
      %p79 = por %p77, %p78
      %p81 = scmp.ne.s32.totalorder %s66, %s80
      %p82 = scmp.eq.s32.totalorder %s35, 0
      %p83 = por %p81, %p82
      %s85 = sadd.s32 %s84, 1
      %p88 = scmp.eq.s32.totalorder %s29, 1
      %p89 = scmp.ne.s32.totalorder %s84, %s86
      %p90 = scmp.eq.s32.totalorder %s29, 0
      %p91 = por %p89, %p90
      %p92 = scmp.ne.s32.totalorder %s84, %s86
      %p93 = scmp.eq.s32.totalorder %s34, 1
      %p94 = por %p92, %p93
      %p95 = scmp.ne.s32.totalorder %s86, %s87
      %p96 = scmp.eq.s32.totalorder %s34, 0
      %p97 = por %p95, %p96
      %p98 = scmp.ne.s32.totalorder %s86, %s87
      %p99 = scmp.eq.s32.totalorder %s35, 1
      %p100 = por %p98, %p99
      %p102 = scmp.ne.s32.totalorder %s87, %s101
      %p103 = scmp.eq.s32.totalorder %s35, 0
      %p104 = por %p102, %p103
      %s106 = sadd.s32 %s105, 1
      %p109 = scmp.eq.s32.totalorder %s29, 1
      %p110 = scmp.ne.s32.totalorder %s105, %s107
      %p111 = scmp.eq.s32.totalorder %s29, 0
      %p112 = por %p110, %p111
      %p113 = scmp.ne.s32.totalorder %s105, %s107
      %p114 = scmp.eq.s32.totalorder %s34, 1
      %p115 = por %p113, %p114
      %p116 = scmp.ne.s32.totalorder %s107, %s108
      %p117 = scmp.eq.s32.totalorder %s34, 0
      %p118 = por %p116, %p117
      %p119 = scmp.ne.s32.totalorder %s107, %s108
      %p120 = scmp.eq.s32.totalorder %s35, 1
      %p121 = por %p119, %p120
      %p123 = scmp.ne.s32.totalorder %s108, %s122
      %p124 = scmp.eq.s32.totalorder %s35, 0
      %p125 = por %p123, %p124
      %s127 = sadd.s32 %s126, 1
      %p130 = scmp.eq.s32.totalorder %s29, 1
      %p131 = scmp.ne.s32.totalorder %s126, %s128
      %p132 = scmp.eq.s32.totalorder %s29, 0
      %p133 = por %p131, %p132
      %p134 = scmp.ne.s32.totalorder %s126, %s128
      %p135 = scmp.eq.s32.totalorder %s34, 1
      %p136 = por %p134, %p135
      %p137 = scmp.ne.s32.totalorder %s128, %s129
      %p138 = scmp.eq.s32.totalorder %s34, 0
      %p139 = por %p137, %p138
      %p140 = scmp.ne.s32.totalorder %s128, %s129
      %p141 = scmp.eq.s32.totalorder %s35, 1
      %p142 = por %p140, %p141
      %p144 = scmp.ne.s32.totalorder %s129, %s143
      %p145 = scmp.eq.s32.totalorder %s35, 0
      %p146 = por %p144, %p145
      %s148 = sadd.s32 %s147, 1
      %p151 = scmp.eq.s32.totalorder %s29, 1
      %p152 = scmp.ne.s32.totalorder %s147, %s149
      %p153 = scmp.eq.s32.totalorder %s29, 0
      %p154 = por %p152, %p153
      %p155 = scmp.ne.s32.totalorder %s147, %s149
      %p156 = scmp.eq.s32.totalorder %s34, 1
      %p157 = por %p155, %p156
      %p158 = scmp.ne.s32.totalorder %s149, %s150
      %p159 = scmp.eq.s32.totalorder %s34, 0
      %p160 = por %p158, %p159
      %p161 = scmp.ne.s32.totalorder %s149, %s150
      %p162 = scmp.eq.s32.totalorder %s35, 1
      %p163 = por %p161, %p162
      %p165 = scmp.ne.s32.totalorder %s150, %s164
      %p166 = scmp.eq.s32.totalorder %s35, 0
      %p167 = por %p165, %p166
      %s169 = sadd.s32 %s168, 1
      %p172 = scmp.eq.s32.totalorder %s29, 1
      %p173 = scmp.ne.s32.totalorder %s168, %s170
      %p174 = scmp.eq.s32.totalorder %s29, 0
      %p175 = por %p173, %p174
      %p176 = scmp.ne.s32.totalorder %s168, %s170
      %p177 = scmp.eq.s32.totalorder %s34, 1
      %p178 = por %p176, %p177
      %p179 = scmp.ne.s32.totalorder %s170, %s171
      %p180 = scmp.eq.s32.totalorder %s34, 0
      %p181 = por %p179, %p180
      %p182 = scmp.ne.s32.totalorder %s170, %s171
      %p183 = scmp.eq.s32.totalorder %s35, 1
      %p184 = por %p182, %p183
      %p186 = scmp.ne.s32.totalorder %s171, %s185
      %p187 = scmp.eq.s32.totalorder %s35, 0
      %p188 = por %p186, %p187
      %s190 = sadd.s32 %s189, 1
      %p193 = scmp.eq.s32.totalorder %s29, 1
      %p194 = scmp.ne.s32.totalorder %s189, %s191
      %p195 = scmp.eq.s32.totalorder %s29, 0
      %p196 = por %p194, %p195
      %p197 = scmp.ne.s32.totalorder %s189, %s191
      %p198 = scmp.eq.s32.totalorder %s34, 1
      %p199 = por %p197, %p198
      %p200 = scmp.ne.s32.totalorder %s191, %s192
      %p201 = scmp.eq.s32.totalorder %s34, 0
      %p202 = por %p200, %p201
      %p203 = scmp.ne.s32.totalorder %s191, %s192
      %p204 = scmp.eq.s32.totalorder %s35, 1
      %p205 = por %p203, %p204
      %p207 = scmp.ne.s32.totalorder %s192, %s206
      %p208 = scmp.eq.s32.totalorder %s35, 0
      %p209 = por %p207, %p208
      %s211 = sadd.s32 %s210, 1
      %p214 = scmp.eq.s32.totalorder %s29, 1
      %p215 = scmp.ne.s32.totalorder %s210, %s212
      %p216 = scmp.eq.s32.totalorder %s29, 0
      %p217 = por %p215, %p216
      %p218 = scmp.ne.s32.totalorder %s210, %s212
      %p219 = scmp.eq.s32.totalorder %s34, 1
      %p220 = por %p218, %p219
      %p221 = scmp.ne.s32.totalorder %s212, %s213
      %p222 = scmp.eq.s32.totalorder %s34, 0
      %p223 = por %p221, %p222
      %p224 = scmp.ne.s32.totalorder %s212, %s213
      %p225 = scmp.eq.s32.totalorder %s35, 1
      %p226 = por %p224, %p225
      %p228 = scmp.ne.s32.totalorder %s213, %s227
      %p229 = scmp.eq.s32.totalorder %s35, 0
      %p230 = por %p228, %p229
      %s232 = sadd.s32 %s231, 1
      %p235 = scmp.eq.s32.totalorder %s29, 1
      %p236 = scmp.ne.s32.totalorder %s231, %s233
      %p237 = scmp.eq.s32.totalorder %s29, 0
      %p238 = por %p236, %p237
      %p239 = scmp.ne.s32.totalorder %s231, %s233
      %p240 = scmp.eq.s32.totalorder %s34, 1
      %p241 = por %p239, %p240
      %p242 = scmp.ne.s32.totalorder %s233, %s234
      %p243 = scmp.eq.s32.totalorder %s34, 0
      %p244 = por %p242, %p243
      %p245 = scmp.ne.s32.totalorder %s233, %s234
      %p246 = scmp.eq.s32.totalorder %s35, 1
      %p247 = por %p245, %p246
      %p249 = scmp.ne.s32.totalorder %s234, %s248
      %p250 = scmp.eq.s32.totalorder %s35, 0
      %p251 = por %p249, %p250
      %s253 = sadd.s32 %s252, 1
      %p256 = scmp.eq.s32.totalorder %s29, 1
      %p257 = scmp.ne.s32.totalorder %s252, %s254
      %p258 = scmp.eq.s32.totalorder %s29, 0
      %p259 = por %p257, %p258
      %p260 = scmp.ne.s32.totalorder %s252, %s254
      %p261 = scmp.eq.s32.totalorder %s34, 1
      %p262 = por %p260, %p261
      %p263 = scmp.ne.s32.totalorder %s254, %s255
      %p264 = scmp.eq.s32.totalorder %s34, 0
      %p265 = por %p263, %p264
      %p266 = scmp.ne.s32.totalorder %s254, %s255
      %p267 = scmp.eq.s32.totalorder %s35, 1
      %p268 = por %p266, %p267
      %p270 = scmp.ne.s32.totalorder %s255, %s269
      %p271 = scmp.eq.s32.totalorder %s35, 0
      %p272 = por %p270, %p271
      %s274 = sadd.s32 %s273, 1
      %p277 = scmp.eq.s32.totalorder %s29, 1
      %p278 = scmp.ne.s32.totalorder %s273, %s275
      %p279 = scmp.eq.s32.totalorder %s29, 0
      %p280 = por %p278, %p279
      %p281 = scmp.ne.s32.totalorder %s273, %s275
      %p282 = scmp.eq.s32.totalorder %s34, 1
      %p283 = por %p281, %p282
      %p284 = scmp.ne.s32.totalorder %s275, %s276
      %p285 = scmp.eq.s32.totalorder %s34, 0
      %p286 = por %p284, %p285
      %p287 = scmp.ne.s32.totalorder %s275, %s276
      %p288 = scmp.eq.s32.totalorder %s35, 1
      %p289 = por %p287, %p288
      %p291 = scmp.ne.s32.totalorder %s276, %s290
      %p292 = scmp.eq.s32.totalorder %s35, 0
      %p293 = por %p291, %p292
      %s295 = sadd.s32 %s294, 1
      %p298 = scmp.eq.s32.totalorder %s29, 1
      %p299 = scmp.ne.s32.totalorder %s294, %s296
      %p300 = scmp.eq.s32.totalorder %s29, 0
      %p301 = por %p299, %p300
      %p302 = scmp.ne.s32.totalorder %s294, %s296
      %p303 = scmp.eq.s32.totalorder %s34, 1
      %p304 = por %p302, %p303
      %p305 = scmp.ne.s32.totalorder %s296, %s297
      %p306 = scmp.eq.s32.totalorder %s34, 0
      %p307 = por %p305, %p306
      %p308 = scmp.ne.s32.totalorder %s296, %s297
      %p309 = scmp.eq.s32.totalorder %s35, 1
      %p310 = por %p308, %p309
      %p312 = scmp.ne.s32.totalorder %s297, %s311
      %p313 = scmp.eq.s32.totalorder %s35, 0
      %p314 = por %p312, %p313
      %s316 = sadd.s32 %s315, 1
      %p319 = scmp.eq.s32.totalorder %s29, 1
      %p320 = scmp.ne.s32.totalorder %s315, %s317
      %p321 = scmp.eq.s32.totalorder %s29, 0
      %p322 = por %p320, %p321
      %p323 = scmp.ne.s32.totalorder %s315, %s317
      %p324 = scmp.eq.s32.totalorder %s34, 1
      %p325 = por %p323, %p324
      %p326 = scmp.ne.s32.totalorder %s317, %s318
      %p327 = scmp.eq.s32.totalorder %s34, 0
      %p328 = por %p326, %p327
      %p329 = scmp.ne.s32.totalorder %s317, %s318
      %p330 = scmp.eq.s32.totalorder %s35, 1
      %p331 = por %p329, %p330
      %p333 = scmp.ne.s32.totalorder %s318, %s332
      %p334 = scmp.eq.s32.totalorder %s35, 0
      %p335 = por %p333, %p334
      %s337 = sadd.s32 %s336, 1
      %p340 = scmp.eq.s32.totalorder %s29, 1
      %p341 = scmp.ne.s32.totalorder %s336, %s338
      %p342 = scmp.eq.s32.totalorder %s29, 0
      %p343 = por %p341, %p342
      %p344 = scmp.ne.s32.totalorder %s336, %s338
      %p345 = scmp.eq.s32.totalorder %s34, 1
      %p346 = por %p344, %p345
      %p347 = scmp.ne.s32.totalorder %s338, %s339
      %p348 = scmp.eq.s32.totalorder %s34, 0
      %p349 = por %p347, %p348
      %p350 = scmp.ne.s32.totalorder %s338, %s339
      %p351 = scmp.eq.s32.totalorder %s35, 1
      %p352 = por %p350, %p351
      %p354 = scmp.ne.s32.totalorder %s339, %s353
      %p355 = scmp.eq.s32.totalorder %s35, 0
      %p356 = por %p354, %p355
      %s358 = sadd.s32 %s357, 1
      %p361 = scmp.eq.s32.totalorder %s29, 1
      %p362 = scmp.ne.s32.totalorder %s357, %s359
      %p363 = scmp.eq.s32.totalorder %s29, 0
      %p364 = por %p362, %p363
      %p365 = scmp.ne.s32.totalorder %s357, %s359
      %p366 = scmp.eq.s32.totalorder %s34, 1
      %p367 = por %p365, %p366
      %p368 = scmp.ne.s32.totalorder %s359, %s360
      %p369 = scmp.eq.s32.totalorder %s34, 0
      %p370 = por %p368, %p369
      %p371 = scmp.ne.s32.totalorder %s359, %s360
      %p372 = scmp.eq.s32.totalorder %s35, 1
      %p373 = por %p371, %p372
      %p375 = scmp.ne.s32.totalorder %s360, %s374
      %p376 = scmp.eq.s32.totalorder %s35, 0
      %p377 = por %p375, %p376
      %s379 = sadd.s32 %s378, 1
      %p382 = scmp.eq.s32.totalorder %s29, 1
      %p383 = scmp.ne.s32.totalorder %s378, %s380
      %p384 = scmp.eq.s32.totalorder %s29, 0
      %p385 = por %p383, %p384
      %p386 = scmp.ne.s32.totalorder %s378, %s380
      %p387 = scmp.eq.s32.totalorder %s34, 1
      %p388 = por %p386, %p387
      %p389 = scmp.ne.s32.totalorder %s380, %s381
      %p390 = scmp.eq.s32.totalorder %s34, 0
      %p391 = por %p389, %p390
      %p392 = scmp.ne.s32.totalorder %s380, %s381
      %p393 = scmp.eq.s32.totalorder %s35, 1
      %p394 = por %p392, %p393
      %p396 = scmp.ne.s32.totalorder %s381, %s395
      %p397 = scmp.eq.s32.totalorder %s35, 0
      %p398 = por %p396, %p397
      %s399 = ssub.s32 %s29, %s36
      %p400 = scmp.eq.s32.totalorder %s399, 0
      %s402 = sadd.s32 %s401, 1
      %s403 = scalar_select %p400, %s401, %s402
      %p406 = pneg %p400
      %p407 = scmp.eq.s32.totalorder %s29, 1
      %p408 = por %p406, %p407
      %p409 = scmp.ne.s32.totalorder %s401, %s404
      %p410 = scmp.eq.s32.totalorder %s29, 0
      %p411 = por %p409, %p410
      %p412 = scmp.ne.s32.totalorder %s401, %s404
      %p413 = scmp.eq.s32.totalorder %s34, 1
      %p414 = por %p412, %p413
      %p415 = scmp.ne.s32.totalorder %s404, %s405
      %p416 = scmp.eq.s32.totalorder %s34, 0
      %p417 = por %p415, %p416
      %p418 = scmp.ne.s32.totalorder %s404, %s405
      %p419 = scmp.eq.s32.totalorder %s35, 1
      %p420 = por %p418, %p419
      %p422 = scmp.ne.s32.totalorder %s405, %s421
      %p423 = scmp.eq.s32.totalorder %s35, 0
      %p424 = por %p422, %p423
      %p425 = scmp.le.s32.totalorder 1, %s29
      %p426 = scmp.lt.s32.totalorder %s29, 3
      %p427 = pnand %p425, %p426
      %p428 = pneg %p427
      // Predicated region
      $region9: #{tpu_custom_call.1} parent=5 // pred_check
        _
      $region10: #{tpu_custom_call.1} parent=5 // pred_check_branch
        %430 = sbr.rel (%p427) target = $region12
      $region11: #{tpu_custom_call.1} parent=5 // pred_region
        %s431 = ssub.s32 %s29, 1
        // Predicated region
        $region13: #{tpu_custom_call.1} parent=11 // pred_check
          %p432 = pneg %p76
        $region14: #{tpu_custom_call.1} parent=11 // pred_check_branch
          %434 = sbr.rel (%p432) target = $region16
        $region15: #{tpu_custom_call.1} parent=11 // pred_region
          _
        $region16: #{tpu_custom_call.1} parent=11 // pred_fallthru
          _
        // Predicated region
        $region17: #{tpu_custom_call.1} parent=11 // pred_check
          %p435 = pneg %p97
        $region18: #{tpu_custom_call.1} parent=11 // pred_check_branch
          %437 = sbr.rel (%p435) target = $region20
        $region19: #{tpu_custom_call.1} parent=11 // pred_region
          _
        $region20: #{tpu_custom_call.1} parent=11 // pred_fallthru
          _
        // Predicated region
        $region21: #{tpu_custom_call.1} parent=11 // pred_check
          %p438 = pneg %p118
        $region22: #{tpu_custom_call.1} parent=11 // pred_check_branch
          %440 = sbr.rel (%p438) target = $region24
        $region23: #{tpu_custom_call.1} parent=11 // pred_region
          %s442 = ssub.s32 1536, 1536
          %443 = vsyncadd [#allocation11], %s442
          %s444 = sshll.u32 [#allocation10], 4
          %s445 = int_to_ptr.vmem [resolvable:$true] %s444
          %450 = dma.hbm_to_vmem [thread:$0]  %s3, 1536, %s445, [#allocation11], 64, 64, 4
        $region24: #{tpu_custom_call.1} parent=11 // pred_fallthru
          _
        // Predicated region
        $region25: #{tpu_custom_call.1} parent=11 // pred_check
          %p451 = pneg %p139
        $region26: #{tpu_custom_call.1} parent=11 // pred_check_branch
          %453 = sbr.rel (%p451) target = $region28
        $region27: #{tpu_custom_call.1} parent=11 // pred_region
          _
        $region28: #{tpu_custom_call.1} parent=11 // pred_fallthru
          _
        // Predicated region
        $region29: #{tpu_custom_call.1} parent=11 // pred_check
          %p454 = pneg %p160
        $region30: #{tpu_custom_call.1} parent=11 // pred_check_branch
          %456 = sbr.rel (%p454) target = $region32
        $region31: #{tpu_custom_call.1} parent=11 // pred_region
          %s458 = ssub.s32 1536, 1536
          %459 = vsyncadd [#allocation14], %s458
          %s460 = sshll.u32 [#allocation13], 4
          %s461 = int_to_ptr.vmem [resolvable:$true] %s460
          %466 = dma.hbm_to_vmem [thread:$0]  %s5, 1536, %s461, [#allocation14], 64, 64, 4
        $region32: #{tpu_custom_call.1} parent=11 // pred_fallthru
          _
        // Predicated region
        $region33: #{tpu_custom_call.1} parent=11 // pred_check
          %p467 = pneg %p181
        $region34: #{tpu_custom_call.1} parent=11 // pred_check_branch
          %469 = sbr.rel (%p467) target = $region36
        $region35: #{tpu_custom_call.1} parent=11 // pred_region
          _
        $region36: #{tpu_custom_call.1} parent=11 // pred_fallthru
          _
        // Predicated region
        $region37: #{tpu_custom_call.1} parent=11 // pred_check
          %p470 = pneg %p202
        $region38: #{tpu_custom_call.1} parent=11 // pred_check_branch
          %472 = sbr.rel (%p470) target = $region40
        $region39: #{tpu_custom_call.1} parent=11 // pred_region
          _
        $region40: #{tpu_custom_call.1} parent=11 // pred_fallthru
          _
        // Predicated region
        $region41: #{tpu_custom_call.1} parent=11 // pred_check
          %p473 = pneg %p223
        $region42: #{tpu_custom_call.1} parent=11 // pred_check_branch
          %475 = sbr.rel (%p473) target = $region44
        $region43: #{tpu_custom_call.1} parent=11 // pred_region
          _
        $region44: #{tpu_custom_call.1} parent=11 // pred_fallthru
          _
        // Predicated region
        $region45: #{tpu_custom_call.1} parent=11 // pred_check
          %p476 = pneg %p244
        $region46: #{tpu_custom_call.1} parent=11 // pred_check_branch
          %478 = sbr.rel (%p476) target = $region48
        $region47: #{tpu_custom_call.1} parent=11 // pred_region
          _
        $region48: #{tpu_custom_call.1} parent=11 // pred_fallthru
          _
        // Predicated region
        $region49: #{tpu_custom_call.1} parent=11 // pred_check
          %p479 = pneg %p265
        $region50: #{tpu_custom_call.1} parent=11 // pred_check_branch
          %481 = sbr.rel (%p479) target = $region52
        $region51: #{tpu_custom_call.1} parent=11 // pred_region
          _
        $region52: #{tpu_custom_call.1} parent=11 // pred_fallthru
          _
        // Predicated region
        $region53: #{tpu_custom_call.1} parent=11 // pred_check
          %p482 = pneg %p286
        $region54: #{tpu_custom_call.1} parent=11 // pred_check_branch
          %484 = sbr.rel (%p482) target = $region56
        $region55: #{tpu_custom_call.1} parent=11 // pred_region
          %s486 = ssub.s32 3072, 3072
          %487 = vsyncadd [#allocation14], %s486
          %s488 = sshll.u32 [#allocation15], 4
          %s489 = int_to_ptr.vmem [resolvable:$true] %s488
          %494 = dma.hbm_to_vmem [thread:$0]  %s11, 3072, %s489, [#allocation14], 192, 192, 12
        $region56: #{tpu_custom_call.1} parent=11 // pred_fallthru
          _
        // Predicated region
        $region57: #{tpu_custom_call.1} parent=11 // pred_check
          %p495 = pneg %p307
        $region58: #{tpu_custom_call.1} parent=11 // pred_check_branch
          %497 = sbr.rel (%p495) target = $region60
        $region59: #{tpu_custom_call.1} parent=11 // pred_region
          _
        $region60: #{tpu_custom_call.1} parent=11 // pred_fallthru
          _
        // Predicated region
        $region61: #{tpu_custom_call.1} parent=11 // pred_check
          %p498 = pneg %p328
        $region62: #{tpu_custom_call.1} parent=11 // pred_check_branch
          %500 = sbr.rel (%p498) target = $region64
        $region63: #{tpu_custom_call.1} parent=11 // pred_region
          %s502 = ssub.s32 12288, 12288
          %503 = vsyncadd [#allocation17], %s502
          %s504 = sshll.u32 [#allocation16], 4
          %s505 = int_to_ptr.vmem [resolvable:$true] %s504
          %510 = dma.hbm_to_vmem [thread:$0]  %s13, 12288, %s505, [#allocation17], 256, 256, 16
        $region64: #{tpu_custom_call.1} parent=11 // pred_fallthru
          _
        // Predicated region
        $region65: #{tpu_custom_call.1} parent=11 // pred_check
          %p511 = pneg %p349
        $region66: #{tpu_custom_call.1} parent=11 // pred_check_branch
          %513 = sbr.rel (%p511) target = $region68
        $region67: #{tpu_custom_call.1} parent=11 // pred_region
          _
        $region68: #{tpu_custom_call.1} parent=11 // pred_fallthru
          _
        // Predicated region
        $region69: #{tpu_custom_call.1} parent=11 // pred_check
          %p514 = pneg %p370
        $region70: #{tpu_custom_call.1} parent=11 // pred_check_branch
          %516 = sbr.rel (%p514) target = $region72
        $region71: #{tpu_custom_call.1} parent=11 // pred_region
          _
        $region72: #{tpu_custom_call.1} parent=11 // pred_fallthru
          _
        // Predicated region
        $region73: #{tpu_custom_call.1} parent=11 // pred_check
          %p517 = pneg %p391
        $region74: #{tpu_custom_call.1} parent=11 // pred_check_branch
          %519 = sbr.rel (%p517) target = $region76
        $region75: #{tpu_custom_call.1} parent=11 // pred_region
          _
        $region76: #{tpu_custom_call.1} parent=11 // pred_fallthru
          _
      $region12: #{tpu_custom_call.1} parent=5 // pred_fallthru
        _
      %p520 = scmp.lt.s32.totalorder %s29, 2
      // Predicated region
      $region77: #{tpu_custom_call.1} parent=5 // pred_check
        %p521 = pneg %p520
      $region78: #{tpu_custom_call.1} parent=5 // pred_check_branch
        %523 = sbr.rel (%p521) target = $region80
      $region79: #{tpu_custom_call.1} parent=5 // pred_region
        // Predicated region
        $region81: #{tpu_custom_call.1} parent=79 // pred_check
          %p524 = pneg %p49
        $region82: #{tpu_custom_call.1} parent=79 // pred_check_branch
          %526 = sbr.rel (%p524) target = $region84
        $region83: #{tpu_custom_call.1} parent=79 // pred_region
          %p527 = scmp.lt.s32.totalorder %s29, 1
          %s528 = scalar_select %p527, %s29, 1
          %s529 = smul.addr %s528, 11
          %s530 = smul.addr %s529, 8
          %s531 = scalar_lea.vmem %s0, %s530
        $region84: #{tpu_custom_call.1} parent=79 // pred_fallthru
          _
      $region80: #{tpu_custom_call.1} parent=5 // pred_fallthru
        _
      %p532 = scmp.le.s32.totalorder 1, %s29
      %p533 = scmp.lt.s32.totalorder %s29, 3
      %p534 = pnand %p532, %p533
      %p535 = pneg %p534
      // Predicated region
      $region85: #{tpu_custom_call.1} parent=5 // pred_check
        _
      $region86: #{tpu_custom_call.1} parent=5 // pred_check_branch
        %537 = sbr.rel (%p534) target = $region88
      $region87: #{tpu_custom_call.1} parent=5 // pred_region
        %s538 = ssub.s32 %s29, 1
        // Predicated region
        $region89: #{tpu_custom_call.1} parent=87 // pred_check
          %p539 = pneg %p118
        $region90: #{tpu_custom_call.1} parent=87 // pred_check_branch
          %541 = sbr.rel (%p539) target = $region92
        $region91: #{tpu_custom_call.1} parent=87 // pred_region
          %542 = dma.done [#allocation11], 1536
        $region92: #{tpu_custom_call.1} parent=87 // pred_fallthru
          _
        // Predicated region
        $region93: #{tpu_custom_call.1} parent=87 // pred_check
          %p543 = pneg %p160
        $region94: #{tpu_custom_call.1} parent=87 // pred_check_branch
          %545 = sbr.rel (%p543) target = $region96
        $region95: #{tpu_custom_call.1} parent=87 // pred_region
          %546 = dma.done [#allocation14], 1536
        $region96: #{tpu_custom_call.1} parent=87 // pred_fallthru
          _
        // Predicated region
        $region97: #{tpu_custom_call.1} parent=87 // pred_check
          %p547 = pneg %p286
        $region98: #{tpu_custom_call.1} parent=87 // pred_check_branch
          %549 = sbr.rel (%p547) target = $region100
        $region99: #{tpu_custom_call.1} parent=87 // pred_region
          %550 = dma.done [#allocation14], 3072
        $region100: #{tpu_custom_call.1} parent=87 // pred_fallthru
          _
        // Predicated region
        $region101: #{tpu_custom_call.1} parent=87 // pred_check
          %p551 = pneg %p328
        $region102: #{tpu_custom_call.1} parent=87 // pred_check_branch
          %553 = sbr.rel (%p551) target = $region104
        $region103: #{tpu_custom_call.1} parent=87 // pred_region
          %554 = dma.done [#allocation17], 12288
        $region104: #{tpu_custom_call.1} parent=87 // pred_fallthru
          _
        %p555 = scmp.lt.s32.totalorder %s34, 1
        %s556 = scalar_select %p555, %s34, 1
        %s557 = smul.addr %s556, 11
        %s558 = smul.addr %s557, 8
        %s559 = scalar_lea.vmem %s0, %s558
        %p560 = pneg %p55
        %p561 = pneg %p52
        %p562 = pneg %p76
        %p563 = pneg %p73
        %p564 = pneg %p97
        %p565 = pneg %p94
        %p566 = pneg %p118
        %p567 = pneg %p115
        %p568 = pneg %p139
        %p569 = pneg %p136
        %p570 = pneg %p160
        %p571 = pneg %p157
        %p572 = pneg %p181
        %p573 = pneg %p178
        %p574 = pneg %p202
        %p575 = pneg %p199
        %p576 = pneg %p223
        %p577 = pneg %p220
        %p578 = pneg %p244
        %p579 = pneg %p241
        %p580 = pneg %p265
        %p581 = pneg %p262
        %p582 = pneg %p286
        %p583 = pneg %p283
        %p584 = pneg %p307
        %p585 = pneg %p304
        %p586 = pneg %p328
        %p587 = pneg %p325
        %p588 = pneg %p349
        %p589 = pneg %p346
        %p590 = pneg %p370
        %p591 = pneg %p367
        %p592 = pneg %p391
        %p593 = pneg %p388
        %p594 = pneg %p417
        %p595 = pneg %p414
        %s596 = sand.u32 %s404, 1
        %s597 = scalar_lea.sflag [#allocation12], %s596
        %s598 = sand.u32 %s404, 1
        %s599 = scalar_lea.vmem [#allocation18], %s598
        %p600 = scmp.lt.s32.totalorder %s34, 1
        %s601 = scalar_select %p600, %s34, 1
        %s602 = smul.addr %s601, 11
        %s603 = smul.addr %s602, 8
        %s604 = scalar_lea.vmem %s0, %s603
        %v606 = vld [vmem:[%s604] sm:$0xff]
        %v607 = vld [vmem:[%s604 + $0x8] sm:$0xff]
        %v608 = vld [vmem:[%s604 + $0x10] sm:$0xff]
        %v609 = vld [vmem:[%s604 + $0x18] sm:$0xff]
        %v610 = vld [vmem:[%s604 + $0x20] sm:$0xff]
        %v611 = vld [vmem:[%s604 + $0x28] sm:$0xff]
        %v612 = vld [vmem:[%s604 + $0x30] sm:$0xff]
        %v613 = vld [vmem:[%s604 + $0x38] sm:$0xff]
        %v614 = vld [vmem:[%s604 + $0x40] sm:$0xff]
        %v615 = vld [vmem:[%s604 + $0x48] sm:$0xff]
        %v616 = vld [vmem:[%s604 + $0x50] sm:$0x7]
        %vm617 = vcmask 24576
        %618 = vst.msk [vmem:[#allocation2] sm:$0x1] %vm617, 0.0
        %619 = vst.msk [vmem:[#allocation2 + $0x54] sm:$0x1] %vm617, 0.0
        %vm620 = vcmask 31744
        %621 = vst.msk [vmem:[#allocation2 + $0x1] sm:$0xff] %vm620, %v606
        %622 = vst.msk [vmem:[#allocation2 + $0x9] sm:$0xff] %vm620, %v607
        %623 = vst.msk [vmem:[#allocation2 + $0x11] sm:$0xff] %vm620, %v608
        %624 = vst.msk [vmem:[#allocation2 + $0x19] sm:$0xff] %vm620, %v609
        %625 = vst.msk [vmem:[#allocation2 + $0x21] sm:$0xff] %vm620, %v610
        %626 = vst.msk [vmem:[#allocation2 + $0x29] sm:$0xff] %vm620, %v611
        %627 = vst.msk [vmem:[#allocation2 + $0x31] sm:$0xff] %vm620, %v612
        %628 = vst.msk [vmem:[#allocation2 + $0x39] sm:$0xff] %vm620, %v613
        %629 = vst.msk [vmem:[#allocation2 + $0x41] sm:$0xff] %vm620, %v614
        %630 = vst.msk [vmem:[#allocation2 + $0x49] sm:$0xff] %vm620, %v615
        %vm631 = vcmask 26624
        %632 = vst.msk [vmem:[#allocation2 + $0x51] sm:$0x7] %vm631, %v616
        %v633 = vld [vmem:[#allocation2] sm:$0xff]
        %v634 = vld [vmem:[#allocation2 + $0x8] sm:$0xff]
        %v635 = vld [vmem:[#allocation2 + $0x10] sm:$0xff]
        %v636 = vld [vmem:[#allocation2 + $0x18] sm:$0xff]
        %v637 = vld [vmem:[#allocation2 + $0x20] sm:$0xff]
        %v638 = vld [vmem:[#allocation2 + $0x28] sm:$0xff]
        %v639 = vld [vmem:[#allocation2 + $0x30] sm:$0xff]
        %v640 = vld [vmem:[#allocation2 + $0x38] sm:$0xff]
        %v641 = vld [vmem:[#allocation2 + $0x40] sm:$0xff]
        %v642 = vld [vmem:[#allocation2 + $0x48] sm:$0xff]
        %v643 = vld [vmem:[#allocation2 + $0x50] sm:$0x1]
        %v644 = vpack.c.bf16 %v634, %v633
        %v645 = vpack.c.bf16 %v636, %v635
        %v646 = vpack.c.bf16 %v638, %v637
        %v647 = vpack.c.bf16 %v640, %v639
        %v648 = vpack.c.bf16 %v642, %v641
        %v649 = vpack.c.bf16 %v643, %v643
        %v650 = vld [vmem:[%s1] sm:$0x3]
        %v651 = vld [vmem:[#allocation2 + $0x1] sm:$0xff]
        %v652 = vld [vmem:[#allocation2 + $0x9] sm:$0xff]
        %v653 = vld [vmem:[#allocation2 + $0x11] sm:$0xff]
        %v654 = vld [vmem:[#allocation2 + $0x19] sm:$0xff]
        %v655 = vld [vmem:[#allocation2 + $0x21] sm:$0xff]
        %v656 = vld [vmem:[#allocation2 + $0x29] sm:$0xff]
        %v657 = vld [vmem:[#allocation2 + $0x31] sm:$0xff]
        %v658 = vld [vmem:[#allocation2 + $0x39] sm:$0xff]
        %v659 = vld [vmem:[#allocation2 + $0x41] sm:$0xff]
        %v660 = vld [vmem:[#allocation2 + $0x49] sm:$0xff]
        %v661 = vld [vmem:[#allocation2 + $0x51] sm:$0x1]
        %v662 = vpack.c.bf16 %v652, %v651
        %v663 = vpack.c.bf16 %v654, %v653
        %v664 = vpack.c.bf16 %v656, %v655
        %v665 = vpack.c.bf16 %v658, %v657
        %v666 = vpack.c.bf16 %v660, %v659
        %v667 = vpack.c.bf16 %v661, %v661
        %s668 = scalar_lea.vmem %s1, 2
        %v669 = vld [vmem:[%s668] sm:$0x3]
        %v671 = vsel %vm620, %v662, 0
        %v674 = vsel %vm620, %v663, 0
        %v677 = vsel %vm620, %v664, 0
        %v680 = vsel %vm620, %v665, 0
        %v683 = vsel %vm620, %v666, 0
        %v686 = vsel %vm620, %v667, 0
        %vm688 = vcmask 1041408
        %v690 = vsel %vm688, %v669, 0
        %692 = vmatprep.subr.bf16.mxu0 0
        %693 = vmatpush1.bf16.msra.mxu0 %v690
        %694 = vmatprep.subr.bf16.mxu0 0
        %695 = vmatpush1.bf16.msra.mxu0 0
        %696 = vmatprep.subr.bf16.mxu0 0
        %697 = vmatpush1.bf16.msra.mxu0 0
        %698 = vmatprep.subr.bf16.mxu0 0
        %699 = vmatpush1.bf16.msra.mxu0 0
        %700 = vmatprep.subr.bf16.mxu0 0
        %701 = vmatpush1.bf16.msra.mxu0 0
        %702 = vmatprep.subr.bf16.mxu0 0
        %703 = vmatpush1.bf16.msra.mxu0 0
        %704 = vmatprep.subr.bf16.mxu0 0
        %705 = vmatpush1.bf16.msra.mxu0 0
        %706 = vmatprep.subr.bf16.mxu0 0
        %707 = vmatpush1.bf16.msra.mxu0 0
        %708 = vmatprep.subr.bf16.mxu0 0
        %709 = vmatpush1.bf16.msra.mxu0 0
        %710 = vmatprep.subr.bf16.mxu0 0
        %711 = vmatpush1.bf16.msra.mxu0 0
        %712 = vmatprep.subr.bf16.mxu0 0
        %713 = vmatpush1.bf16.msra.mxu0 0
        %714 = vmatprep.subr.bf16.mxu0 0
        %715 = vmatpush1.bf16.msra.mxu0 0
        %716 = vmatprep.subr.bf16.mxu0 0
        %717 = vmatpush1.bf16.msra.mxu0 0
        %718 = vmatprep.subr.bf16.mxu0 0
        %719 = vmatpush1.bf16.msra.mxu0 0
        %720 = vmatprep.subr.bf16.mxu0 0
        %721 = vmatpush1.bf16.msra.mxu0 0
        %722 = vmatprep.subr.bf16.mxu0 0
        %723 = vmatpush1.bf16.msra.mxu0 0
        %724 = vmatprep.mubr.bf16.mxu0 0
        %725 = vmatmul.mubr.bf16.gmra.mrb[0].mxu0 %v671
        %v726 = vpop.f32.mrb[0].mxu0
        %v727 = vadd.f32 0.0, %v726
        %v728 = vpop.f32.mrb[0].mxu0
        %v729 = vpop.f32.mrb[0].mxu0
        %v730 = vadd.f32 0.0, %v729
        %v731 = vpop.f32.mrb[0].mxu0
        %732 = vmatprep.mubr.bf16.mxu0 0
        %733 = vmatmul.mubr.bf16.gmra.mrb[0].mxu0 %v674
        %v734 = vpop.f32.mrb[0].mxu0
        %v735 = vadd.f32 0.0, %v734
        %v736 = vpop.f32.mrb[0].mxu0
        %v737 = vpop.f32.mrb[0].mxu0
        %v738 = vadd.f32 0.0, %v737
        %v739 = vpop.f32.mrb[0].mxu0
        %740 = vmatprep.mubr.bf16.mxu0 0
        %741 = vmatmul.mubr.bf16.gmra.mrb[0].mxu0 %v677
        %v742 = vpop.f32.mrb[0].mxu0
        %v743 = vadd.f32 0.0, %v742
        %v744 = vpop.f32.mrb[0].mxu0
        %v745 = vpop.f32.mrb[0].mxu0
        %v746 = vadd.f32 0.0, %v745
        %v747 = vpop.f32.mrb[0].mxu0
        %748 = vmatprep.mubr.bf16.mxu0 0
        %749 = vmatmul.mubr.bf16.gmra.mrb[0].mxu0 %v680
        %v750 = vpop.f32.mrb[0].mxu0
        %v751 = vadd.f32 0.0, %v750
        %v752 = vpop.f32.mrb[0].mxu0
        %v753 = vpop.f32.mrb[0].mxu0
        %v754 = vadd.f32 0.0, %v753
        %v755 = vpop.f32.mrb[0].mxu0
        %756 = vmatprep.mubr.bf16.mxu0 0
        %757 = vmatmul.mubr.bf16.gmra.mrb[0].mxu0 %v683
        %v758 = vpop.f32.mrb[0].mxu0
        %v759 = vadd.f32 0.0, %v758
        %v760 = vpop.f32.mrb[0].mxu0
        %v761 = vpop.f32.mrb[0].mxu0
        %v762 = vadd.f32 0.0, %v761
        %v763 = vpop.f32.mrb[0].mxu0
        %764 = vmatprep.mubr.bf16.mxu0 0
        %765 = vmatmul.mubr.bf16.gmra.mrb[0].mxu0 %v686
        %v766 = vpop.f32.mrb[0].mxu0
        %v767 = vadd.f32 0.0, %v766
        %v768 = vpop.f32.mrb[0].mxu0
        %v769 = vpop.f32.mrb[0].mxu0
        %v770 = vpop.f32.mrb[0].mxu0
        %771 = vdwg.mxu0
        %v773 = vsel %vm620, %v644, 0
        %v776 = vsel %vm620, %v645, 0
        %v779 = vsel %vm620, %v646, 0
        %v782 = vsel %vm620, %v647, 0
        %v785 = vsel %vm620, %v648, 0
        %v788 = vsel %vm620, %v649, 0
        %v791 = vsel %vm688, %v650, 0
        %793 = vmatprep.subr.bf16.mxu0 0
        %794 = vmatpush1.bf16.msra.mxu0 %v791
        %795 = vmatprep.subr.bf16.mxu0 0
        %796 = vmatpush1.bf16.msra.mxu0 0
        %797 = vmatprep.subr.bf16.mxu0 0
        %798 = vmatpush1.bf16.msra.mxu0 0
        %799 = vmatprep.subr.bf16.mxu0 0
        %800 = vmatpush1.bf16.msra.mxu0 0
        %801 = vmatprep.subr.bf16.mxu0 0
        %802 = vmatpush1.bf16.msra.mxu0 0
        %803 = vmatprep.subr.bf16.mxu0 0
        %804 = vmatpush1.bf16.msra.mxu0 0
        %805 = vmatprep.subr.bf16.mxu0 0
        %806 = vmatpush1.bf16.msra.mxu0 0
        %807 = vmatprep.subr.bf16.mxu0 0
        %808 = vmatpush1.bf16.msra.mxu0 0
        %809 = vmatprep.subr.bf16.mxu0 0
        %810 = vmatpush1.bf16.msra.mxu0 0
        %811 = vmatprep.subr.bf16.mxu0 0
        %812 = vmatpush1.bf16.msra.mxu0 0
        %813 = vmatprep.subr.bf16.mxu0 0
        %814 = vmatpush1.bf16.msra.mxu0 0
        %815 = vmatprep.subr.bf16.mxu0 0
        %816 = vmatpush1.bf16.msra.mxu0 0
        %817 = vmatprep.subr.bf16.mxu0 0
        %818 = vmatpush1.bf16.msra.mxu0 0
        %819 = vmatprep.subr.bf16.mxu0 0
        %820 = vmatpush1.bf16.msra.mxu0 0
        %821 = vmatprep.subr.bf16.mxu0 0
        %822 = vmatpush1.bf16.msra.mxu0 0
        %823 = vmatprep.subr.bf16.mxu0 0
        %824 = vmatpush1.bf16.msra.mxu0 0
        %825 = vmatprep.mubr.bf16.mxu0 0
        %826 = vmatmul.mubr.bf16.gmra.mrb[0].mxu0 %v773
        %v827 = vpop.f32.mrb[0].mxu0
        %v828 = vadd.f32 %v727, %v827
        %v829 = vpop.f32.mrb[0].mxu0
        %v830 = vpop.f32.mrb[0].mxu0
        %v831 = vadd.f32 %v730, %v830
        %v832 = vpop.f32.mrb[0].mxu0
        %833 = vmatprep.mubr.bf16.mxu0 0
        %834 = vmatmul.mubr.bf16.gmra.mrb[0].mxu0 %v776
        %v835 = vpop.f32.mrb[0].mxu0
        %v836 = vadd.f32 %v735, %v835
        %v837 = vpop.f32.mrb[0].mxu0
        %v838 = vpop.f32.mrb[0].mxu0
        %v839 = vadd.f32 %v738, %v838
        %v840 = vpop.f32.mrb[0].mxu0
        %841 = vmatprep.mubr.bf16.mxu0 0
        %842 = vmatmul.mubr.bf16.gmra.mrb[0].mxu0 %v779
        %v843 = vpop.f32.mrb[0].mxu0
        %v844 = vadd.f32 %v743, %v843
        %v845 = vpop.f32.mrb[0].mxu0
        %v846 = vpop.f32.mrb[0].mxu0
        %v847 = vadd.f32 %v746, %v846
        %v848 = vpop.f32.mrb[0].mxu0
        %849 = vmatprep.mubr.bf16.mxu0 0
        %850 = vmatmul.mubr.bf16.gmra.mrb[0].mxu0 %v782
        %v851 = vpop.f32.mrb[0].mxu0
        %v852 = vadd.f32 %v751, %v851
        %v853 = vpop.f32.mrb[0].mxu0
        %v854 = vpop.f32.mrb[0].mxu0
        %v855 = vadd.f32 %v754, %v854
        %v856 = vpop.f32.mrb[0].mxu0
        %857 = vmatprep.mubr.bf16.mxu0 0
        %858 = vmatmul.mubr.bf16.gmra.mrb[0].mxu0 %v785
        %v859 = vpop.f32.mrb[0].mxu0
        %v860 = vadd.f32 %v759, %v859
        %v861 = vpop.f32.mrb[0].mxu0
        %v862 = vpop.f32.mrb[0].mxu0
        %v863 = vadd.f32 %v762, %v862
        %v864 = vpop.f32.mrb[0].mxu0
        %865 = vmatprep.mubr.bf16.mxu0 0
        %866 = vmatmul.mubr.bf16.gmra.mrb[0].mxu0 %v788
        %v867 = vpop.f32.mrb[0].mxu0
        %v868 = vadd.f32 %v767, %v867
        %v869 = vpop.f32.mrb[0].mxu0
        %v870 = vpop.f32.mrb[0].mxu0
        %v871 = vpop.f32.mrb[0].mxu0
        %872 = vdwg.mxu0
        %v873 = vld [vmem:[#allocation2 + $0x2] sm:$0xff]
        %v874 = vld [vmem:[#allocation2 + $0xa] sm:$0xff]
        %v875 = vld [vmem:[#allocation2 + $0x12] sm:$0xff]
        %v876 = vld [vmem:[#allocation2 + $0x1a] sm:$0xff]
        %v877 = vld [vmem:[#allocation2 + $0x22] sm:$0xff]
        %v878 = vld [vmem:[#allocation2 + $0x2a] sm:$0xff]
        %v879 = vld [vmem:[#allocation2 + $0x32] sm:$0xff]
        %v880 = vld [vmem:[#allocation2 + $0x3a] sm:$0xff]
        %v881 = vld [vmem:[#allocation2 + $0x42] sm:$0xff]
        %v882 = vld [vmem:[#allocation2 + $0x4a] sm:$0xff]
        %v883 = vld [vmem:[#allocation2 + $0x52] sm:$0x1]
        %v884 = vpack.c.bf16 %v874, %v873
        %v885 = vpack.c.bf16 %v876, %v875
        %v886 = vpack.c.bf16 %v878, %v877
        %v887 = vpack.c.bf16 %v880, %v879
        %v888 = vpack.c.bf16 %v882, %v881
        %v889 = vpack.c.bf16 %v883, %v883
        %s890 = scalar_lea.vmem %s1, 4
        %v891 = vld [vmem:[%s890] sm:$0x3]
        %v893 = vsel %vm620, %v884, 0
        %v896 = vsel %vm620, %v885, 0
        %v899 = vsel %vm620, %v886, 0
        %v902 = vsel %vm620, %v887, 0
        %v905 = vsel %vm620, %v888, 0
        %v908 = vsel %vm620, %v889, 0
        %v911 = vsel %vm688, %v891, 0
        %913 = vmatprep.subr.bf16.mxu0 0
        %914 = vmatpush1.bf16.msra.mxu0 %v911
        %915 = vmatprep.subr.bf16.mxu0 0
        %916 = vmatpush1.bf16.msra.mxu0 0
        %917 = vmatprep.subr.bf16.mxu0 0
        %918 = vmatpush1.bf16.msra.mxu0 0
        %919 = vmatprep.subr.bf16.mxu0 0
        %920 = vmatpush1.bf16.msra.mxu0 0
        %921 = vmatprep.subr.bf16.mxu0 0
        %922 = vmatpush1.bf16.msra.mxu0 0
        %923 = vmatprep.subr.bf16.mxu0 0
        %924 = vmatpush1.bf16.msra.mxu0 0
        %925 = vmatprep.subr.bf16.mxu0 0
        %926 = vmatpush1.bf16.msra.mxu0 0
        %927 = vmatprep.subr.bf16.mxu0 0
        %928 = vmatpush1.bf16.msra.mxu0 0
        %929 = vmatprep.subr.bf16.mxu0 0
        %930 = vmatpush1.bf16.msra.mxu0 0
        %931 = vmatprep.subr.bf16.mxu0 0
        %932 = vmatpush1.bf16.msra.mxu0 0
        %933 = vmatprep.subr.bf16.mxu0 0
        %934 = vmatpush1.bf16.msra.mxu0 0
        %935 = vmatprep.subr.bf16.mxu0 0
        %936 = vmatpush1.bf16.msra.mxu0 0
        %937 = vmatprep.subr.bf16.mxu0 0
        %938 = vmatpush1.bf16.msra.mxu0 0
        %939 = vmatprep.subr.bf16.mxu0 0
        %940 = vmatpush1.bf16.msra.mxu0 0
        %941 = vmatprep.subr.bf16.mxu0 0
        %942 = vmatpush1.bf16.msra.mxu0 0
        %943 = vmatprep.subr.bf16.mxu0 0
        %944 = vmatpush1.bf16.msra.mxu0 0
        %945 = vmatprep.mubr.bf16.mxu0 0
        %946 = vmatmul.mubr.bf16.gmra.mrb[0].mxu0 %v893
        %v947 = vpop.f32.mrb[0].mxu0
        %v948 = vadd.f32 0.0, %v947
        %v949 = vpop.f32.mrb[0].mxu0
        %v950 = vpop.f32.mrb[0].mxu0
        %v951 = vadd.f32 0.0, %v950
        %v952 = vpop.f32.mrb[0].mxu0
        %953 = vmatprep.mubr.bf16.mxu0 0
        %954 = vmatmul.mubr.bf16.gmra.mrb[0].mxu0 %v896
        %v955 = vpop.f32.mrb[0].mxu0
        %v956 = vadd.f32 0.0, %v955
        %v957 = vpop.f32.mrb[0].mxu0
        %v958 = vpop.f32.mrb[0].mxu0
        %v959 = vadd.f32 0.0, %v958
        %v960 = vpop.f32.mrb[0].mxu0
        %961 = vmatprep.mubr.bf16.mxu0 0
        %962 = vmatmul.mubr.bf16.gmra.mrb[0].mxu0 %v899
        %v963 = vpop.f32.mrb[0].mxu0
        %v964 = vadd.f32 0.0, %v963
        %v965 = vpop.f32.mrb[0].mxu0
        %v966 = vpop.f32.mrb[0].mxu0
        %v967 = vadd.f32 0.0, %v966
        %v968 = vpop.f32.mrb[0].mxu0
        %969 = vmatprep.mubr.bf16.mxu0 0
        %970 = vmatmul.mubr.bf16.gmra.mrb[0].mxu0 %v902
        %v971 = vpop.f32.mrb[0].mxu0
        %v972 = vadd.f32 0.0, %v971
        %v973 = vpop.f32.mrb[0].mxu0
        %v974 = vpop.f32.mrb[0].mxu0
        %v975 = vadd.f32 0.0, %v974
        %v976 = vpop.f32.mrb[0].mxu0
        %977 = vmatprep.mubr.bf16.mxu0 0
        %978 = vmatmul.mubr.bf16.gmra.mrb[0].mxu0 %v905
        %v979 = vpop.f32.mrb[0].mxu0
        %v980 = vadd.f32 0.0, %v979
        %v981 = vpop.f32.mrb[0].mxu0
        %v982 = vpop.f32.mrb[0].mxu0
        %v983 = vadd.f32 0.0, %v982
        %v984 = vpop.f32.mrb[0].mxu0
        %985 = vmatprep.mubr.bf16.mxu0 0
        %986 = vmatmul.mubr.bf16.gmra.mrb[0].mxu0 %v908
        %v987 = vpop.f32.mrb[0].mxu0
        %v988 = vadd.f32 0.0, %v987
        %v989 = vpop.f32.mrb[0].mxu0
        %v990 = vpop.f32.mrb[0].mxu0
        %v991 = vpop.f32.mrb[0].mxu0
        %992 = vdwg.mxu0
        %v993 = vadd.f32 %v828, %v948
        %v994 = vadd.f32 %v831, %v951
        %v995 = vadd.f32 %v836, %v956
        %v996 = vadd.f32 %v839, %v959
        %v997 = vadd.f32 %v844, %v964
        %v998 = vadd.f32 %v847, %v967
        %v999 = vadd.f32 %v852, %v972
        %v1000 = vadd.f32 %v855, %v975
        %v1001 = vadd.f32 %v860, %v980
        %v1002 = vadd.f32 %v863, %v983
        %v1003 = vadd.f32 %v868, %v988
        %v1004 = vld [vmem:[#allocation2 + $0x3] sm:$0xff]
        %v1005 = vld [vmem:[#allocation2 + $0xb] sm:$0xff]
        %v1006 = vld [vmem:[#allocation2 + $0x13] sm:$0xff]
        %v1007 = vld [vmem:[#allocation2 + $0x1b] sm:$0xff]
        %v1008 = vld [vmem:[#allocation2 + $0x23] sm:$0xff]
        %v1009 = vld [vmem:[#allocation2 + $0x2b] sm:$0xff]
        %v1010 = vld [vmem:[#allocation2 + $0x33] sm:$0xff]
        %v1011 = vld [vmem:[#allocation2 + $0x3b] sm:$0xff]
        %v1012 = vld [vmem:[#allocation2 + $0x43] sm:$0xff]
        %v1013 = vld [vmem:[#allocation2 + $0x4b] sm:$0xff]
        %v1014 = vld [vmem:[#allocation2 + $0x53] sm:$0x1]
        %v1015 = vpack.c.bf16 %v1005, %v1004
        %v1016 = vpack.c.bf16 %v1007, %v1006
        %v1017 = vpack.c.bf16 %v1009, %v1008
        %v1018 = vpack.c.bf16 %v1011, %v1010
        %v1019 = vpack.c.bf16 %v1013, %v1012
        %v1020 = vpack.c.bf16 %v1014, %v1014
        %s1021 = scalar_lea.vmem %s1, 6
        %v1022 = vld [vmem:[%s1021] sm:$0x3]
        %v1024 = vsel %vm620, %v1015, 0
        %v1027 = vsel %vm620, %v1016, 0
        %v1030 = vsel %vm620, %v1017, 0
        %v1033 = vsel %vm620, %v1018, 0
        %v1036 = vsel %vm620, %v1019, 0
        %v1039 = vsel %vm620, %v1020, 0
        %v1042 = vsel %vm688, %v1022, 0
        %1044 = vmatprep.subr.bf16.mxu0 0
        %1045 = vmatpush1.bf16.msra.mxu0 %v1042
        %1046 = vmatprep.subr.bf16.mxu0 0
        %1047 = vmatpush1.bf16.msra.mxu0 0
        %1048 = vmatprep.subr.bf16.mxu0 0
        %1049 = vmatpush1.bf16.msra.mxu0 0
        %1050 = vmatprep.subr.bf16.mxu0 0
        %1051 = vmatpush1.bf16.msra.mxu0 0
        %1052 = vmatprep.subr.bf16.mxu0 0
        %1053 = vmatpush1.bf16.msra.mxu0 0
        %1054 = vmatprep.subr.bf16.mxu0 0
        %1055 = vmatpush1.bf16.msra.mxu0 0
        %1056 = vmatprep.subr.bf16.mxu0 0
        %1057 = vmatpush1.bf16.msra.mxu0 0
        %1058 = vmatprep.subr.bf16.mxu0 0
        %1059 = vmatpush1.bf16.msra.mxu0 0
        %1060 = vmatprep.subr.bf16.mxu0 0
        %1061 = vmatpush1.bf16.msra.mxu0 0
        %1062 = vmatprep.subr.bf16.mxu0 0
        %1063 = vmatpush1.bf16.msra.mxu0 0
        %1064 = vmatprep.subr.bf16.mxu0 0
        %1065 = vmatpush1.bf16.msra.mxu0 0
        %1066 = vmatprep.subr.bf16.mxu0 0
        %1067 = vmatpush1.bf16.msra.mxu0 0
        %1068 = vmatprep.subr.bf16.mxu0 0
        %1069 = vmatpush1.bf16.msra.mxu0 0
        %1070 = vmatprep.subr.bf16.mxu0 0
        %1071 = vmatpush1.bf16.msra.mxu0 0
        %1072 = vmatprep.subr.bf16.mxu0 0
        %1073 = vmatpush1.bf16.msra.mxu0 0
        %1074 = vmatprep.subr.bf16.mxu0 0
        %1075 = vmatpush1.bf16.msra.mxu0 0
        %1076 = vmatprep.mubr.bf16.mxu0 0
        %1077 = vmatmul.mubr.bf16.gmra.mrb[0].mxu0 %v1024
        %v1078 = vpop.f32.mrb[0].mxu0
        %v1079 = vadd.f32 0.0, %v1078
        %v1080 = vpop.f32.mrb[0].mxu0
        %v1081 = vpop.f32.mrb[0].mxu0
        %v1082 = vadd.f32 0.0, %v1081
        %v1083 = vpop.f32.mrb[0].mxu0
        %1084 = vmatprep.mubr.bf16.mxu0 0
        %1085 = vmatmul.mubr.bf16.gmra.mrb[0].mxu0 %v1027
        %v1086 = vpop.f32.mrb[0].mxu0
        %v1087 = vadd.f32 0.0, %v1086
        %v1088 = vpop.f32.mrb[0].mxu0
        %v1089 = vpop.f32.mrb[0].mxu0
        %v1090 = vadd.f32 0.0, %v1089
        %v1091 = vpop.f32.mrb[0].mxu0
        %1092 = vmatprep.mubr.bf16.mxu0 0
        %1093 = vmatmul.mubr.bf16.gmra.mrb[0].mxu0 %v1030
        %v1094 = vpop.f32.mrb[0].mxu0
        %v1095 = vadd.f32 0.0, %v1094
        %v1096 = vpop.f32.mrb[0].mxu0
        %v1097 = vpop.f32.mrb[0].mxu0
        %v1098 = vadd.f32 0.0, %v1097
        %v1099 = vpop.f32.mrb[0].mxu0
        %1100 = vmatprep.mubr.bf16.mxu0 0
        %1101 = vmatmul.mubr.bf16.gmra.mrb[0].mxu0 %v1033
        %v1102 = vpop.f32.mrb[0].mxu0
        %v1103 = vadd.f32 0.0, %v1102
        %v1104 = vpop.f32.mrb[0].mxu0
        %v1105 = vpop.f32.mrb[0].mxu0
        %v1106 = vadd.f32 0.0, %v1105
        %v1107 = vpop.f32.mrb[0].mxu0
        %1108 = vmatprep.mubr.bf16.mxu0 0
        %1109 = vmatmul.mubr.bf16.gmra.mrb[0].mxu0 %v1036
        %v1110 = vpop.f32.mrb[0].mxu0
        %v1111 = vadd.f32 0.0, %v1110
        %v1112 = vpop.f32.mrb[0].mxu0
        %v1113 = vpop.f32.mrb[0].mxu0
        %v1114 = vadd.f32 0.0, %v1113
        %v1115 = vpop.f32.mrb[0].mxu0
        %1116 = vmatprep.mubr.bf16.mxu0 0
        %1117 = vmatmul.mubr.bf16.gmra.mrb[0].mxu0 %v1039
        %v1118 = vpop.f32.mrb[0].mxu0
        %v1119 = vadd.f32 0.0, %v1118
        %v1120 = vpop.f32.mrb[0].mxu0
        %v1121 = vpop.f32.mrb[0].mxu0
        %v1122 = vpop.f32.mrb[0].mxu0
        %1123 = vdwg.mxu0
        %v1124 = vadd.f32 %v993, %v1079
        %v1125 = vadd.f32 %v994, %v1082
        %v1126 = vadd.f32 %v995, %v1087
        %v1127 = vadd.f32 %v996, %v1090
        %v1128 = vadd.f32 %v997, %v1095
        %v1129 = vadd.f32 %v998, %v1098
        %v1130 = vadd.f32 %v999, %v1103
        %v1131 = vadd.f32 %v1000, %v1106
        %v1132 = vadd.f32 %v1001, %v1111
        %v1133 = vadd.f32 %v1002, %v1114
        %v1134 = vadd.f32 %v1003, %v1119
        %v1135 = vld [vmem:[#allocation2 + $0x4] sm:$0xff]
        %v1136 = vld [vmem:[#allocation2 + $0xc] sm:$0xff]
        %v1137 = vld [vmem:[#allocation2 + $0x14] sm:$0xff]
        %v1138 = vld [vmem:[#allocation2 + $0x1c] sm:$0xff]
        %v1139 = vld [vmem:[#allocation2 + $0x24] sm:$0xff]
        %v1140 = vld [vmem:[#allocation2 + $0x2c] sm:$0xff]
        %v1141 = vld [vmem:[#allocation2 + $0x34] sm:$0xff]
        %v1142 = vld [vmem:[#allocation2 + $0x3c] sm:$0xff]
        %v1143 = vld [vmem:[#allocation2 + $0x44] sm:$0xff]
        %v1144 = vld [vmem:[#allocation2 + $0x4c] sm:$0xff]
        %v1145 = vld [vmem:[#allocation2 + $0x54] sm:$0x1]
        %v1146 = vpack.c.bf16 %v1136, %v1135
        %v1147 = vpack.c.bf16 %v1138, %v1137
        %v1148 = vpack.c.bf16 %v1140, %v1139
        %v1149 = vpack.c.bf16 %v1142, %v1141
        %v1150 = vpack.c.bf16 %v1144, %v1143
        %v1151 = vpack.c.bf16 %v1145, %v1145
        %s1152 = scalar_lea.vmem %s1, 8
        %v1153 = vld [vmem:[%s1152] sm:$0x3]
        %v1155 = vsel %vm620, %v1146, 0
        %v1158 = vsel %vm620, %v1147, 0
        %v1161 = vsel %vm620, %v1148, 0
        %v1164 = vsel %vm620, %v1149, 0
        %v1167 = vsel %vm620, %v1150, 0
        %v1170 = vsel %vm620, %v1151, 0
        %v1173 = vsel %vm688, %v1153, 0
        %1175 = vmatprep.subr.bf16.mxu0 0
        %1176 = vmatpush1.bf16.msra.mxu0 %v1173
        %1177 = vmatprep.subr.bf16.mxu0 0
        %1178 = vmatpush1.bf16.msra.mxu0 0
        %1179 = vmatprep.subr.bf16.mxu0 0
        %1180 = vmatpush1.bf16.msra.mxu0 0
        %1181 = vmatprep.subr.bf16.mxu0 0
        %1182 = vmatpush1.bf16.msra.mxu0 0
        %1183 = vmatprep.subr.bf16.mxu0 0
        %1184 = vmatpush1.bf16.msra.mxu0 0
        %1185 = vmatprep.subr.bf16.mxu0 0
        %1186 = vmatpush1.bf16.msra.mxu0 0
        %1187 = vmatprep.subr.bf16.mxu0 0
        %1188 = vmatpush1.bf16.msra.mxu0 0
        %1189 = vmatprep.subr.bf16.mxu0 0
        %1190 = vmatpush1.bf16.msra.mxu0 0
        %1191 = vmatprep.subr.bf16.mxu0 0
        %1192 = vmatpush1.bf16.msra.mxu0 0
        %1193 = vmatprep.subr.bf16.mxu0 0
        %1194 = vmatpush1.bf16.msra.mxu0 0
        %1195 = vmatprep.subr.bf16.mxu0 0
        %1196 = vmatpush1.bf16.msra.mxu0 0
        %1197 = vmatprep.subr.bf16.mxu0 0
        %1198 = vmatpush1.bf16.msra.mxu0 0
        %1199 = vmatprep.subr.bf16.mxu0 0
        %1200 = vmatpush1.bf16.msra.mxu0 0
        %1201 = vmatprep.subr.bf16.mxu0 0
        %1202 = vmatpush1.bf16.msra.mxu0 0
        %1203 = vmatprep.subr.bf16.mxu0 0
        %1204 = vmatpush1.bf16.msra.mxu0 0
        %1205 = vmatprep.subr.bf16.mxu0 0
        %1206 = vmatpush1.bf16.msra.mxu0 0
        %1207 = vmatprep.mubr.bf16.mxu0 0
        %1208 = vmatmul.mubr.bf16.gmra.mrb[0].mxu0 %v1155
        %v1209 = vpop.f32.mrb[0].mxu0
        %v1210 = vadd.f32 0.0, %v1209
        %v1211 = vpop.f32.mrb[0].mxu0
        %v1212 = vpop.f32.mrb[0].mxu0
        %v1213 = vadd.f32 0.0, %v1212
        %v1214 = vpop.f32.mrb[0].mxu0
        %1215 = vmatprep.mubr.bf16.mxu0 0
        %1216 = vmatmul.mubr.bf16.gmra.mrb[0].mxu0 %v1158
        %v1217 = vpop.f32.mrb[0].mxu0
        %v1218 = vadd.f32 0.0, %v1217
        %v1219 = vpop.f32.mrb[0].mxu0
        %v1220 = vpop.f32.mrb[0].mxu0
        %v1221 = vadd.f32 0.0, %v1220
        %v1222 = vpop.f32.mrb[0].mxu0
        %1223 = vmatprep.mubr.bf16.mxu0 0
        %1224 = vmatmul.mubr.bf16.gmra.mrb[0].mxu0 %v1161
        %v1225 = vpop.f32.mrb[0].mxu0
        %v1226 = vadd.f32 0.0, %v1225
        %v1227 = vpop.f32.mrb[0].mxu0
        %v1228 = vpop.f32.mrb[0].mxu0
        %v1229 = vadd.f32 0.0, %v1228
        %v1230 = vpop.f32.mrb[0].mxu0
        %1231 = vmatprep.mubr.bf16.mxu0 0
        %1232 = vmatmul.mubr.bf16.gmra.mrb[0].mxu0 %v1164
        %v1233 = vpop.f32.mrb[0].mxu0
        %v1234 = vadd.f32 0.0, %v1233
        %v1235 = vpop.f32.mrb[0].mxu0
        %v1236 = vpop.f32.mrb[0].mxu0
        %v1237 = vadd.f32 0.0, %v1236
        %v1238 = vpop.f32.mrb[0].mxu0
        %1239 = vmatprep.mubr.bf16.mxu0 0
        %1240 = vmatmul.mubr.bf16.gmra.mrb[0].mxu0 %v1167
        %v1241 = vpop.f32.mrb[0].mxu0
        %v1242 = vadd.f32 0.0, %v1241
        %v1243 = vpop.f32.mrb[0].mxu0
        %v1244 = vpop.f32.mrb[0].mxu0
        %v1245 = vadd.f32 0.0, %v1244
        %v1246 = vpop.f32.mrb[0].mxu0
        %1247 = vmatprep.mubr.bf16.mxu0 0
        %1248 = vmatmul.mubr.bf16.gmra.mrb[0].mxu0 %v1170
        %v1249 = vpop.f32.mrb[0].mxu0
        %v1250 = vadd.f32 0.0, %v1249
        %v1251 = vpop.f32.mrb[0].mxu0
        %v1252 = vpop.f32.mrb[0].mxu0
        %v1253 = vpop.f32.mrb[0].mxu0
        %1254 = vdwg.mxu0
        %v1255 = vadd.f32 %v1124, %v1210
        %v1256 = vadd.f32 %v1125, %v1213
        %v1257 = vadd.f32 %v1126, %v1218
        %v1258 = vadd.f32 %v1127, %v1221
        %v1259 = vadd.f32 %v1128, %v1226
        %v1260 = vadd.f32 %v1129, %v1229
        %v1261 = vadd.f32 %v1130, %v1234
        %v1262 = vadd.f32 %v1131, %v1237
        %v1263 = vadd.f32 %v1132, %v1242
        %v1264 = vadd.f32 %v1133, %v1245
        %v1265 = vadd.f32 %v1134, %v1250
        %v1266 = vld [vmem:[%s2] sm:$0x1]
        %v1267 = vlaneseq
        %v1268 = vshrl.u32 %v1267, 7
        %v1269 = vsub.s32 0, %v1268
        %v1270 = vrot.slane %v1266, %v1269
        %v1271 = vadd.f32 %v1255, %v1270
        %v1272 = vadd.f32 %v1256, %v1270
        %v1273 = vadd.f32 %v1257, %v1270
        %v1274 = vadd.f32 %v1258, %v1270
        %v1275 = vadd.f32 %v1259, %v1270
        %v1276 = vadd.f32 %v1260, %v1270
        %v1277 = vadd.f32 %v1261, %v1270
        %v1278 = vadd.f32 %v1262, %v1270
        %v1279 = vadd.f32 %v1263, %v1270
        %v1280 = vadd.f32 %v1264, %v1270
        %v1281 = vadd.f32 %v1265, %v1270
        %v1282 = vmax.f32 %v1271, 0.0
        %v1283 = vmax.f32 %v1272, 0.0
        %v1284 = vmax.f32 %v1273, 0.0
        %v1285 = vmax.f32 %v1274, 0.0
        %v1286 = vmax.f32 %v1275, 0.0
        %v1287 = vmax.f32 %v1276, 0.0
        %v1288 = vmax.f32 %v1277, 0.0
        %v1289 = vmax.f32 %v1278, 0.0
        %v1290 = vmax.f32 %v1279, 0.0
        %v1291 = vmax.f32 %v1280, 0.0
        %v1292 = vmax.f32 %v1281, 0.0
        %v1293 = vld [vmem:[%s2 + $0x1] sm:$0x1]
        %v1294 = vlaneseq
        %v1295 = vshrl.u32 %v1294, 7
        %v1296 = vsub.s32 0, %v1295
        %v1297 = vrot.slane %v1293, %v1296
        %v1298 = vmul.f32 %v1282, %v1297
        %v1299 = vmul.f32 %v1283, %v1297
        %v1300 = vmul.f32 %v1284, %v1297
        %v1301 = vmul.f32 %v1285, %v1297
        %v1302 = vmul.f32 %v1286, %v1297
        %v1303 = vmul.f32 %v1287, %v1297
        %v1304 = vmul.f32 %v1288, %v1297
        %v1305 = vmul.f32 %v1289, %v1297
        %v1306 = vmul.f32 %v1290, %v1297
        %v1307 = vmul.f32 %v1291, %v1297
        %v1308 = vmul.f32 %v1292, %v1297
        %v1309 = vld [vmem:[%s2 + $0x2] sm:$0x1]
        %v1310 = vlaneseq
        %v1311 = vshrl.u32 %v1310, 7
        %v1312 = vsub.s32 0, %v1311
        %v1313 = vrot.slane %v1309, %v1312
        %v1314 = vadd.f32 %v1298, %v1313
        %v1315 = vadd.f32 %v1299, %v1313
        %v1316 = vadd.f32 %v1300, %v1313
        %v1317 = vadd.f32 %v1301, %v1313
        %v1318 = vadd.f32 %v1302, %v1313
        %v1319 = vadd.f32 %v1303, %v1313
        %v1320 = vadd.f32 %v1304, %v1313
        %v1321 = vadd.f32 %v1305, %v1313
        %v1322 = vadd.f32 %v1306, %v1313
        %v1323 = vadd.f32 %v1307, %v1313
        %v1324 = vadd.f32 %v1308, %v1313
        %vm1325 = vcmask 516096
        %1326 = vst.msk [vmem:[#allocation3] sm:$0x1] %vm1325, 0.0
        %1327 = vst.msk [vmem:[#allocation3 + $0x52] sm:$0x1] %vm1325, 0.0
        %vm1328 = vcmask 523264
        %1329 = vst.msk [vmem:[#allocation3 + $0x1] sm:$0xff] %vm1328, %v1314
        %1330 = vst.msk [vmem:[#allocation3 + $0x9] sm:$0xff] %vm1328, %v1315
        %1331 = vst.msk [vmem:[#allocation3 + $0x11] sm:$0xff] %vm1328, %v1316
        %1332 = vst.msk [vmem:[#allocation3 + $0x19] sm:$0xff] %vm1328, %v1317
        %1333 = vst.msk [vmem:[#allocation3 + $0x21] sm:$0xff] %vm1328, %v1318
        %1334 = vst.msk [vmem:[#allocation3 + $0x29] sm:$0xff] %vm1328, %v1319
        %1335 = vst.msk [vmem:[#allocation3 + $0x31] sm:$0xff] %vm1328, %v1320
        %1336 = vst.msk [vmem:[#allocation3 + $0x39] sm:$0xff] %vm1328, %v1321
        %1337 = vst.msk [vmem:[#allocation3 + $0x41] sm:$0xff] %vm1328, %v1322
        %1338 = vst.msk [vmem:[#allocation3 + $0x49] sm:$0xff] %vm1328, %v1323
        %1339 = vst.msk [vmem:[#allocation3 + $0x51] sm:$0x1] %vm1325, %v1324
        %v1340 = vld [vmem:[#allocation3] sm:$0xff]
        %v1341 = vld [vmem:[#allocation3 + $0x8] sm:$0xff]
        %v1342 = vld [vmem:[#allocation3 + $0x10] sm:$0xff]
        %v1343 = vld [vmem:[#allocation3 + $0x18] sm:$0xff]
        %v1344 = vld [vmem:[#allocation3 + $0x20] sm:$0xff]
        %v1345 = vld [vmem:[#allocation3 + $0x28] sm:$0xff]
        %v1346 = vld [vmem:[#allocation3 + $0x30] sm:$0xff]
        %v1347 = vld [vmem:[#allocation3 + $0x38] sm:$0xff]
        %v1348 = vld [vmem:[#allocation3 + $0x40] sm:$0xff]
        %v1349 = vld [vmem:[#allocation3 + $0x48] sm:$0xff]
        %v1350 = vld [vmem:[#allocation3 + $0x50] sm:$0x1]
        %v1351 = vpack.c.bf16 %v1341, %v1340
        %v1352 = vpack.c.bf16 %v1343, %v1342
        %v1353 = vpack.c.bf16 %v1345, %v1344
        %v1354 = vpack.c.bf16 %v1347, %v1346
        %v1355 = vpack.c.bf16 %v1349, %v1348
        %v1356 = vpack.c.bf16 %v1350, %v1350
        %v1357 = vld [vmem:[#allocation10] sm:$0xf]
        %v1358 = vld [vmem:[#allocation10 + $0x4] sm:$0xf]
        %v1359 = vld [vmem:[#allocation10 + $0x8] sm:$0xf]
        %v1360 = vld [vmem:[#allocation10 + $0xc] sm:$0xf]
        %v1361 = vld [vmem:[#allocation10 + $0x10] sm:$0xf]
        %v1362 = vld [vmem:[#allocation10 + $0x14] sm:$0xf]
        %v1363 = vld [vmem:[#allocation10 + $0x18] sm:$0xf]
        %v1364 = vld [vmem:[#allocation10 + $0x1c] sm:$0xf]
        %v1365 = vld [vmem:[#allocation3 + $0x1] sm:$0xff]
        %v1366 = vld [vmem:[#allocation3 + $0x9] sm:$0xff]
        %v1367 = vld [vmem:[#allocation3 + $0x11] sm:$0xff]
        %v1368 = vld [vmem:[#allocation3 + $0x19] sm:$0xff]
        %v1369 = vld [vmem:[#allocation3 + $0x21] sm:$0xff]
        %v1370 = vld [vmem:[#allocation3 + $0x29] sm:$0xff]
        %v1371 = vld [vmem:[#allocation3 + $0x31] sm:$0xff]
        %v1372 = vld [vmem:[#allocation3 + $0x39] sm:$0xff]
        %v1373 = vld [vmem:[#allocation3 + $0x41] sm:$0xff]
        %v1374 = vld [vmem:[#allocation3 + $0x49] sm:$0xff]
        %v1375 = vld [vmem:[#allocation3 + $0x51] sm:$0x1]
        %v1376 = vpack.c.bf16 %v1366, %v1365
        %v1377 = vpack.c.bf16 %v1368, %v1367
        %v1378 = vpack.c.bf16 %v1370, %v1369
        %v1379 = vpack.c.bf16 %v1372, %v1371
        %v1380 = vpack.c.bf16 %v1374, %v1373
        %v1381 = vpack.c.bf16 %v1375, %v1375
        %s1382 = scalar_lea.vmem [#allocation10], 32
        %v1383 = vld [vmem:[%s1382] sm:$0xf]
        %v1384 = vld [vmem:[%s1382 + $0x4] sm:$0xf]
        %v1385 = vld [vmem:[%s1382 + $0x8] sm:$0xf]
        %v1386 = vld [vmem:[%s1382 + $0xc] sm:$0xf]
        %v1387 = vld [vmem:[%s1382 + $0x10] sm:$0xf]
        %v1388 = vld [vmem:[%s1382 + $0x14] sm:$0xf]
        %v1389 = vld [vmem:[%s1382 + $0x18] sm:$0xf]
        %v1390 = vld [vmem:[%s1382 + $0x1c] sm:$0xf]
        %v1399 = vunpack.c.l.b16 %v1383
        %v1400 = vunpack.c.l.b16 %v1384
        %v1401 = vunpack.c.l.b16 %v1385
        %v1402 = vunpack.c.l.b16 %v1386
        %v1403 = vunpack.c.l.b16 %v1387
        %v1404 = vunpack.c.l.b16 %v1388
        %v1405 = vunpack.c.l.b16 %v1389
        %v1406 = vunpack.c.l.b16 %v1390
        %v1407 = vpack.c.b16 %v1400, %v1399
        %v1408 = vpack.c.b16 %v1402, %v1401
        %v1409 = vpack.c.b16 %v1404, %v1403
        %v1410 = vpack.c.b16 %v1406, %v1405
        %v1416 = vsel %vm1328, %v1376, 0
        %v1419 = vsel %vm1328, %v1377, 0
        %v1422 = vsel %vm1328, %v1378, 0
        %v1425 = vsel %vm1328, %v1379, 0
        %v1428 = vsel %vm1328, %v1380, 0
        %v1431 = vsel %vm1328, %v1381, 0
        %1433 = vmatprep.subr.bf16.mxu0 0
        %1434 = vmatpush1.bf16.msra.mxu0 %v1407
        %1435 = vmatprep.subr.bf16.mxu0 0
        %1436 = vmatpush1.bf16.msra.mxu0 %v1408
        %1437 = vmatprep.subr.bf16.mxu0 0
        %1438 = vmatpush1.bf16.msra.mxu0 %v1409
        %1439 = vmatprep.subr.bf16.mxu0 0
        %1440 = vmatpush1.bf16.msra.mxu0 %v1410
        %1441 = vmatprep.subr.bf16.mxu0 0
        %1442 = vmatpush1.bf16.msra.mxu0 0
        %1443 = vmatprep.subr.bf16.mxu0 0
        %1444 = vmatpush1.bf16.msra.mxu0 0
        %1445 = vmatprep.subr.bf16.mxu0 0
        %1446 = vmatpush1.bf16.msra.mxu0 0
        %1447 = vmatprep.subr.bf16.mxu0 0
        %1448 = vmatpush1.bf16.msra.mxu0 0
        %1449 = vmatprep.subr.bf16.mxu0 0
        %1450 = vmatpush1.bf16.msra.mxu0 0
        %1451 = vmatprep.subr.bf16.mxu0 0
        %1452 = vmatpush1.bf16.msra.mxu0 0
        %1453 = vmatprep.subr.bf16.mxu0 0
        %1454 = vmatpush1.bf16.msra.mxu0 0
        %1455 = vmatprep.subr.bf16.mxu0 0
        %1456 = vmatpush1.bf16.msra.mxu0 0
        %1457 = vmatprep.subr.bf16.mxu0 0
        %1458 = vmatpush1.bf16.msra.mxu0 0
        %1459 = vmatprep.subr.bf16.mxu0 0
        %1460 = vmatpush1.bf16.msra.mxu0 0
        %1461 = vmatprep.subr.bf16.mxu0 0
        %1462 = vmatpush1.bf16.msra.mxu0 0
        %1463 = vmatprep.subr.bf16.mxu0 0
        %1464 = vmatpush1.bf16.msra.mxu0 0
        %1465 = vmatprep.mubr.bf16.mxu0 0
        %1466 = vmatmul.mubr.bf16.gmra.mrb[0].mxu0 %v1416
        %v1467 = vpop.f32.mrb[0].mxu0
        %v1468 = vadd.f32 0.0, %v1467
        %v1469 = vpop.f32.mrb[0].mxu0
        %v1470 = vpop.f32.mrb[0].mxu0
        %v1471 = vadd.f32 0.0, %v1470
        %v1472 = vpop.f32.mrb[0].mxu0
        %1473 = vmatprep.mubr.bf16.mxu0 0
        %1474 = vmatmul.mubr.bf16.gmra.mrb[0].mxu0 %v1419
        %v1475 = vpop.f32.mrb[0].mxu0
        %v1476 = vadd.f32 0.0, %v1475
        %v1477 = vpop.f32.mrb[0].mxu0
        %v1478 = vpop.f32.mrb[0].mxu0
        %v1479 = vadd.f32 0.0, %v1478
        %v1480 = vpop.f32.mrb[0].mxu0
        %1481 = vmatprep.mubr.bf16.mxu0 0
        %1482 = vmatmul.mubr.bf16.gmra.mrb[0].mxu0 %v1422
        %v1483 = vpop.f32.mrb[0].mxu0
        %v1484 = vadd.f32 0.0, %v1483
        %v1485 = vpop.f32.mrb[0].mxu0
        %v1486 = vpop.f32.mrb[0].mxu0
        %v1487 = vadd.f32 0.0, %v1486
        %v1488 = vpop.f32.mrb[0].mxu0
        %1489 = vmatprep.mubr.bf16.mxu0 0
        %1490 = vmatmul.mubr.bf16.gmra.mrb[0].mxu0 %v1425
        %v1491 = vpop.f32.mrb[0].mxu0
        %v1492 = vadd.f32 0.0, %v1491
        %v1493 = vpop.f32.mrb[0].mxu0
        %v1494 = vpop.f32.mrb[0].mxu0
        %v1495 = vadd.f32 0.0, %v1494
        %v1496 = vpop.f32.mrb[0].mxu0
        %1497 = vmatprep.mubr.bf16.mxu0 0
        %1498 = vmatmul.mubr.bf16.gmra.mrb[0].mxu0 %v1428
        %v1499 = vpop.f32.mrb[0].mxu0
        %v1500 = vadd.f32 0.0, %v1499
        %v1501 = vpop.f32.mrb[0].mxu0
        %v1502 = vpop.f32.mrb[0].mxu0
        %v1503 = vadd.f32 0.0, %v1502
        %v1504 = vpop.f32.mrb[0].mxu0
        %1505 = vmatprep.mubr.bf16.mxu0 0
        %1506 = vmatmul.mubr.bf16.gmra.mrb[0].mxu0 %v1431
        %v1507 = vpop.f32.mrb[0].mxu0
        %v1508 = vadd.f32 0.0, %v1507
        %v1509 = vpop.f32.mrb[0].mxu0
        %v1510 = vpop.f32.mrb[0].mxu0
        %v1511 = vpop.f32.mrb[0].mxu0
        %1512 = vdwg.mxu0
        %v1521 = vunpack.c.l.b16 %v1357
        %v1522 = vunpack.c.l.b16 %v1358
        %v1523 = vunpack.c.l.b16 %v1359
        %v1524 = vunpack.c.l.b16 %v1360
        %v1525 = vunpack.c.l.b16 %v1361
        %v1526 = vunpack.c.l.b16 %v1362
        %v1527 = vunpack.c.l.b16 %v1363
        %v1528 = vunpack.c.l.b16 %v1364
        %v1529 = vpack.c.b16 %v1522, %v1521
        %v1530 = vpack.c.b16 %v1524, %v1523
        %v1531 = vpack.c.b16 %v1526, %v1525
        %v1532 = vpack.c.b16 %v1528, %v1527
        %v1538 = vsel %vm1328, %v1351, 0
        %v1541 = vsel %vm1328, %v1352, 0
        %v1544 = vsel %vm1328, %v1353, 0
        %v1547 = vsel %vm1328, %v1354, 0
        %v1550 = vsel %vm1328, %v1355, 0
        %v1553 = vsel %vm1328, %v1356, 0
        %1555 = vmatprep.subr.bf16.mxu0 0
        %1556 = vmatpush1.bf16.msra.mxu0 %v1529
        %1557 = vmatprep.subr.bf16.mxu0 0
        %1558 = vmatpush1.bf16.msra.mxu0 %v1530
        %1559 = vmatprep.subr.bf16.mxu0 0
        %1560 = vmatpush1.bf16.msra.mxu0 %v1531
        %1561 = vmatprep.subr.bf16.mxu0 0
        %1562 = vmatpush1.bf16.msra.mxu0 %v1532
        %1563 = vmatprep.subr.bf16.mxu0 0
        %1564 = vmatpush1.bf16.msra.mxu0 0
        %1565 = vmatprep.subr.bf16.mxu0 0
        %1566 = vmatpush1.bf16.msra.mxu0 0
        %1567 = vmatprep.subr.bf16.mxu0 0
        %1568 = vmatpush1.bf16.msra.mxu0 0
        %1569 = vmatprep.subr.bf16.mxu0 0
        %1570 = vmatpush1.bf16.msra.mxu0 0
        %1571 = vmatprep.subr.bf16.mxu0 0
        %1572 = vmatpush1.bf16.msra.mxu0 0
        %1573 = vmatprep.subr.bf16.mxu0 0
        %1574 = vmatpush1.bf16.msra.mxu0 0
        %1575 = vmatprep.subr.bf16.mxu0 0
        %1576 = vmatpush1.bf16.msra.mxu0 0
        %1577 = vmatprep.subr.bf16.mxu0 0
        %1578 = vmatpush1.bf16.msra.mxu0 0
        %1579 = vmatprep.subr.bf16.mxu0 0
        %1580 = vmatpush1.bf16.msra.mxu0 0
        %1581 = vmatprep.subr.bf16.mxu0 0
        %1582 = vmatpush1.bf16.msra.mxu0 0
        %1583 = vmatprep.subr.bf16.mxu0 0
        %1584 = vmatpush1.bf16.msra.mxu0 0
        %1585 = vmatprep.subr.bf16.mxu0 0
        %1586 = vmatpush1.bf16.msra.mxu0 0
        %1587 = vmatprep.mubr.bf16.mxu0 0
        %1588 = vmatmul.mubr.bf16.gmra.mrb[0].mxu0 %v1538
        %v1589 = vpop.f32.mrb[0].mxu0
        %v1590 = vadd.f32 %v1468, %v1589
        %v1591 = vpop.f32.mrb[0].mxu0
        %v1592 = vpop.f32.mrb[0].mxu0
        %v1593 = vadd.f32 %v1471, %v1592
        %v1594 = vpop.f32.mrb[0].mxu0
        %1595 = vmatprep.mubr.bf16.mxu0 0
        %1596 = vmatmul.mubr.bf16.gmra.mrb[0].mxu0 %v1541
        %v1597 = vpop.f32.mrb[0].mxu0
        %v1598 = vadd.f32 %v1476, %v1597
        %v1599 = vpop.f32.mrb[0].mxu0
        %v1600 = vpop.f32.mrb[0].mxu0
        %v1601 = vadd.f32 %v1479, %v1600
        %v1602 = vpop.f32.mrb[0].mxu0
        %1603 = vmatprep.mubr.bf16.mxu0 0
        %1604 = vmatmul.mubr.bf16.gmra.mrb[0].mxu0 %v1544
        %v1605 = vpop.f32.mrb[0].mxu0
        %v1606 = vadd.f32 %v1484, %v1605
        %v1607 = vpop.f32.mrb[0].mxu0
        %v1608 = vpop.f32.mrb[0].mxu0
        %v1609 = vadd.f32 %v1487, %v1608
        %v1610 = vpop.f32.mrb[0].mxu0
        %1611 = vmatprep.mubr.bf16.mxu0 0
        %1612 = vmatmul.mubr.bf16.gmra.mrb[0].mxu0 %v1547
        %v1613 = vpop.f32.mrb[0].mxu0
        %v1614 = vadd.f32 %v1492, %v1613
        %v1615 = vpop.f32.mrb[0].mxu0
        %v1616 = vpop.f32.mrb[0].mxu0
        %v1617 = vadd.f32 %v1495, %v1616
        %v1618 = vpop.f32.mrb[0].mxu0
        %1619 = vmatprep.mubr.bf16.mxu0 0
        %1620 = vmatmul.mubr.bf16.gmra.mrb[0].mxu0 %v1550
        %v1621 = vpop.f32.mrb[0].mxu0
        %v1622 = vadd.f32 %v1500, %v1621
        %v1623 = vpop.f32.mrb[0].mxu0
        %v1624 = vpop.f32.mrb[0].mxu0
        %v1625 = vadd.f32 %v1503, %v1624
        %v1626 = vpop.f32.mrb[0].mxu0
        %1627 = vmatprep.mubr.bf16.mxu0 0
        %1628 = vmatmul.mubr.bf16.gmra.mrb[0].mxu0 %v1553
        %v1629 = vpop.f32.mrb[0].mxu0
        %v1630 = vadd.f32 %v1508, %v1629
        %v1631 = vpop.f32.mrb[0].mxu0
        %v1632 = vpop.f32.mrb[0].mxu0
        %v1633 = vpop.f32.mrb[0].mxu0
        %1634 = vdwg.mxu0
        %v1635 = vld [vmem:[#allocation3 + $0x2] sm:$0xff]
        %v1636 = vld [vmem:[#allocation3 + $0xa] sm:$0xff]
        %v1637 = vld [vmem:[#allocation3 + $0x12] sm:$0xff]
        %v1638 = vld [vmem:[#allocation3 + $0x1a] sm:$0xff]
        %v1639 = vld [vmem:[#allocation3 + $0x22] sm:$0xff]
        %v1640 = vld [vmem:[#allocation3 + $0x2a] sm:$0xff]
        %v1641 = vld [vmem:[#allocation3 + $0x32] sm:$0xff]
        %v1642 = vld [vmem:[#allocation3 + $0x3a] sm:$0xff]
        %v1643 = vld [vmem:[#allocation3 + $0x42] sm:$0xff]
        %v1644 = vld [vmem:[#allocation3 + $0x4a] sm:$0xff]
        %v1645 = vld [vmem:[#allocation3 + $0x52] sm:$0x1]
        %v1646 = vpack.c.bf16 %v1636, %v1635
        %v1647 = vpack.c.bf16 %v1638, %v1637
        %v1648 = vpack.c.bf16 %v1640, %v1639
        %v1649 = vpack.c.bf16 %v1642, %v1641
        %v1650 = vpack.c.bf16 %v1644, %v1643
        %v1651 = vpack.c.bf16 %v1645, %v1645
        %s1652 = scalar_lea.vmem [#allocation10], 64
        %v1653 = vld [vmem:[%s1652] sm:$0xf]
        %v1654 = vld [vmem:[%s1652 + $0x4] sm:$0xf]
        %v1655 = vld [vmem:[%s1652 + $0x8] sm:$0xf]
        %v1656 = vld [vmem:[%s1652 + $0xc] sm:$0xf]
        %v1657 = vld [vmem:[%s1652 + $0x10] sm:$0xf]
        %v1658 = vld [vmem:[%s1652 + $0x14] sm:$0xf]
        %v1659 = vld [vmem:[%s1652 + $0x18] sm:$0xf]
        %v1660 = vld [vmem:[%s1652 + $0x1c] sm:$0xf]
        %v1669 = vunpack.c.l.b16 %v1653
        %v1670 = vunpack.c.l.b16 %v1654
        %v1671 = vunpack.c.l.b16 %v1655
        %v1672 = vunpack.c.l.b16 %v1656
        %v1673 = vunpack.c.l.b16 %v1657
        %v1674 = vunpack.c.l.b16 %v1658
        %v1675 = vunpack.c.l.b16 %v1659
        %v1676 = vunpack.c.l.b16 %v1660
        %v1677 = vpack.c.b16 %v1670, %v1669
        %v1678 = vpack.c.b16 %v1672, %v1671
        %v1679 = vpack.c.b16 %v1674, %v1673
        %v1680 = vpack.c.b16 %v1676, %v1675
        %v1686 = vsel %vm1328, %v1646, 0
        %v1689 = vsel %vm1328, %v1647, 0
        %v1692 = vsel %vm1328, %v1648, 0
        %v1695 = vsel %vm1328, %v1649, 0
        %v1698 = vsel %vm1328, %v1650, 0
        %v1701 = vsel %vm1328, %v1651, 0
        %1703 = vmatprep.subr.bf16.mxu0 0
        %1704 = vmatpush1.bf16.msra.mxu0 %v1677
        %1705 = vmatprep.subr.bf16.mxu0 0
        %1706 = vmatpush1.bf16.msra.mxu0 %v1678
        %1707 = vmatprep.subr.bf16.mxu0 0
        %1708 = vmatpush1.bf16.msra.mxu0 %v1679
        %1709 = vmatprep.subr.bf16.mxu0 0
        %1710 = vmatpush1.bf16.msra.mxu0 %v1680
        %1711 = vmatprep.subr.bf16.mxu0 0
        %1712 = vmatpush1.bf16.msra.mxu0 0
        %1713 = vmatprep.subr.bf16.mxu0 0
        %1714 = vmatpush1.bf16.msra.mxu0 0
        %1715 = vmatprep.subr.bf16.mxu0 0
        %1716 = vmatpush1.bf16.msra.mxu0 0
        %1717 = vmatprep.subr.bf16.mxu0 0
        %1718 = vmatpush1.bf16.msra.mxu0 0
        %1719 = vmatprep.subr.bf16.mxu0 0
        %1720 = vmatpush1.bf16.msra.mxu0 0
        %1721 = vmatprep.subr.bf16.mxu0 0
        %1722 = vmatpush1.bf16.msra.mxu0 0
        %1723 = vmatprep.subr.bf16.mxu0 0
        %1724 = vmatpush1.bf16.msra.mxu0 0
        %1725 = vmatprep.subr.bf16.mxu0 0
        %1726 = vmatpush1.bf16.msra.mxu0 0
        %1727 = vmatprep.subr.bf16.mxu0 0
        %1728 = vmatpush1.bf16.msra.mxu0 0
        %1729 = vmatprep.subr.bf16.mxu0 0
        %1730 = vmatpush1.bf16.msra.mxu0 0
        %1731 = vmatprep.subr.bf16.mxu0 0
        %1732 = vmatpush1.bf16.msra.mxu0 0
        %1733 = vmatprep.subr.bf16.mxu0 0
        %1734 = vmatpush1.bf16.msra.mxu0 0
        %1735 = vmatprep.mubr.bf16.mxu0 0
        %1736 = vmatmul.mubr.bf16.gmra.mrb[0].mxu0 %v1686
        %v1737 = vpop.f32.mrb[0].mxu0
        %v1738 = vadd.f32 0.0, %v1737
        %v1739 = vpop.f32.mrb[0].mxu0
        %v1740 = vpop.f32.mrb[0].mxu0
        %v1741 = vadd.f32 0.0, %v1740
        %v1742 = vpop.f32.mrb[0].mxu0
        %1743 = vmatprep.mubr.bf16.mxu0 0
        %1744 = vmatmul.mubr.bf16.gmra.mrb[0].mxu0 %v1689
        %v1745 = vpop.f32.mrb[0].mxu0
        %v1746 = vadd.f32 0.0, %v1745
        %v1747 = vpop.f32.mrb[0].mxu0
        %v1748 = vpop.f32.mrb[0].mxu0
        %v1749 = vadd.f32 0.0, %v1748
        %v1750 = vpop.f32.mrb[0].mxu0
        %1751 = vmatprep.mubr.bf16.mxu0 0
        %1752 = vmatmul.mubr.bf16.gmra.mrb[0].mxu0 %v1692
        %v1753 = vpop.f32.mrb[0].mxu0
        %v1754 = vadd.f32 0.0, %v1753
        %v1755 = vpop.f32.mrb[0].mxu0
        %v1756 = vpop.f32.mrb[0].mxu0
        %v1757 = vadd.f32 0.0, %v1756
        %v1758 = vpop.f32.mrb[0].mxu0
        %1759 = vmatprep.mubr.bf16.mxu0 0
        %1760 = vmatmul.mubr.bf16.gmra.mrb[0].mxu0 %v1695
        %v1761 = vpop.f32.mrb[0].mxu0
        %v1762 = vadd.f32 0.0, %v1761
        %v1763 = vpop.f32.mrb[0].mxu0
        %v1764 = vpop.f32.mrb[0].mxu0
        %v1765 = vadd.f32 0.0, %v1764
        %v1766 = vpop.f32.mrb[0].mxu0
        %1767 = vmatprep.mubr.bf16.mxu0 0
        %1768 = vmatmul.mubr.bf16.gmra.mrb[0].mxu0 %v1698
        %v1769 = vpop.f32.mrb[0].mxu0
        %v1770 = vadd.f32 0.0, %v1769
        %v1771 = vpop.f32.mrb[0].mxu0
        %v1772 = vpop.f32.mrb[0].mxu0
        %v1773 = vadd.f32 0.0, %v1772
        %v1774 = vpop.f32.mrb[0].mxu0
        %1775 = vmatprep.mubr.bf16.mxu0 0
        %1776 = vmatmul.mubr.bf16.gmra.mrb[0].mxu0 %v1701
        %v1777 = vpop.f32.mrb[0].mxu0
        %v1778 = vadd.f32 0.0, %v1777
        %v1779 = vpop.f32.mrb[0].mxu0
        %v1780 = vpop.f32.mrb[0].mxu0
        %v1781 = vpop.f32.mrb[0].mxu0
        %1782 = vdwg.mxu0
        %v1783 = vadd.f32 %v1590, %v1738
        %v1784 = vadd.f32 %v1593, %v1741
        %v1785 = vadd.f32 %v1598, %v1746
        %v1786 = vadd.f32 %v1601, %v1749
        %v1787 = vadd.f32 %v1606, %v1754
        %v1788 = vadd.f32 %v1609, %v1757
        %v1789 = vadd.f32 %v1614, %v1762
        %v1790 = vadd.f32 %v1617, %v1765
        %v1791 = vadd.f32 %v1622, %v1770
        %v1792 = vadd.f32 %v1625, %v1773
        %v1793 = vadd.f32 %v1630, %v1778
        %v1794 = vld [vmem:[%s4] sm:$0x1]
        %v1795 = vlaneseq
        %v1796 = vshrl.u32 %v1795, 7
        %v1797 = vsub.s32 0, %v1796
        %v1798 = vrot.slane %v1794, %v1797
        %v1799 = vadd.f32 %v1783, %v1798
        %v1800 = vadd.f32 %v1784, %v1798
        %v1801 = vadd.f32 %v1785, %v1798
        %v1802 = vadd.f32 %v1786, %v1798
        %v1803 = vadd.f32 %v1787, %v1798
        %v1804 = vadd.f32 %v1788, %v1798
        %v1805 = vadd.f32 %v1789, %v1798
        %v1806 = vadd.f32 %v1790, %v1798
        %v1807 = vadd.f32 %v1791, %v1798
        %v1808 = vadd.f32 %v1792, %v1798
        %v1809 = vadd.f32 %v1793, %v1798
        %v1810 = vmax.f32 %v1799, 0.0
        %v1811 = vmax.f32 %v1800, 0.0
        %v1812 = vmax.f32 %v1801, 0.0
        %v1813 = vmax.f32 %v1802, 0.0
        %v1814 = vmax.f32 %v1803, 0.0
        %v1815 = vmax.f32 %v1804, 0.0
        %v1816 = vmax.f32 %v1805, 0.0
        %v1817 = vmax.f32 %v1806, 0.0
        %v1818 = vmax.f32 %v1807, 0.0
        %v1819 = vmax.f32 %v1808, 0.0
        %v1820 = vmax.f32 %v1809, 0.0
        %v1821 = vld [vmem:[%s4 + $0x1] sm:$0x1]
        %v1822 = vlaneseq
        %v1823 = vshrl.u32 %v1822, 7
        %v1824 = vsub.s32 0, %v1823
        %v1825 = vrot.slane %v1821, %v1824
        %v1826 = vmul.f32 %v1810, %v1825
        %v1827 = vmul.f32 %v1811, %v1825
        %v1828 = vmul.f32 %v1812, %v1825
        %v1829 = vmul.f32 %v1813, %v1825
        %v1830 = vmul.f32 %v1814, %v1825
        %v1831 = vmul.f32 %v1815, %v1825
        %v1832 = vmul.f32 %v1816, %v1825
        %v1833 = vmul.f32 %v1817, %v1825
        %v1834 = vmul.f32 %v1818, %v1825
        %v1835 = vmul.f32 %v1819, %v1825
        %v1836 = vmul.f32 %v1820, %v1825
        %v1837 = vld [vmem:[%s4 + $0x2] sm:$0x1]
        %v1838 = vlaneseq
        %v1839 = vshrl.u32 %v1838, 7
        %v1840 = vsub.s32 0, %v1839
        %v1841 = vrot.slane %v1837, %v1840
        %v1842 = vadd.f32 %v1826, %v1841
        %v1843 = vadd.f32 %v1827, %v1841
        %v1844 = vadd.f32 %v1828, %v1841
        %v1845 = vadd.f32 %v1829, %v1841
        %v1846 = vadd.f32 %v1830, %v1841
        %v1847 = vadd.f32 %v1831, %v1841
        %v1848 = vadd.f32 %v1832, %v1841
        %v1849 = vadd.f32 %v1833, %v1841
        %v1850 = vadd.f32 %v1834, %v1841
        %v1851 = vadd.f32 %v1835, %v1841
        %v1852 = vadd.f32 %v1836, %v1841
        %1853 = vst.msk [vmem:[#allocation4] sm:$0xff] %vm1328, %v1842
        %1854 = vst.msk [vmem:[#allocation4 + $0x8] sm:$0xff] %vm1328, %v1843
        %1855 = vst.msk [vmem:[#allocation4 + $0x10] sm:$0xff] %vm1328, %v1844
        %1856 = vst.msk [vmem:[#allocation4 + $0x18] sm:$0xff] %vm1328, %v1845
        %1857 = vst.msk [vmem:[#allocation4 + $0x20] sm:$0xff] %vm1328, %v1846
        %1858 = vst.msk [vmem:[#allocation4 + $0x28] sm:$0xff] %vm1328, %v1847
        %1859 = vst.msk [vmem:[#allocation4 + $0x30] sm:$0xff] %vm1328, %v1848
        %1860 = vst.msk [vmem:[#allocation4 + $0x38] sm:$0xff] %vm1328, %v1849
        %1861 = vst.msk [vmem:[#allocation4 + $0x40] sm:$0xff] %vm1328, %v1850
        %1862 = vst.msk [vmem:[#allocation4 + $0x48] sm:$0xff] %vm1328, %v1851
        %1863 = vst.msk [vmem:[#allocation4 + $0x50] sm:$0x1] %vm1325, %v1852
        %v1864 = vld [vmem:[#allocation4] ss:$3 sm:$0xff]
        %s1865 = scalar_lea.vmem [#allocation4], 24
        %v1866 = vld [vmem:[%s1865] ss:$3 sm:$0xff]
        %s1867 = scalar_lea.vmem [#allocation4], 48
        %v1868 = vld [vmem:[%s1867] ss:$3 sm:$0xff]
        %s1869 = scalar_lea.vmem [#allocation4], 72
        %v1870 = vld [vmem:[%s1869] ss:$3 sm:$0x7]
        %s1871 = scalar_lea.vmem [#allocation4], 1
        %v1872 = vld [vmem:[%s1871] ss:$3 sm:$0xff]
        %s1873 = scalar_lea.vmem [#allocation4], 25
        %v1874 = vld [vmem:[%s1873] ss:$3 sm:$0xff]
        %s1875 = scalar_lea.vmem [#allocation4], 49
        %v1876 = vld [vmem:[%s1875] ss:$3 sm:$0xff]
        %s1877 = scalar_lea.vmem [#allocation4], 73
        %v1878 = vld [vmem:[%s1877] ss:$3 sm:$0x7]
        %s1879 = scalar_lea.vmem [#allocation4], 2
        %v1880 = vld [vmem:[%s1879] ss:$3 sm:$0xff]
        %s1881 = scalar_lea.vmem [#allocation4], 26
        %v1882 = vld [vmem:[%s1881] ss:$3 sm:$0xff]
        %s1883 = scalar_lea.vmem [#allocation4], 50
        %v1884 = vld [vmem:[%s1883] ss:$3 sm:$0xff]
        %s1885 = scalar_lea.vmem [#allocation4], 74
        %v1886 = vld [vmem:[%s1885] ss:$3 sm:$0x7]
        %v1887 = vmax.f32 %v1864, %v1872
        %v1888 = vmax.f32 %v1866, %v1874
        %v1889 = vmax.f32 %v1868, %v1876
        %v1890 = vmax.f32 %v1870, %v1878
        %v1891 = vmax.f32 %v1887, %v1880
        %v1892 = vmax.f32 %v1888, %v1882
        %v1893 = vmax.f32 %v1889, %v1884
        %v1894 = vmax.f32 %v1890, %v1886
        %1895 = vst.msk [vmem:[#allocation5] sm:$0x1] %vm1325, 0.0
        %1896 = vst.msk [vmem:[#allocation5 + $0x1c] sm:$0x1] %vm1325, 0.0
        %1897 = vst.msk [vmem:[#allocation5 + $0x1] sm:$0xff] %vm1328, %v1891
        %1898 = vst.msk [vmem:[#allocation5 + $0x9] sm:$0xff] %vm1328, %v1892
        %1899 = vst.msk [vmem:[#allocation5 + $0x11] sm:$0xff] %vm1328, %v1893
        %vm1900 = vcmask 518144
        %1901 = vst.msk [vmem:[#allocation5 + $0x19] sm:$0x7] %vm1900, %v1894
        %v1902 = vld [vmem:[#allocation5] sm:$0xff]
        %v1903 = vld [vmem:[#allocation5 + $0x8] sm:$0xff]
        %v1904 = vld [vmem:[#allocation5 + $0x10] sm:$0xff]
        %v1905 = vld [vmem:[#allocation5 + $0x18] sm:$0x7]
        %v1906 = vpack.c.bf16 %v1903, %v1902
        %v1907 = vpack.c.bf16 %v1905, %v1904
        %v1908 = vld [vmem:[#allocation13] sm:$0xf]
        %v1909 = vld [vmem:[#allocation13 + $0x4] sm:$0xf]
        %v1910 = vld [vmem:[#allocation13 + $0x8] sm:$0xf]
        %v1911 = vld [vmem:[#allocation13 + $0xc] sm:$0xf]
        %v1912 = vld [vmem:[#allocation13 + $0x10] sm:$0xf]
        %v1913 = vld [vmem:[#allocation13 + $0x14] sm:$0xf]
        %v1914 = vld [vmem:[#allocation13 + $0x18] sm:$0xf]
        %v1915 = vld [vmem:[#allocation13 + $0x1c] sm:$0xf]
        %v1916 = vld [vmem:[#allocation5 + $0x1] sm:$0xff]
        %v1917 = vld [vmem:[#allocation5 + $0x9] sm:$0xff]
        %v1918 = vld [vmem:[#allocation5 + $0x11] sm:$0xff]
        %v1919 = vld [vmem:[#allocation5 + $0x19] sm:$0x7]
        %v1920 = vpack.c.bf16 %v1917, %v1916
        %v1921 = vpack.c.bf16 %v1919, %v1918
        %s1922 = scalar_lea.vmem [#allocation13], 32
        %v1923 = vld [vmem:[%s1922] sm:$0xf]
        %v1924 = vld [vmem:[%s1922 + $0x4] sm:$0xf]
        %v1925 = vld [vmem:[%s1922 + $0x8] sm:$0xf]
        %v1926 = vld [vmem:[%s1922 + $0xc] sm:$0xf]
        %v1927 = vld [vmem:[%s1922 + $0x10] sm:$0xf]
        %v1928 = vld [vmem:[%s1922 + $0x14] sm:$0xf]
        %v1929 = vld [vmem:[%s1922 + $0x18] sm:$0xf]
        %v1930 = vld [vmem:[%s1922 + $0x1c] sm:$0xf]
        %v1939 = vunpack.c.l.b16 %v1923
        %v1940 = vunpack.c.l.b16 %v1924
        %v1941 = vunpack.c.l.b16 %v1925
        %v1942 = vunpack.c.l.b16 %v1926
        %v1943 = vunpack.c.l.b16 %v1927
        %v1944 = vunpack.c.l.b16 %v1928
        %v1945 = vunpack.c.l.b16 %v1929
        %v1946 = vunpack.c.l.b16 %v1930
        %v1947 = vpack.c.b16 %v1940, %v1939
        %v1948 = vpack.c.b16 %v1942, %v1941
        %v1949 = vpack.c.b16 %v1944, %v1943
        %v1950 = vpack.c.b16 %v1946, %v1945
        %v1956 = vsel %vm1328, %v1920, 0
        %v1959 = vsel %vm1328, %v1921, 0
        %1961 = vmatprep.subr.bf16.mxu0 0
        %1962 = vmatpush1.bf16.msra.mxu0 %v1947
        %1963 = vmatprep.subr.bf16.mxu0 0
        %1964 = vmatpush1.bf16.msra.mxu0 %v1948
        %1965 = vmatprep.subr.bf16.mxu0 0
        %1966 = vmatpush1.bf16.msra.mxu0 %v1949
        %1967 = vmatprep.subr.bf16.mxu0 0
        %1968 = vmatpush1.bf16.msra.mxu0 %v1950
        %1969 = vmatprep.subr.bf16.mxu0 0
        %1970 = vmatpush1.bf16.msra.mxu0 0
        %1971 = vmatprep.subr.bf16.mxu0 0
        %1972 = vmatpush1.bf16.msra.mxu0 0
        %1973 = vmatprep.subr.bf16.mxu0 0
        %1974 = vmatpush1.bf16.msra.mxu0 0
        %1975 = vmatprep.subr.bf16.mxu0 0
        %1976 = vmatpush1.bf16.msra.mxu0 0
        %1977 = vmatprep.subr.bf16.mxu0 0
        %1978 = vmatpush1.bf16.msra.mxu0 0
        %1979 = vmatprep.subr.bf16.mxu0 0
        %1980 = vmatpush1.bf16.msra.mxu0 0
        %1981 = vmatprep.subr.bf16.mxu0 0
        %1982 = vmatpush1.bf16.msra.mxu0 0
        %1983 = vmatprep.subr.bf16.mxu0 0
        %1984 = vmatpush1.bf16.msra.mxu0 0
        %1985 = vmatprep.subr.bf16.mxu0 0
        %1986 = vmatpush1.bf16.msra.mxu0 0
        %1987 = vmatprep.subr.bf16.mxu0 0
        %1988 = vmatpush1.bf16.msra.mxu0 0
        %1989 = vmatprep.subr.bf16.mxu0 0
        %1990 = vmatpush1.bf16.msra.mxu0 0
        %1991 = vmatprep.subr.bf16.mxu0 0
        %1992 = vmatpush1.bf16.msra.mxu0 0
        %1993 = vmatprep.mubr.bf16.mxu0 0
        %1994 = vmatmul.mubr.bf16.gmra.mrb[0].mxu0 %v1956
        %v1995 = vpop.f32.mrb[0].mxu0
        %v1996 = vadd.f32 0.0, %v1995
        %v1997 = vpop.f32.mrb[0].mxu0
        %v1998 = vpop.f32.mrb[0].mxu0
        %v1999 = vadd.f32 0.0, %v1998
        %v2000 = vpop.f32.mrb[0].mxu0
        %2001 = vmatprep.mubr.bf16.mxu0 0
        %2002 = vmatmul.mubr.bf16.gmra.mrb[0].mxu0 %v1959
        %v2003 = vpop.f32.mrb[0].mxu0
        %v2004 = vadd.f32 0.0, %v2003
        %v2005 = vpop.f32.mrb[0].mxu0
        %v2006 = vpop.f32.mrb[0].mxu0
        %v2007 = vadd.f32 0.0, %v2006
        %v2008 = vpop.f32.mrb[0].mxu0
        %2009 = vdwg.mxu0
        %v2018 = vunpack.c.l.b16 %v1908
        %v2019 = vunpack.c.l.b16 %v1909
        %v2020 = vunpack.c.l.b16 %v1910
        %v2021 = vunpack.c.l.b16 %v1911
        %v2022 = vunpack.c.l.b16 %v1912
        %v2023 = vunpack.c.l.b16 %v1913
        %v2024 = vunpack.c.l.b16 %v1914
        %v2025 = vunpack.c.l.b16 %v1915
        %v2026 = vpack.c.b16 %v2019, %v2018
        %v2027 = vpack.c.b16 %v2021, %v2020
        %v2028 = vpack.c.b16 %v2023, %v2022
        %v2029 = vpack.c.b16 %v2025, %v2024
        %v2035 = vsel %vm1328, %v1906, 0
        %v2038 = vsel %vm1328, %v1907, 0
        %2040 = vmatprep.subr.bf16.mxu0 0
        %2041 = vmatpush1.bf16.msra.mxu0 %v2026
        %2042 = vmatprep.subr.bf16.mxu0 0
        %2043 = vmatpush1.bf16.msra.mxu0 %v2027
        %2044 = vmatprep.subr.bf16.mxu0 0
        %2045 = vmatpush1.bf16.msra.mxu0 %v2028
        %2046 = vmatprep.subr.bf16.mxu0 0
        %2047 = vmatpush1.bf16.msra.mxu0 %v2029
        %2048 = vmatprep.subr.bf16.mxu0 0
        %2049 = vmatpush1.bf16.msra.mxu0 0
        %2050 = vmatprep.subr.bf16.mxu0 0
        %2051 = vmatpush1.bf16.msra.mxu0 0
        %2052 = vmatprep.subr.bf16.mxu0 0
        %2053 = vmatpush1.bf16.msra.mxu0 0
        %2054 = vmatprep.subr.bf16.mxu0 0
        %2055 = vmatpush1.bf16.msra.mxu0 0
        %2056 = vmatprep.subr.bf16.mxu0 0
        %2057 = vmatpush1.bf16.msra.mxu0 0
        %2058 = vmatprep.subr.bf16.mxu0 0
        %2059 = vmatpush1.bf16.msra.mxu0 0
        %2060 = vmatprep.subr.bf16.mxu0 0
        %2061 = vmatpush1.bf16.msra.mxu0 0
        %2062 = vmatprep.subr.bf16.mxu0 0
        %2063 = vmatpush1.bf16.msra.mxu0 0
        %2064 = vmatprep.subr.bf16.mxu0 0
        %2065 = vmatpush1.bf16.msra.mxu0 0
        %2066 = vmatprep.subr.bf16.mxu0 0
        %2067 = vmatpush1.bf16.msra.mxu0 0
        %2068 = vmatprep.subr.bf16.mxu0 0
        %2069 = vmatpush1.bf16.msra.mxu0 0
        %2070 = vmatprep.subr.bf16.mxu0 0
        %2071 = vmatpush1.bf16.msra.mxu0 0
        %2072 = vmatprep.mubr.bf16.mxu0 0
        %2073 = vmatmul.mubr.bf16.gmra.mrb[0].mxu0 %v2035
        %v2074 = vpop.f32.mrb[0].mxu0
        %v2075 = vadd.f32 %v1996, %v2074
        %v2076 = vpop.f32.mrb[0].mxu0
        %v2077 = vpop.f32.mrb[0].mxu0
        %v2078 = vadd.f32 %v1999, %v2077
        %v2079 = vpop.f32.mrb[0].mxu0
        %2080 = vmatprep.mubr.bf16.mxu0 0
        %2081 = vmatmul.mubr.bf16.gmra.mrb[0].mxu0 %v2038
        %v2082 = vpop.f32.mrb[0].mxu0
        %v2083 = vadd.f32 %v2004, %v2082
        %v2084 = vpop.f32.mrb[0].mxu0
        %v2085 = vpop.f32.mrb[0].mxu0
        %v2086 = vadd.f32 %v2007, %v2085
        %v2087 = vpop.f32.mrb[0].mxu0
        %2088 = vdwg.mxu0
        %v2089 = vld [vmem:[#allocation5 + $0x2] sm:$0xff]
        %v2090 = vld [vmem:[#allocation5 + $0xa] sm:$0xff]
        %v2091 = vld [vmem:[#allocation5 + $0x12] sm:$0xff]
        %v2092 = vld [vmem:[#allocation5 + $0x1a] sm:$0x7]
        %v2093 = vpack.c.bf16 %v2090, %v2089
        %v2094 = vpack.c.bf16 %v2092, %v2091
        %s2095 = scalar_lea.vmem [#allocation13], 64
        %v2096 = vld [vmem:[%s2095] sm:$0xf]
        %v2097 = vld [vmem:[%s2095 + $0x4] sm:$0xf]
        %v2098 = vld [vmem:[%s2095 + $0x8] sm:$0xf]
        %v2099 = vld [vmem:[%s2095 + $0xc] sm:$0xf]
        %v2100 = vld [vmem:[%s2095 + $0x10] sm:$0xf]
        %v2101 = vld [vmem:[%s2095 + $0x14] sm:$0xf]
        %v2102 = vld [vmem:[%s2095 + $0x18] sm:$0xf]
        %v2103 = vld [vmem:[%s2095 + $0x1c] sm:$0xf]
        %v2112 = vunpack.c.l.b16 %v2096
        %v2113 = vunpack.c.l.b16 %v2097
        %v2114 = vunpack.c.l.b16 %v2098
        %v2115 = vunpack.c.l.b16 %v2099
        %v2116 = vunpack.c.l.b16 %v2100
        %v2117 = vunpack.c.l.b16 %v2101
        %v2118 = vunpack.c.l.b16 %v2102
        %v2119 = vunpack.c.l.b16 %v2103
        %v2120 = vpack.c.b16 %v2113, %v2112
        %v2121 = vpack.c.b16 %v2115, %v2114
        %v2122 = vpack.c.b16 %v2117, %v2116
        %v2123 = vpack.c.b16 %v2119, %v2118
        %v2129 = vsel %vm1328, %v2093, 0
        %v2132 = vsel %vm1328, %v2094, 0
        %2134 = vmatprep.subr.bf16.mxu0 0
        %2135 = vmatpush1.bf16.msra.mxu0 %v2120
        %2136 = vmatprep.subr.bf16.mxu0 0
        %2137 = vmatpush1.bf16.msra.mxu0 %v2121
        %2138 = vmatprep.subr.bf16.mxu0 0
        %2139 = vmatpush1.bf16.msra.mxu0 %v2122
        %2140 = vmatprep.subr.bf16.mxu0 0
        %2141 = vmatpush1.bf16.msra.mxu0 %v2123
        %2142 = vmatprep.subr.bf16.mxu0 0
        %2143 = vmatpush1.bf16.msra.mxu0 0
        %2144 = vmatprep.subr.bf16.mxu0 0
        %2145 = vmatpush1.bf16.msra.mxu0 0
        %2146 = vmatprep.subr.bf16.mxu0 0
        %2147 = vmatpush1.bf16.msra.mxu0 0
        %2148 = vmatprep.subr.bf16.mxu0 0
        %2149 = vmatpush1.bf16.msra.mxu0 0
        %2150 = vmatprep.subr.bf16.mxu0 0
        %2151 = vmatpush1.bf16.msra.mxu0 0
        %2152 = vmatprep.subr.bf16.mxu0 0
        %2153 = vmatpush1.bf16.msra.mxu0 0
        %2154 = vmatprep.subr.bf16.mxu0 0
        %2155 = vmatpush1.bf16.msra.mxu0 0
        %2156 = vmatprep.subr.bf16.mxu0 0
        %2157 = vmatpush1.bf16.msra.mxu0 0
        %2158 = vmatprep.subr.bf16.mxu0 0
        %2159 = vmatpush1.bf16.msra.mxu0 0
        %2160 = vmatprep.subr.bf16.mxu0 0
        %2161 = vmatpush1.bf16.msra.mxu0 0
        %2162 = vmatprep.subr.bf16.mxu0 0
        %2163 = vmatpush1.bf16.msra.mxu0 0
        %2164 = vmatprep.subr.bf16.mxu0 0
        %2165 = vmatpush1.bf16.msra.mxu0 0
        %2166 = vmatprep.mubr.bf16.mxu0 0
        %2167 = vmatmul.mubr.bf16.gmra.mrb[0].mxu0 %v2129
        %v2168 = vpop.f32.mrb[0].mxu0
        %v2169 = vadd.f32 0.0, %v2168
        %v2170 = vpop.f32.mrb[0].mxu0
        %v2171 = vpop.f32.mrb[0].mxu0
        %v2172 = vadd.f32 0.0, %v2171
        %v2173 = vpop.f32.mrb[0].mxu0
        %2174 = vmatprep.mubr.bf16.mxu0 0
        %2175 = vmatmul.mubr.bf16.gmra.mrb[0].mxu0 %v2132
        %v2176 = vpop.f32.mrb[0].mxu0
        %v2177 = vadd.f32 0.0, %v2176
        %v2178 = vpop.f32.mrb[0].mxu0
        %v2179 = vpop.f32.mrb[0].mxu0
        %v2180 = vadd.f32 0.0, %v2179
        %v2181 = vpop.f32.mrb[0].mxu0
        %2182 = vdwg.mxu0
        %v2183 = vadd.f32 %v2075, %v2169
        %v2184 = vadd.f32 %v2078, %v2172
        %v2185 = vadd.f32 %v2083, %v2177
        %v2186 = vadd.f32 %v2086, %v2180
        %v2187 = vld [vmem:[%s6] sm:$0x1]
        %v2188 = vlaneseq
        %v2189 = vshrl.u32 %v2188, 7
        %v2190 = vsub.s32 0, %v2189
        %v2191 = vrot.slane %v2187, %v2190
        %v2192 = vadd.f32 %v2183, %v2191
        %v2193 = vadd.f32 %v2184, %v2191
        %v2194 = vadd.f32 %v2185, %v2191
        %v2195 = vadd.f32 %v2186, %v2191
        %v2196 = vmax.f32 %v2192, 0.0
        %v2197 = vmax.f32 %v2193, 0.0
        %v2198 = vmax.f32 %v2194, 0.0
        %v2199 = vmax.f32 %v2195, 0.0
        %v2200 = vld [vmem:[%s6 + $0x1] sm:$0x1]
        %v2201 = vlaneseq
        %v2202 = vshrl.u32 %v2201, 7
        %v2203 = vsub.s32 0, %v2202
        %v2204 = vrot.slane %v2200, %v2203
        %v2205 = vmul.f32 %v2196, %v2204
        %v2206 = vmul.f32 %v2197, %v2204
        %v2207 = vmul.f32 %v2198, %v2204
        %v2208 = vmul.f32 %v2199, %v2204
        %v2209 = vld [vmem:[%s6 + $0x2] sm:$0x1]
        %v2210 = vlaneseq
        %v2211 = vshrl.u32 %v2210, 7
        %v2212 = vsub.s32 0, %v2211
        %v2213 = vrot.slane %v2209, %v2212
        %v2214 = vadd.f32 %v2205, %v2213
        %v2215 = vadd.f32 %v2206, %v2213
        %v2216 = vadd.f32 %v2207, %v2213
        %v2217 = vadd.f32 %v2208, %v2213
        %2218 = vst [vmem:[#allocation6] sm:$0x1] 0.0
        %2219 = vst [vmem:[#allocation6 + $0x1c] sm:$0x1] 0.0
        %2220 = vst [vmem:[#allocation6 + $0x1] sm:$0xff] %v2214
        %2221 = vst [vmem:[#allocation6 + $0x9] sm:$0xff] %v2215
        %2222 = vst [vmem:[#allocation6 + $0x11] sm:$0xff] %v2216
        %2223 = vst [vmem:[#allocation6 + $0x19] sm:$0x7] %v2217
        %v2224 = vld [vmem:[#allocation6] sm:$0xff]
        %v2225 = vld [vmem:[#allocation6 + $0x8] sm:$0xff]
        %v2226 = vld [vmem:[#allocation6 + $0x10] sm:$0xff]
        %v2227 = vld [vmem:[#allocation6 + $0x18] sm:$0x7]
        %v2228 = vpack.c.bf16 %v2225, %v2224
        %v2229 = vpack.c.bf16 %v2227, %v2226
        %v2230 = vld [vmem:[%s7] sm:$0xf]
        %v2231 = vld [vmem:[%s7 + $0x4] sm:$0xf]
        %v2232 = vld [vmem:[%s7 + $0x8] sm:$0xf]
        %v2233 = vld [vmem:[%s7 + $0xc] sm:$0xf]
        %v2234 = vld [vmem:[%s7 + $0x10] sm:$0xf]
        %v2235 = vld [vmem:[%s7 + $0x14] sm:$0xf]
        %v2236 = vld [vmem:[%s7 + $0x18] sm:$0xf]
        %v2237 = vld [vmem:[%s7 + $0x1c] sm:$0xf]
        %v2238 = vld [vmem:[%s7 + $0x20] sm:$0xf]
        %v2239 = vld [vmem:[%s7 + $0x24] sm:$0xf]
        %v2240 = vld [vmem:[%s7 + $0x28] sm:$0xf]
        %v2241 = vld [vmem:[%s7 + $0x2c] sm:$0xf]
        %v2242 = vld [vmem:[%s7 + $0x30] sm:$0xf]
        %v2243 = vld [vmem:[%s7 + $0x34] sm:$0xf]
        %v2244 = vld [vmem:[%s7 + $0x38] sm:$0xf]
        %v2245 = vld [vmem:[%s7 + $0x3c] sm:$0xf]
        %v2246 = vld [vmem:[#allocation6 + $0x1] sm:$0xff]
        %v2247 = vld [vmem:[#allocation6 + $0x9] sm:$0xff]
        %v2248 = vld [vmem:[#allocation6 + $0x11] sm:$0xff]
        %v2249 = vld [vmem:[#allocation6 + $0x19] sm:$0x7]
        %v2250 = vpack.c.bf16 %v2247, %v2246
        %v2251 = vpack.c.bf16 %v2249, %v2248
        %s2252 = scalar_lea.vmem %s7, 64
        %v2253 = vld [vmem:[%s2252] sm:$0xf]
        %v2254 = vld [vmem:[%s2252 + $0x4] sm:$0xf]
        %v2255 = vld [vmem:[%s2252 + $0x8] sm:$0xf]
        %v2256 = vld [vmem:[%s2252 + $0xc] sm:$0xf]
        %v2257 = vld [vmem:[%s2252 + $0x10] sm:$0xf]
        %v2258 = vld [vmem:[%s2252 + $0x14] sm:$0xf]
        %v2259 = vld [vmem:[%s2252 + $0x18] sm:$0xf]
        %v2260 = vld [vmem:[%s2252 + $0x1c] sm:$0xf]
        %v2261 = vld [vmem:[%s2252 + $0x20] sm:$0xf]
        %v2262 = vld [vmem:[%s2252 + $0x24] sm:$0xf]
        %v2263 = vld [vmem:[%s2252 + $0x28] sm:$0xf]
        %v2264 = vld [vmem:[%s2252 + $0x2c] sm:$0xf]
        %v2265 = vld [vmem:[%s2252 + $0x30] sm:$0xf]
        %v2266 = vld [vmem:[%s2252 + $0x34] sm:$0xf]
        %v2267 = vld [vmem:[%s2252 + $0x38] sm:$0xf]
        %v2268 = vld [vmem:[%s2252 + $0x3c] sm:$0xf]
        %v2285 = vunpack.c.l.b16 %v2253
        %v2286 = vunpack.c.l.b16 %v2254
        %v2287 = vunpack.c.l.b16 %v2255
        %v2288 = vunpack.c.l.b16 %v2256
        %v2289 = vunpack.c.l.b16 %v2257
        %v2290 = vunpack.c.l.b16 %v2258
        %v2291 = vunpack.c.l.b16 %v2259
        %v2292 = vunpack.c.l.b16 %v2260
        %v2293 = vunpack.c.l.b16 %v2261
        %v2294 = vunpack.c.l.b16 %v2262
        %v2295 = vunpack.c.l.b16 %v2263
        %v2296 = vunpack.c.l.b16 %v2264
        %v2297 = vunpack.c.l.b16 %v2265
        %v2298 = vunpack.c.l.b16 %v2266
        %v2299 = vunpack.c.l.b16 %v2267
        %v2300 = vunpack.c.l.b16 %v2268
        %v2301 = vpack.c.b16 %v2286, %v2285
        %v2302 = vpack.c.b16 %v2288, %v2287
        %v2303 = vpack.c.b16 %v2290, %v2289
        %v2304 = vpack.c.b16 %v2292, %v2291
        %v2305 = vpack.c.b16 %v2294, %v2293
        %v2306 = vpack.c.b16 %v2296, %v2295
        %v2307 = vpack.c.b16 %v2298, %v2297
        %v2308 = vpack.c.b16 %v2300, %v2299
        %2317 = vmatprep.subr.bf16.mxu0 0
        %2318 = vmatpush1.bf16.msra.mxu0 %v2301
        %2319 = vmatprep.subr.bf16.mxu0 0
        %2320 = vmatpush1.bf16.msra.mxu0 %v2302
        %2321 = vmatprep.subr.bf16.mxu0 0
        %2322 = vmatpush1.bf16.msra.mxu0 %v2303
        %2323 = vmatprep.subr.bf16.mxu0 0
        %2324 = vmatpush1.bf16.msra.mxu0 %v2304
        %2325 = vmatprep.subr.bf16.mxu0 0
        %2326 = vmatpush1.bf16.msra.mxu0 %v2305
        %2327 = vmatprep.subr.bf16.mxu0 0
        %2328 = vmatpush1.bf16.msra.mxu0 %v2306
        %2329 = vmatprep.subr.bf16.mxu0 0
        %2330 = vmatpush1.bf16.msra.mxu0 %v2307
        %2331 = vmatprep.subr.bf16.mxu0 0
        %2332 = vmatpush1.bf16.msra.mxu0 %v2308
        %2333 = vmatprep.subr.bf16.mxu0 0
        %2334 = vmatpush1.bf16.msra.mxu0 0
        %2335 = vmatprep.subr.bf16.mxu0 0
        %2336 = vmatpush1.bf16.msra.mxu0 0
        %2337 = vmatprep.subr.bf16.mxu0 0
        %2338 = vmatpush1.bf16.msra.mxu0 0
        %2339 = vmatprep.subr.bf16.mxu0 0
        %2340 = vmatpush1.bf16.msra.mxu0 0
        %2341 = vmatprep.subr.bf16.mxu0 0
        %2342 = vmatpush1.bf16.msra.mxu0 0
        %2343 = vmatprep.subr.bf16.mxu0 0
        %2344 = vmatpush1.bf16.msra.mxu0 0
        %2345 = vmatprep.subr.bf16.mxu0 0
        %2346 = vmatpush1.bf16.msra.mxu0 0
        %2347 = vmatprep.subr.bf16.mxu0 0
        %2348 = vmatpush1.bf16.msra.mxu0 0
        %2349 = vmatprep.mubr.bf16.mxu0 0
        %2350 = vmatmul.mubr.bf16.gmra.mrb[0].mxu0 %v2250
        %v2351 = vpop.f32.mrb[0].mxu0
        %v2352 = vadd.f32 0.0, %v2351
        %v2353 = vpop.f32.mrb[0].mxu0
        %v2354 = vpop.f32.mrb[0].mxu0
        %v2355 = vadd.f32 0.0, %v2354
        %v2356 = vpop.f32.mrb[0].mxu0
        %2357 = vmatprep.mubr.bf16.mxu0 0
        %2358 = vmatmul.mubr.bf16.gmra.mrb[0].mxu0 %v2251
        %v2359 = vpop.f32.mrb[0].mxu0
        %v2360 = vadd.f32 0.0, %v2359
        %v2361 = vpop.f32.mrb[0].mxu0
        %v2362 = vpop.f32.mrb[0].mxu0
        %v2363 = vadd.f32 0.0, %v2362
        %v2364 = vpop.f32.mrb[0].mxu0
        %2365 = vdwg.mxu0
        %v2382 = vunpack.c.l.b16 %v2230
        %v2383 = vunpack.c.l.b16 %v2231
        %v2384 = vunpack.c.l.b16 %v2232
        %v2385 = vunpack.c.l.b16 %v2233
        %v2386 = vunpack.c.l.b16 %v2234
        %v2387 = vunpack.c.l.b16 %v2235
        %v2388 = vunpack.c.l.b16 %v2236
        %v2389 = vunpack.c.l.b16 %v2237
        %v2390 = vunpack.c.l.b16 %v2238
        %v2391 = vunpack.c.l.b16 %v2239
        %v2392 = vunpack.c.l.b16 %v2240
        %v2393 = vunpack.c.l.b16 %v2241
        %v2394 = vunpack.c.l.b16 %v2242
        %v2395 = vunpack.c.l.b16 %v2243
        %v2396 = vunpack.c.l.b16 %v2244
        %v2397 = vunpack.c.l.b16 %v2245
        %v2398 = vpack.c.b16 %v2383, %v2382
        %v2399 = vpack.c.b16 %v2385, %v2384
        %v2400 = vpack.c.b16 %v2387, %v2386
        %v2401 = vpack.c.b16 %v2389, %v2388
        %v2402 = vpack.c.b16 %v2391, %v2390
        %v2403 = vpack.c.b16 %v2393, %v2392
        %v2404 = vpack.c.b16 %v2395, %v2394
        %v2405 = vpack.c.b16 %v2397, %v2396
        %2414 = vmatprep.subr.bf16.mxu0 0
        %2415 = vmatpush1.bf16.msra.mxu0 %v2398
        %2416 = vmatprep.subr.bf16.mxu0 0
        %2417 = vmatpush1.bf16.msra.mxu0 %v2399
        %2418 = vmatprep.subr.bf16.mxu0 0
        %2419 = vmatpush1.bf16.msra.mxu0 %v2400
        %2420 = vmatprep.subr.bf16.mxu0 0
        %2421 = vmatpush1.bf16.msra.mxu0 %v2401
        %2422 = vmatprep.subr.bf16.mxu0 0
        %2423 = vmatpush1.bf16.msra.mxu0 %v2402
        %2424 = vmatprep.subr.bf16.mxu0 0
        %2425 = vmatpush1.bf16.msra.mxu0 %v2403
        %2426 = vmatprep.subr.bf16.mxu0 0
        %2427 = vmatpush1.bf16.msra.mxu0 %v2404
        %2428 = vmatprep.subr.bf16.mxu0 0
        %2429 = vmatpush1.bf16.msra.mxu0 %v2405
        %2430 = vmatprep.subr.bf16.mxu0 0
        %2431 = vmatpush1.bf16.msra.mxu0 0
        %2432 = vmatprep.subr.bf16.mxu0 0
        %2433 = vmatpush1.bf16.msra.mxu0 0
        %2434 = vmatprep.subr.bf16.mxu0 0
        %2435 = vmatpush1.bf16.msra.mxu0 0
        %2436 = vmatprep.subr.bf16.mxu0 0
        %2437 = vmatpush1.bf16.msra.mxu0 0
        %2438 = vmatprep.subr.bf16.mxu0 0
        %2439 = vmatpush1.bf16.msra.mxu0 0
        %2440 = vmatprep.subr.bf16.mxu0 0
        %2441 = vmatpush1.bf16.msra.mxu0 0
        %2442 = vmatprep.subr.bf16.mxu0 0
        %2443 = vmatpush1.bf16.msra.mxu0 0
        %2444 = vmatprep.subr.bf16.mxu0 0
        %2445 = vmatpush1.bf16.msra.mxu0 0
        %2446 = vmatprep.mubr.bf16.mxu0 0
        %2447 = vmatmul.mubr.bf16.gmra.mrb[0].mxu0 %v2228
        %v2448 = vpop.f32.mrb[0].mxu0
        %v2449 = vadd.f32 %v2352, %v2448
        %v2450 = vpop.f32.mrb[0].mxu0
        %v2451 = vpop.f32.mrb[0].mxu0
        %v2452 = vadd.f32 %v2355, %v2451
        %v2453 = vpop.f32.mrb[0].mxu0
        %2454 = vmatprep.mubr.bf16.mxu0 0
        %2455 = vmatmul.mubr.bf16.gmra.mrb[0].mxu0 %v2229
        %v2456 = vpop.f32.mrb[0].mxu0
        %v2457 = vadd.f32 %v2360, %v2456
        %v2458 = vpop.f32.mrb[0].mxu0
        %v2459 = vpop.f32.mrb[0].mxu0
        %v2460 = vadd.f32 %v2363, %v2459
        %v2461 = vpop.f32.mrb[0].mxu0
        %2462 = vdwg.mxu0
        %v2463 = vld [vmem:[#allocation6 + $0x2] sm:$0xff]
        %v2464 = vld [vmem:[#allocation6 + $0xa] sm:$0xff]
        %v2465 = vld [vmem:[#allocation6 + $0x12] sm:$0xff]
        %v2466 = vld [vmem:[#allocation6 + $0x1a] sm:$0x7]
        %v2467 = vpack.c.bf16 %v2464, %v2463
        %v2468 = vpack.c.bf16 %v2466, %v2465
        %s2469 = scalar_lea.vmem %s7, 128
        %v2470 = vld [vmem:[%s2469] sm:$0xf]
        %v2471 = vld [vmem:[%s2469 + $0x4] sm:$0xf]
        %v2472 = vld [vmem:[%s2469 + $0x8] sm:$0xf]
        %v2473 = vld [vmem:[%s2469 + $0xc] sm:$0xf]
        %v2474 = vld [vmem:[%s2469 + $0x10] sm:$0xf]
        %v2475 = vld [vmem:[%s2469 + $0x14] sm:$0xf]
        %v2476 = vld [vmem:[%s2469 + $0x18] sm:$0xf]
        %v2477 = vld [vmem:[%s2469 + $0x1c] sm:$0xf]
        %v2478 = vld [vmem:[%s2469 + $0x20] sm:$0xf]
        %v2479 = vld [vmem:[%s2469 + $0x24] sm:$0xf]
        %v2480 = vld [vmem:[%s2469 + $0x28] sm:$0xf]
        %v2481 = vld [vmem:[%s2469 + $0x2c] sm:$0xf]
        %v2482 = vld [vmem:[%s2469 + $0x30] sm:$0xf]
        %v2483 = vld [vmem:[%s2469 + $0x34] sm:$0xf]
        %v2484 = vld [vmem:[%s2469 + $0x38] sm:$0xf]
        %v2485 = vld [vmem:[%s2469 + $0x3c] sm:$0xf]
        %v2502 = vunpack.c.l.b16 %v2470
        %v2503 = vunpack.c.l.b16 %v2471
        %v2504 = vunpack.c.l.b16 %v2472
        %v2505 = vunpack.c.l.b16 %v2473
        %v2506 = vunpack.c.l.b16 %v2474
        %v2507 = vunpack.c.l.b16 %v2475
        %v2508 = vunpack.c.l.b16 %v2476
        %v2509 = vunpack.c.l.b16 %v2477
        %v2510 = vunpack.c.l.b16 %v2478
        %v2511 = vunpack.c.l.b16 %v2479
        %v2512 = vunpack.c.l.b16 %v2480
        %v2513 = vunpack.c.l.b16 %v2481
        %v2514 = vunpack.c.l.b16 %v2482
        %v2515 = vunpack.c.l.b16 %v2483
        %v2516 = vunpack.c.l.b16 %v2484
        %v2517 = vunpack.c.l.b16 %v2485
        %v2518 = vpack.c.b16 %v2503, %v2502
        %v2519 = vpack.c.b16 %v2505, %v2504
        %v2520 = vpack.c.b16 %v2507, %v2506
        %v2521 = vpack.c.b16 %v2509, %v2508
        %v2522 = vpack.c.b16 %v2511, %v2510
        %v2523 = vpack.c.b16 %v2513, %v2512
        %v2524 = vpack.c.b16 %v2515, %v2514
        %v2525 = vpack.c.b16 %v2517, %v2516
        %2534 = vmatprep.subr.bf16.mxu0 0
        %2535 = vmatpush1.bf16.msra.mxu0 %v2518
        %2536 = vmatprep.subr.bf16.mxu0 0
        %2537 = vmatpush1.bf16.msra.mxu0 %v2519
        %2538 = vmatprep.subr.bf16.mxu0 0
        %2539 = vmatpush1.bf16.msra.mxu0 %v2520
        %2540 = vmatprep.subr.bf16.mxu0 0
        %2541 = vmatpush1.bf16.msra.mxu0 %v2521
        %2542 = vmatprep.subr.bf16.mxu0 0
        %2543 = vmatpush1.bf16.msra.mxu0 %v2522
        %2544 = vmatprep.subr.bf16.mxu0 0
        %2545 = vmatpush1.bf16.msra.mxu0 %v2523
        %2546 = vmatprep.subr.bf16.mxu0 0
        %2547 = vmatpush1.bf16.msra.mxu0 %v2524
        %2548 = vmatprep.subr.bf16.mxu0 0
        %2549 = vmatpush1.bf16.msra.mxu0 %v2525
        %2550 = vmatprep.subr.bf16.mxu0 0
        %2551 = vmatpush1.bf16.msra.mxu0 0
        %2552 = vmatprep.subr.bf16.mxu0 0
        %2553 = vmatpush1.bf16.msra.mxu0 0
        %2554 = vmatprep.subr.bf16.mxu0 0
        %2555 = vmatpush1.bf16.msra.mxu0 0
        %2556 = vmatprep.subr.bf16.mxu0 0
        %2557 = vmatpush1.bf16.msra.mxu0 0
        %2558 = vmatprep.subr.bf16.mxu0 0
        %2559 = vmatpush1.bf16.msra.mxu0 0
        %2560 = vmatprep.subr.bf16.mxu0 0
        %2561 = vmatpush1.bf16.msra.mxu0 0
        %2562 = vmatprep.subr.bf16.mxu0 0
        %2563 = vmatpush1.bf16.msra.mxu0 0
        %2564 = vmatprep.subr.bf16.mxu0 0
        %2565 = vmatpush1.bf16.msra.mxu0 0
        %2566 = vmatprep.mubr.bf16.mxu0 0
        %2567 = vmatmul.mubr.bf16.gmra.mrb[0].mxu0 %v2467
        %v2568 = vpop.f32.mrb[0].mxu0
        %v2569 = vadd.f32 0.0, %v2568
        %v2570 = vpop.f32.mrb[0].mxu0
        %v2571 = vpop.f32.mrb[0].mxu0
        %v2572 = vadd.f32 0.0, %v2571
        %v2573 = vpop.f32.mrb[0].mxu0
        %2574 = vmatprep.mubr.bf16.mxu0 0
        %2575 = vmatmul.mubr.bf16.gmra.mrb[0].mxu0 %v2468
        %v2576 = vpop.f32.mrb[0].mxu0
        %v2577 = vadd.f32 0.0, %v2576
        %v2578 = vpop.f32.mrb[0].mxu0
        %v2579 = vpop.f32.mrb[0].mxu0
        %v2580 = vadd.f32 0.0, %v2579
        %v2581 = vpop.f32.mrb[0].mxu0
        %2582 = vdwg.mxu0
        %v2583 = vadd.f32 %v2449, %v2569
        %v2584 = vadd.f32 %v2452, %v2572
        %v2585 = vadd.f32 %v2457, %v2577
        %v2586 = vadd.f32 %v2460, %v2580
        %v2587 = vld [vmem:[%s8] sm:$0x1]
        %v2588 = vlaneseq
        %v2589 = vshrl.u32 %v2588, 7
        %v2590 = vsub.s32 0, %v2589
        %v2591 = vrot.slane %v2587, %v2590
        %v2592 = vadd.f32 %v2583, %v2591
        %v2593 = vadd.f32 %v2584, %v2591
        %v2594 = vadd.f32 %v2585, %v2591
        %v2595 = vadd.f32 %v2586, %v2591
        %v2596 = vmax.f32 %v2592, 0.0
        %v2597 = vmax.f32 %v2593, 0.0
        %v2598 = vmax.f32 %v2594, 0.0
        %v2599 = vmax.f32 %v2595, 0.0
        %v2600 = vld [vmem:[%s8 + $0x1] sm:$0x1]
        %v2601 = vlaneseq
        %v2602 = vshrl.u32 %v2601, 7
        %v2603 = vsub.s32 0, %v2602
        %v2604 = vrot.slane %v2600, %v2603
        %v2605 = vmul.f32 %v2596, %v2604
        %v2606 = vmul.f32 %v2597, %v2604
        %v2607 = vmul.f32 %v2598, %v2604
        %v2608 = vmul.f32 %v2599, %v2604
        %v2609 = vld [vmem:[%s8 + $0x2] sm:$0x1]
        %v2610 = vlaneseq
        %v2611 = vshrl.u32 %v2610, 7
        %v2612 = vsub.s32 0, %v2611
        %v2613 = vrot.slane %v2609, %v2612
        %v2614 = vadd.f32 %v2605, %v2613
        %v2615 = vadd.f32 %v2606, %v2613
        %v2616 = vadd.f32 %v2607, %v2613
        %v2617 = vadd.f32 %v2608, %v2613
        %2618 = vst [vmem:[#allocation7] sm:$0xff] %v2614
        %2619 = vst [vmem:[#allocation7 + $0x8] sm:$0xff] %v2615
        %2620 = vst [vmem:[#allocation7 + $0x10] sm:$0xff] %v2616
        %2621 = vst [vmem:[#allocation7 + $0x18] sm:$0x7] %v2617
        %v2622 = vld [vmem:[#allocation7] ss:$3 sm:$0xff]
        %s2623 = scalar_lea.vmem [#allocation7], 24
        %v2624 = vld [vmem:[%s2623] ss:$3 sm:$0x1]
        %s2625 = scalar_lea.vmem [#allocation7], 1
        %v2626 = vld [vmem:[%s2625] ss:$3 sm:$0xff]
        %s2627 = scalar_lea.vmem [#allocation7], 25
        %v2628 = vld [vmem:[%s2627] ss:$3 sm:$0x1]
        %s2629 = scalar_lea.vmem [#allocation7], 2
        %v2630 = vld [vmem:[%s2629] ss:$3 sm:$0xff]
        %s2631 = scalar_lea.vmem [#allocation7], 26
        %v2632 = vld [vmem:[%s2631] ss:$3 sm:$0x1]
        %v2633 = vmax.f32 %v2622, %v2626
        %v2634 = vmax.f32 %v2624, %v2628
        %v2635 = vmax.f32 %v2633, %v2630
        %v2636 = vmax.f32 %v2634, %v2632
        %2637 = vst [vmem:[#allocation8] sm:$0x1] 0.0
        %2638 = vst [vmem:[#allocation8 + $0xa] sm:$0x1] 0.0
        %2639 = vst [vmem:[#allocation8 + $0x1] sm:$0xff] %v2635
        %2640 = vst [vmem:[#allocation8 + $0x9] sm:$0x1] %v2636
        %v2641 = vld [vmem:[#allocation8] sm:$0xff]
        %v2642 = vld [vmem:[#allocation8 + $0x8] sm:$0x1]
        %v2643 = vpack.c.bf16 %v2642, %v2641
        %v2644 = vld [vmem:[%s9] sm:$0xf]
        %v2645 = vld [vmem:[%s9 + $0x4] sm:$0xf]
        %v2646 = vld [vmem:[%s9 + $0x8] sm:$0xf]
        %v2647 = vld [vmem:[%s9 + $0xc] sm:$0xf]
        %v2648 = vld [vmem:[%s9 + $0x10] sm:$0xf]
        %v2649 = vld [vmem:[%s9 + $0x14] sm:$0xf]
        %v2650 = vld [vmem:[%s9 + $0x18] sm:$0xf]
        %v2651 = vld [vmem:[%s9 + $0x1c] sm:$0xf]
        %v2652 = vld [vmem:[%s9 + $0x20] sm:$0xf]
        %v2653 = vld [vmem:[%s9 + $0x24] sm:$0xf]
        %v2654 = vld [vmem:[%s9 + $0x28] sm:$0xf]
        %v2655 = vld [vmem:[%s9 + $0x2c] sm:$0xf]
        %v2656 = vld [vmem:[%s9 + $0x30] sm:$0xf]
        %v2657 = vld [vmem:[%s9 + $0x34] sm:$0xf]
        %v2658 = vld [vmem:[%s9 + $0x38] sm:$0xf]
        %v2659 = vld [vmem:[%s9 + $0x3c] sm:$0xf]
        %v2660 = vld [vmem:[#allocation8 + $0x1] sm:$0xff]
        %v2661 = vld [vmem:[#allocation8 + $0x9] sm:$0x1]
        %v2662 = vpack.c.bf16 %v2661, %v2660
        %s2663 = scalar_lea.vmem %s9, 64
        %v2664 = vld [vmem:[%s2663] sm:$0xf]
        %v2665 = vld [vmem:[%s2663 + $0x4] sm:$0xf]
        %v2666 = vld [vmem:[%s2663 + $0x8] sm:$0xf]
        %v2667 = vld [vmem:[%s2663 + $0xc] sm:$0xf]
        %v2668 = vld [vmem:[%s2663 + $0x10] sm:$0xf]
        %v2669 = vld [vmem:[%s2663 + $0x14] sm:$0xf]
        %v2670 = vld [vmem:[%s2663 + $0x18] sm:$0xf]
        %v2671 = vld [vmem:[%s2663 + $0x1c] sm:$0xf]
        %v2672 = vld [vmem:[%s2663 + $0x20] sm:$0xf]
        %v2673 = vld [vmem:[%s2663 + $0x24] sm:$0xf]
        %v2674 = vld [vmem:[%s2663 + $0x28] sm:$0xf]
        %v2675 = vld [vmem:[%s2663 + $0x2c] sm:$0xf]
        %v2676 = vld [vmem:[%s2663 + $0x30] sm:$0xf]
        %v2677 = vld [vmem:[%s2663 + $0x34] sm:$0xf]
        %v2678 = vld [vmem:[%s2663 + $0x38] sm:$0xf]
        %v2679 = vld [vmem:[%s2663 + $0x3c] sm:$0xf]
        %v2696 = vunpack.c.l.b16 %v2664
        %v2697 = vunpack.c.l.b16 %v2665
        %v2698 = vunpack.c.l.b16 %v2666
        %v2699 = vunpack.c.l.b16 %v2667
        %v2700 = vunpack.c.l.b16 %v2668
        %v2701 = vunpack.c.l.b16 %v2669
        %v2702 = vunpack.c.l.b16 %v2670
        %v2703 = vunpack.c.l.b16 %v2671
        %v2704 = vunpack.c.l.b16 %v2672
        %v2705 = vunpack.c.l.b16 %v2673
        %v2706 = vunpack.c.l.b16 %v2674
        %v2707 = vunpack.c.l.b16 %v2675
        %v2708 = vunpack.c.l.b16 %v2676
        %v2709 = vunpack.c.l.b16 %v2677
        %v2710 = vunpack.c.l.b16 %v2678
        %v2711 = vunpack.c.l.b16 %v2679
        %v2712 = vpack.c.b16 %v2697, %v2696
        %v2713 = vpack.c.b16 %v2699, %v2698
        %v2714 = vpack.c.b16 %v2701, %v2700
        %v2715 = vpack.c.b16 %v2703, %v2702
        %v2716 = vpack.c.b16 %v2705, %v2704
        %v2717 = vpack.c.b16 %v2707, %v2706
        %v2718 = vpack.c.b16 %v2709, %v2708
        %v2719 = vpack.c.b16 %v2711, %v2710
        %2728 = vmatprep.subr.bf16.mxu0 0
        %2729 = vmatpush1.bf16.msra.mxu0 %v2712
        %2730 = vmatprep.subr.bf16.mxu0 0
        %2731 = vmatpush1.bf16.msra.mxu0 %v2713
        %2732 = vmatprep.subr.bf16.mxu0 0
        %2733 = vmatpush1.bf16.msra.mxu0 %v2714
        %2734 = vmatprep.subr.bf16.mxu0 0
        %2735 = vmatpush1.bf16.msra.mxu0 %v2715
        %2736 = vmatprep.subr.bf16.mxu0 0
        %2737 = vmatpush1.bf16.msra.mxu0 %v2716
        %2738 = vmatprep.subr.bf16.mxu0 0
        %2739 = vmatpush1.bf16.msra.mxu0 %v2717
        %2740 = vmatprep.subr.bf16.mxu0 0
        %2741 = vmatpush1.bf16.msra.mxu0 %v2718
        %2742 = vmatprep.subr.bf16.mxu0 0
        %2743 = vmatpush1.bf16.msra.mxu0 %v2719
        %2744 = vmatprep.subr.bf16.mxu0 0
        %2745 = vmatpush1.bf16.msra.mxu0 0
        %2746 = vmatprep.subr.bf16.mxu0 0
        %2747 = vmatpush1.bf16.msra.mxu0 0
        %2748 = vmatprep.subr.bf16.mxu0 0
        %2749 = vmatpush1.bf16.msra.mxu0 0
        %2750 = vmatprep.subr.bf16.mxu0 0
        %2751 = vmatpush1.bf16.msra.mxu0 0
        %2752 = vmatprep.subr.bf16.mxu0 0
        %2753 = vmatpush1.bf16.msra.mxu0 0
        %2754 = vmatprep.subr.bf16.mxu0 0
        %2755 = vmatpush1.bf16.msra.mxu0 0
        %2756 = vmatprep.subr.bf16.mxu0 0
        %2757 = vmatpush1.bf16.msra.mxu0 0
        %2758 = vmatprep.subr.bf16.mxu0 0
        %2759 = vmatpush1.bf16.msra.mxu0 0
        %2760 = vmatprep.mubr.bf16.mxu0 0
        %2761 = vmatmul.mubr.bf16.gmra.mrb[0].mxu0 %v2662
        %v2762 = vpop.f32.mrb[0].mxu0
        %v2763 = vadd.f32 0.0, %v2762
        %v2764 = vpop.f32.mrb[0].mxu0
        %v2765 = vpop.f32.mrb[0].mxu0
        %v2766 = vadd.f32 0.0, %v2765
        %v2767 = vpop.f32.mrb[0].mxu0
        %2768 = vdwg.mxu0
        %v2785 = vunpack.c.l.b16 %v2644
        %v2786 = vunpack.c.l.b16 %v2645
        %v2787 = vunpack.c.l.b16 %v2646
        %v2788 = vunpack.c.l.b16 %v2647
        %v2789 = vunpack.c.l.b16 %v2648
        %v2790 = vunpack.c.l.b16 %v2649
        %v2791 = vunpack.c.l.b16 %v2650
        %v2792 = vunpack.c.l.b16 %v2651
        %v2793 = vunpack.c.l.b16 %v2652
        %v2794 = vunpack.c.l.b16 %v2653
        %v2795 = vunpack.c.l.b16 %v2654
        %v2796 = vunpack.c.l.b16 %v2655
        %v2797 = vunpack.c.l.b16 %v2656
        %v2798 = vunpack.c.l.b16 %v2657
        %v2799 = vunpack.c.l.b16 %v2658
        %v2800 = vunpack.c.l.b16 %v2659
        %v2801 = vpack.c.b16 %v2786, %v2785
        %v2802 = vpack.c.b16 %v2788, %v2787
        %v2803 = vpack.c.b16 %v2790, %v2789
        %v2804 = vpack.c.b16 %v2792, %v2791
        %v2805 = vpack.c.b16 %v2794, %v2793
        %v2806 = vpack.c.b16 %v2796, %v2795
        %v2807 = vpack.c.b16 %v2798, %v2797
        %v2808 = vpack.c.b16 %v2800, %v2799
        %2817 = vmatprep.subr.bf16.mxu0 0
        %2818 = vmatpush1.bf16.msra.mxu0 %v2801
        %2819 = vmatprep.subr.bf16.mxu0 0
        %2820 = vmatpush1.bf16.msra.mxu0 %v2802
        %2821 = vmatprep.subr.bf16.mxu0 0
        %2822 = vmatpush1.bf16.msra.mxu0 %v2803
        %2823 = vmatprep.subr.bf16.mxu0 0
        %2824 = vmatpush1.bf16.msra.mxu0 %v2804
        %2825 = vmatprep.subr.bf16.mxu0 0
        %2826 = vmatpush1.bf16.msra.mxu0 %v2805
        %2827 = vmatprep.subr.bf16.mxu0 0
        %2828 = vmatpush1.bf16.msra.mxu0 %v2806
        %2829 = vmatprep.subr.bf16.mxu0 0
        %2830 = vmatpush1.bf16.msra.mxu0 %v2807
        %2831 = vmatprep.subr.bf16.mxu0 0
        %2832 = vmatpush1.bf16.msra.mxu0 %v2808
        %2833 = vmatprep.subr.bf16.mxu0 0
        %2834 = vmatpush1.bf16.msra.mxu0 0
        %2835 = vmatprep.subr.bf16.mxu0 0
        %2836 = vmatpush1.bf16.msra.mxu0 0
        %2837 = vmatprep.subr.bf16.mxu0 0
        %2838 = vmatpush1.bf16.msra.mxu0 0
        %2839 = vmatprep.subr.bf16.mxu0 0
        %2840 = vmatpush1.bf16.msra.mxu0 0
        %2841 = vmatprep.subr.bf16.mxu0 0
        %2842 = vmatpush1.bf16.msra.mxu0 0
        %2843 = vmatprep.subr.bf16.mxu0 0
        %2844 = vmatpush1.bf16.msra.mxu0 0
        %2845 = vmatprep.subr.bf16.mxu0 0
        %2846 = vmatpush1.bf16.msra.mxu0 0
        %2847 = vmatprep.subr.bf16.mxu0 0
        %2848 = vmatpush1.bf16.msra.mxu0 0
        %2849 = vmatprep.mubr.bf16.mxu0 0
        %2850 = vmatmul.mubr.bf16.gmra.mrb[0].mxu0 %v2643
        %v2851 = vpop.f32.mrb[0].mxu0
        %v2852 = vadd.f32 %v2763, %v2851
        %v2853 = vpop.f32.mrb[0].mxu0
        %v2854 = vpop.f32.mrb[0].mxu0
        %v2855 = vadd.f32 %v2766, %v2854
        %v2856 = vpop.f32.mrb[0].mxu0
        %2857 = vdwg.mxu0
        %v2858 = vld [vmem:[#allocation8 + $0x2] sm:$0xff]
        %v2859 = vld [vmem:[#allocation8 + $0xa] sm:$0x1]
        %v2860 = vpack.c.bf16 %v2859, %v2858
        %s2861 = scalar_lea.vmem %s9, 128
        %v2862 = vld [vmem:[%s2861] sm:$0xf]
        %v2863 = vld [vmem:[%s2861 + $0x4] sm:$0xf]
        %v2864 = vld [vmem:[%s2861 + $0x8] sm:$0xf]
        %v2865 = vld [vmem:[%s2861 + $0xc] sm:$0xf]
        %v2866 = vld [vmem:[%s2861 + $0x10] sm:$0xf]
        %v2867 = vld [vmem:[%s2861 + $0x14] sm:$0xf]
        %v2868 = vld [vmem:[%s2861 + $0x18] sm:$0xf]
        %v2869 = vld [vmem:[%s2861 + $0x1c] sm:$0xf]
        %v2870 = vld [vmem:[%s2861 + $0x20] sm:$0xf]
        %v2871 = vld [vmem:[%s2861 + $0x24] sm:$0xf]
        %v2872 = vld [vmem:[%s2861 + $0x28] sm:$0xf]
        %v2873 = vld [vmem:[%s2861 + $0x2c] sm:$0xf]
        %v2874 = vld [vmem:[%s2861 + $0x30] sm:$0xf]
        %v2875 = vld [vmem:[%s2861 + $0x34] sm:$0xf]
        %v2876 = vld [vmem:[%s2861 + $0x38] sm:$0xf]
        %v2877 = vld [vmem:[%s2861 + $0x3c] sm:$0xf]
        %v2894 = vunpack.c.l.b16 %v2862
        %v2895 = vunpack.c.l.b16 %v2863
        %v2896 = vunpack.c.l.b16 %v2864
        %v2897 = vunpack.c.l.b16 %v2865
        %v2898 = vunpack.c.l.b16 %v2866
        %v2899 = vunpack.c.l.b16 %v2867
        %v2900 = vunpack.c.l.b16 %v2868
        %v2901 = vunpack.c.l.b16 %v2869
        %v2902 = vunpack.c.l.b16 %v2870
        %v2903 = vunpack.c.l.b16 %v2871
        %v2904 = vunpack.c.l.b16 %v2872
        %v2905 = vunpack.c.l.b16 %v2873
        %v2906 = vunpack.c.l.b16 %v2874
        %v2907 = vunpack.c.l.b16 %v2875
        %v2908 = vunpack.c.l.b16 %v2876
        %v2909 = vunpack.c.l.b16 %v2877
        %v2910 = vpack.c.b16 %v2895, %v2894
        %v2911 = vpack.c.b16 %v2897, %v2896
        %v2912 = vpack.c.b16 %v2899, %v2898
        %v2913 = vpack.c.b16 %v2901, %v2900
        %v2914 = vpack.c.b16 %v2903, %v2902
        %v2915 = vpack.c.b16 %v2905, %v2904
        %v2916 = vpack.c.b16 %v2907, %v2906
        %v2917 = vpack.c.b16 %v2909, %v2908
        %2926 = vmatprep.subr.bf16.mxu0 0
        %2927 = vmatpush1.bf16.msra.mxu0 %v2910
        %2928 = vmatprep.subr.bf16.mxu0 0
        %2929 = vmatpush1.bf16.msra.mxu0 %v2911
        %2930 = vmatprep.subr.bf16.mxu0 0
        %2931 = vmatpush1.bf16.msra.mxu0 %v2912
        %2932 = vmatprep.subr.bf16.mxu0 0
        %2933 = vmatpush1.bf16.msra.mxu0 %v2913
        %2934 = vmatprep.subr.bf16.mxu0 0
        %2935 = vmatpush1.bf16.msra.mxu0 %v2914
        %2936 = vmatprep.subr.bf16.mxu0 0
        %2937 = vmatpush1.bf16.msra.mxu0 %v2915
        %2938 = vmatprep.subr.bf16.mxu0 0
        %2939 = vmatpush1.bf16.msra.mxu0 %v2916
        %2940 = vmatprep.subr.bf16.mxu0 0
        %2941 = vmatpush1.bf16.msra.mxu0 %v2917
        %2942 = vmatprep.subr.bf16.mxu0 0
        %2943 = vmatpush1.bf16.msra.mxu0 0
        %2944 = vmatprep.subr.bf16.mxu0 0
        %2945 = vmatpush1.bf16.msra.mxu0 0
        %2946 = vmatprep.subr.bf16.mxu0 0
        %2947 = vmatpush1.bf16.msra.mxu0 0
        %2948 = vmatprep.subr.bf16.mxu0 0
        %2949 = vmatpush1.bf16.msra.mxu0 0
        %2950 = vmatprep.subr.bf16.mxu0 0
        %2951 = vmatpush1.bf16.msra.mxu0 0
        %2952 = vmatprep.subr.bf16.mxu0 0
        %2953 = vmatpush1.bf16.msra.mxu0 0
        %2954 = vmatprep.subr.bf16.mxu0 0
        %2955 = vmatpush1.bf16.msra.mxu0 0
        %2956 = vmatprep.subr.bf16.mxu0 0
        %2957 = vmatpush1.bf16.msra.mxu0 0
        %2958 = vmatprep.mubr.bf16.mxu0 0
        %2959 = vmatmul.mubr.bf16.gmra.mrb[0].mxu0 %v2860
        %v2960 = vpop.f32.mrb[0].mxu0
        %v2961 = vadd.f32 0.0, %v2960
        %v2962 = vpop.f32.mrb[0].mxu0
        %v2963 = vpop.f32.mrb[0].mxu0
        %v2964 = vadd.f32 0.0, %v2963
        %v2965 = vpop.f32.mrb[0].mxu0
        %2966 = vdwg.mxu0
        %v2967 = vadd.f32 %v2852, %v2961
        %v2968 = vadd.f32 %v2855, %v2964
        %v2969 = vld [vmem:[%s10] sm:$0x1]
        %v2970 = vlaneseq
        %v2971 = vshrl.u32 %v2970, 7
        %v2972 = vsub.s32 0, %v2971
        %v2973 = vrot.slane %v2969, %v2972
        %v2974 = vadd.f32 %v2967, %v2973
        %v2975 = vadd.f32 %v2968, %v2973
        %v2976 = vmax.f32 %v2974, 0.0
        %v2977 = vmax.f32 %v2975, 0.0
        %v2978 = vld [vmem:[%s10 + $0x1] sm:$0x1]
        %v2979 = vlaneseq
        %v2980 = vshrl.u32 %v2979, 7
        %v2981 = vsub.s32 0, %v2980
        %v2982 = vrot.slane %v2978, %v2981
        %v2983 = vmul.f32 %v2976, %v2982
        %v2984 = vmul.f32 %v2977, %v2982
        %v2985 = vld [vmem:[%s10 + $0x2] sm:$0x1]
        %v2986 = vlaneseq
        %v2987 = vshrl.u32 %v2986, 7
        %v2988 = vsub.s32 0, %v2987
        %v2989 = vrot.slane %v2985, %v2988
        %v2990 = vadd.f32 %v2983, %v2989
        %v2991 = vadd.f32 %v2984, %v2989
        %2992 = vst [vmem:[#allocation9] sm:$0xff] %v2990
        %2993 = vst [vmem:[#allocation9 + $0x8] sm:$0x1] %v2991
        %v2994 = vld [vmem:[#allocation9] ss:$3 sm:$0x7]
        %s2995 = scalar_lea.vmem [#allocation9], 1
        %v2996 = vld [vmem:[%s2995] ss:$3 sm:$0x7]
        %s2997 = scalar_lea.vmem [#allocation9], 2
        %v2998 = vld [vmem:[%s2997] ss:$3 sm:$0x7]
        %v2999 = vadd.f32 %v2994, %v2996
        %v3000 = vadd.f32 %v2999, %v2998
        %v3001 = vmul.f32 %v3000, 0.33333334
        %v3002 = vpack.c.bf16 %v3001, %v3001
        %v3003 = vld [vmem:[#allocation15] sm:$0xff]
        %v3004 = vld [vmem:[#allocation15 + $0x8] sm:$0xf]
        %v3005 = vld [vmem:[#allocation15 + $0xc] sm:$0xff]
        %v3006 = vld [vmem:[#allocation15 + $0x14] sm:$0xf]
        %v3007 = vld [vmem:[#allocation15 + $0x18] sm:$0xff]
        %v3008 = vld [vmem:[#allocation15 + $0x20] sm:$0xf]
        %v3009 = vld [vmem:[#allocation15 + $0x24] sm:$0xff]
        %v3010 = vld [vmem:[#allocation15 + $0x2c] sm:$0xf]
        %v3011 = vld [vmem:[#allocation15 + $0x30] sm:$0xff]
        %v3012 = vld [vmem:[#allocation15 + $0x38] sm:$0xf]
        %v3013 = vld [vmem:[#allocation15 + $0x3c] sm:$0xff]
        %v3014 = vld [vmem:[#allocation15 + $0x44] sm:$0xf]
        %v3015 = vld [vmem:[#allocation15 + $0x48] sm:$0xff]
        %v3016 = vld [vmem:[#allocation15 + $0x50] sm:$0xf]
        %v3017 = vld [vmem:[#allocation15 + $0x54] sm:$0xff]
        %v3018 = vld [vmem:[#allocation15 + $0x5c] sm:$0xf]
        %v3019 = vld [vmem:[#allocation15 + $0x60] sm:$0xff]
        %v3020 = vld [vmem:[#allocation15 + $0x68] sm:$0xf]
        %v3021 = vld [vmem:[#allocation15 + $0x6c] sm:$0xff]
        %v3022 = vld [vmem:[#allocation15 + $0x74] sm:$0xf]
        %v3023 = vld [vmem:[#allocation15 + $0x78] sm:$0xff]
        %v3024 = vld [vmem:[#allocation15 + $0x80] sm:$0xf]
        %v3025 = vld [vmem:[#allocation15 + $0x84] sm:$0xff]
        %v3026 = vld [vmem:[#allocation15 + $0x8c] sm:$0xf]
        %v3027 = vld [vmem:[#allocation15 + $0x90] sm:$0xff]
        %v3028 = vld [vmem:[#allocation15 + $0x98] sm:$0xf]
        %v3029 = vld [vmem:[#allocation15 + $0x9c] sm:$0xff]
        %v3030 = vld [vmem:[#allocation15 + $0xa4] sm:$0xf]
        %v3031 = vld [vmem:[#allocation15 + $0xa8] sm:$0xff]
        %v3032 = vld [vmem:[#allocation15 + $0xb0] sm:$0xf]
        %v3033 = vld [vmem:[#allocation15 + $0xb4] sm:$0xff]
        %v3034 = vld [vmem:[#allocation15 + $0xbc] sm:$0xf]
        %v3035 = vld [vmem:[%s12] sm:$0x7]
        %v3037 = vlaneseq
        %v3038 = vshrl.u32 %v3037, 7
        %v3039 = vsub.s32 0, %v3038
        %v3040 = vrot.slane %v3035, %v3039
        %v3041 = vlaneseq
        %v3042 = vshrl.u32 %v3041, 7
        %v3043 = vsub.s32 1, %v3042
        %v3044 = vrot.slane %v3035, %v3043
        %v3045 = vlaneseq
        %v3046 = vshrl.u32 %v3045, 7
        %v3047 = vsub.s32 2, %v3046
        %v3048 = vrot.slane %v3035, %v3047
        %v3084 = vunpack.c.l.b16 %v3003
        %v3085 = vunpack.c.h.b16 %v3003
        %v3086 = vunpack.c.l.b16 %v3004
        %v3087 = vunpack.c.l.b16 %v3005
        %v3088 = vunpack.c.h.b16 %v3005
        %v3089 = vunpack.c.l.b16 %v3006
        %v3090 = vunpack.c.l.b16 %v3007
        %v3091 = vunpack.c.h.b16 %v3007
        %v3092 = vunpack.c.l.b16 %v3008
        %v3093 = vunpack.c.l.b16 %v3009
        %v3094 = vunpack.c.h.b16 %v3009
        %v3095 = vunpack.c.l.b16 %v3010
        %v3096 = vunpack.c.l.b16 %v3011
        %v3097 = vunpack.c.h.b16 %v3011
        %v3098 = vunpack.c.l.b16 %v3012
        %v3099 = vunpack.c.l.b16 %v3013
        %v3100 = vunpack.c.h.b16 %v3013
        %v3101 = vunpack.c.l.b16 %v3014
        %v3102 = vunpack.c.l.b16 %v3015
        %v3103 = vunpack.c.h.b16 %v3015
        %v3104 = vunpack.c.l.b16 %v3016
        %v3105 = vunpack.c.l.b16 %v3017
        %v3106 = vunpack.c.h.b16 %v3017
        %v3107 = vunpack.c.l.b16 %v3018
        %v3108 = vunpack.c.l.b16 %v3019
        %v3109 = vunpack.c.h.b16 %v3019
        %v3110 = vunpack.c.l.b16 %v3020
        %v3111 = vunpack.c.l.b16 %v3021
        %v3112 = vunpack.c.h.b16 %v3021
        %v3113 = vunpack.c.l.b16 %v3022
        %v3114 = vunpack.c.l.b16 %v3023
        %v3115 = vunpack.c.h.b16 %v3023
        %v3116 = vunpack.c.l.b16 %v3024
        %v3117 = vunpack.c.l.b16 %v3025
        %v3118 = vunpack.c.h.b16 %v3025
        %v3119 = vunpack.c.l.b16 %v3026
        %v3120 = vunpack.c.l.b16 %v3027
        %v3121 = vunpack.c.h.b16 %v3027
        %v3122 = vunpack.c.l.b16 %v3028
        %v3123 = vunpack.c.l.b16 %v3029
        %v3124 = vunpack.c.h.b16 %v3029
        %v3125 = vunpack.c.l.b16 %v3030
        %v3126 = vunpack.c.l.b16 %v3031
        %v3127 = vunpack.c.h.b16 %v3031
        %v3128 = vunpack.c.l.b16 %v3032
        %v3129 = vunpack.c.l.b16 %v3033
        %v3130 = vunpack.c.h.b16 %v3033
        %v3131 = vunpack.c.l.b16 %v3034
        %v3132 = vpack.c.b16 %v3087, %v3084
        %v3133 = vpack.c.b16 %v3088, %v3085
        %v3134 = vpack.c.b16 %v3089, %v3086
        %v3135 = vpack.c.b16 %v3093, %v3090
        %v3136 = vpack.c.b16 %v3094, %v3091
        %v3137 = vpack.c.b16 %v3095, %v3092
        %v3138 = vpack.c.b16 %v3099, %v3096
        %v3139 = vpack.c.b16 %v3100, %v3097
        %v3140 = vpack.c.b16 %v3101, %v3098
        %v3141 = vpack.c.b16 %v3105, %v3102
        %v3142 = vpack.c.b16 %v3106, %v3103
        %v3143 = vpack.c.b16 %v3107, %v3104
        %v3144 = vpack.c.b16 %v3111, %v3108
        %v3145 = vpack.c.b16 %v3112, %v3109
        %v3146 = vpack.c.b16 %v3113, %v3110
        %v3147 = vpack.c.b16 %v3117, %v3114
        %v3148 = vpack.c.b16 %v3118, %v3115
        %v3149 = vpack.c.b16 %v3119, %v3116
        %v3150 = vpack.c.b16 %v3123, %v3120
        %v3151 = vpack.c.b16 %v3124, %v3121
        %v3152 = vpack.c.b16 %v3125, %v3122
        %v3153 = vpack.c.b16 %v3129, %v3126
        %v3154 = vpack.c.b16 %v3130, %v3127
        %v3155 = vpack.c.b16 %v3131, %v3128
        %3180 = vmatprep.subr.bf16.mxu0 %v3133
        %3181 = vmatpush1.bf16.msra.mxu0 %v3132
        %3182 = vmatprep.subr.bf16.mxu0 %v3136
        %3183 = vmatpush1.bf16.msra.mxu0 %v3135
        %3184 = vmatprep.subr.bf16.mxu0 %v3139
        %3185 = vmatpush1.bf16.msra.mxu0 %v3138
        %3186 = vmatprep.subr.bf16.mxu0 %v3142
        %3187 = vmatpush1.bf16.msra.mxu0 %v3141
        %3188 = vmatprep.subr.bf16.mxu0 %v3145
        %3189 = vmatpush1.bf16.msra.mxu0 %v3144
        %3190 = vmatprep.subr.bf16.mxu0 %v3148
        %3191 = vmatpush1.bf16.msra.mxu0 %v3147
        %3192 = vmatprep.subr.bf16.mxu0 %v3151
        %3193 = vmatpush1.bf16.msra.mxu0 %v3150
        %3194 = vmatprep.subr.bf16.mxu0 %v3154
        %3195 = vmatpush1.bf16.msra.mxu0 %v3153
        %3196 = vmatprep.subr.bf16.mxu0 0
        %3197 = vmatpush1.bf16.msra.mxu0 0
        %3198 = vmatprep.subr.bf16.mxu0 0
        %3199 = vmatpush1.bf16.msra.mxu0 0
        %3200 = vmatprep.subr.bf16.mxu0 0
        %3201 = vmatpush1.bf16.msra.mxu0 0
        %3202 = vmatprep.subr.bf16.mxu0 0
        %3203 = vmatpush1.bf16.msra.mxu0 0
        %3204 = vmatprep.subr.bf16.mxu0 0
        %3205 = vmatpush1.bf16.msra.mxu0 0
        %3206 = vmatprep.subr.bf16.mxu0 0
        %3207 = vmatpush1.bf16.msra.mxu0 0
        %3208 = vmatprep.subr.bf16.mxu0 0
        %3209 = vmatpush1.bf16.msra.mxu0 0
        %3210 = vmatprep.subr.bf16.mxu0 0
        %3211 = vmatpush1.bf16.msra.mxu0 0
        %3212 = vmatprep.mubr.bf16.mxu0 0
        %3213 = vmatmul.mubr.bf16.gmra.mrb[0].mxu0 %v3002
        %v3214 = vpop.f32.mrb[0].mxu0
        %v3215 = vadd.f32 %v3040, %v3214
        %v3216 = vpop.f32.mrb[0].mxu0
        %v3217 = vadd.f32 %v3044, %v3216
        %v3218 = vpop.f32.mrb[0].mxu0
        %v3219 = vpop.f32.mrb[0].mxu0
        %3220 = vdwg.mxu0
        %3221 = vmatprep.subr.bf16.mxu0 0
        %3222 = vmatpush1.bf16.msra.mxu0 %v3134
        %3223 = vmatprep.subr.bf16.mxu0 0
        %3224 = vmatpush1.bf16.msra.mxu0 %v3137
        %3225 = vmatprep.subr.bf16.mxu0 0
        %3226 = vmatpush1.bf16.msra.mxu0 %v3140
        %3227 = vmatprep.subr.bf16.mxu0 0
        %3228 = vmatpush1.bf16.msra.mxu0 %v3143
        %3229 = vmatprep.subr.bf16.mxu0 0
        %3230 = vmatpush1.bf16.msra.mxu0 %v3146
        %3231 = vmatprep.subr.bf16.mxu0 0
        %3232 = vmatpush1.bf16.msra.mxu0 %v3149
        %3233 = vmatprep.subr.bf16.mxu0 0
        %3234 = vmatpush1.bf16.msra.mxu0 %v3152
        %3235 = vmatprep.subr.bf16.mxu0 0
        %3236 = vmatpush1.bf16.msra.mxu0 %v3155
        %3237 = vmatprep.subr.bf16.mxu0 0
        %3238 = vmatpush1.bf16.msra.mxu0 0
        %3239 = vmatprep.subr.bf16.mxu0 0
        %3240 = vmatpush1.bf16.msra.mxu0 0
        %3241 = vmatprep.subr.bf16.mxu0 0
        %3242 = vmatpush1.bf16.msra.mxu0 0
        %3243 = vmatprep.subr.bf16.mxu0 0
        %3244 = vmatpush1.bf16.msra.mxu0 0
        %3245 = vmatprep.subr.bf16.mxu0 0
        %3246 = vmatpush1.bf16.msra.mxu0 0
        %3247 = vmatprep.subr.bf16.mxu0 0
        %3248 = vmatpush1.bf16.msra.mxu0 0
        %3249 = vmatprep.subr.bf16.mxu0 0
        %3250 = vmatpush1.bf16.msra.mxu0 0
        %3251 = vmatprep.subr.bf16.mxu0 0
        %3252 = vmatpush1.bf16.msra.mxu0 0
        %3253 = vmatprep.mubr.bf16.mxu0 0
        %3254 = vmatmul.mubr.bf16.gmra.mrb[0].mxu0 %v3002
        %v3255 = vpop.f32.mrb[0].mxu0
        %v3256 = vadd.f32 %v3048, %v3255
        %v3257 = vpop.f32.mrb[0].mxu0
        %v3258 = vpop.f32.mrb[0].mxu0
        %v3259 = vpop.f32.mrb[0].mxu0
        %3260 = vdwg.mxu0
        %3261 = vmatprep.subr.mxu0 0.0
        %3262 = vmatpush1.xpose.msra.mxu0 %v3217
        %3263 = vmatprep.subr.mxu0 0.0
        %3264 = vmatpush1.xpose.msra.mxu0 0.0
        %3265 = vmatprep.subr.mxu0 0.0
        %3266 = vmatpush1.xpose.msra.mxu0 0.0
        %3267 = vmatprep.subr.mxu0 0.0
        %3268 = vmatpush1.xpose.msra.mxu0 0.0
        %3269 = vmatprep.subr.mxu0 0.0
        %3270 = vmatpush1.xpose.msra.mxu0 0.0
        %3271 = vmatprep.subr.mxu0 0.0
        %3272 = vmatpush1.xpose.msra.mxu0 0.0
        %3273 = vmatprep.subr.mxu0 0.0
        %3274 = vmatpush1.xpose.msra.mxu0 0.0
        %3275 = vmatprep.subr.mxu0 0.0
        %3276 = vmatpush1.xpose.msra.mxu0 0.0
        %3277 = vmatprep.subr.mxu0 0.0
        %3278 = vmatpush1.xpose.msra.mxu0 0.0
        %3279 = vmatprep.subr.mxu0 0.0
        %3280 = vmatpush1.xpose.msra.mxu0 0.0
        %3281 = vmatprep.subr.mxu0 0.0
        %3282 = vmatpush1.xpose.msra.mxu0 0.0
        %3283 = vmatprep.subr.mxu0 0.0
        %3284 = vmatpush1.xpose.msra.mxu0 0.0
        %3285 = vmatprep.subr.mxu0 0.0
        %3286 = vmatpush1.xpose.msra.mxu0 0.0
        %3287 = vmatprep.subr.mxu0 0.0
        %3288 = vmatpush1.xpose.msra.mxu0 0.0
        %3289 = vmatprep.subr.mxu0 0.0
        %3290 = vmatpush1.xpose.msra.mxu0 0.0
        %3291 = vmatprep.subr.mxu0 0.0
        %3292 = vmatpush1.xpose.msra.mxu0 0.0
        %3293 = vmatprep.subr.mxu0 0.0
        %3294 = vmatpush1.xpose.msra.mxu0 0.0
        %3295 = vmatprep.subr.mxu0 0.0
        %3296 = vmatpush1.xpose.msra.mxu0 0.0
        %3297 = vmatprep.subr.mxu0 0.0
        %3298 = vmatpush1.xpose.msra.mxu0 0.0
        %3299 = vmatprep.subr.mxu0 0.0
        %3300 = vmatpush1.xpose.msra.mxu0 0.0
        %3301 = vmatprep.subr.mxu0 0.0
        %3302 = vmatpush1.xpose.msra.mxu0 0.0
        %3303 = vmatprep.subr.mxu0 0.0
        %3304 = vmatpush1.xpose.msra.mxu0 0.0
        %3305 = vmatprep.subr.mxu0 0.0
        %3306 = vmatpush1.xpose.msra.mxu0 0.0
        %3307 = vmatprep.subr.mxu0 0.0
        %3308 = vmatpush1.xpose.msra.mxu0 0.0
        %3309 = vmatprep.subr.mxu0 0.0
        %3310 = vmatpush1.xpose.msra.mxu0 0.0
        %3311 = vmatprep.subr.mxu0 0.0
        %3312 = vmatpush1.xpose.msra.mxu0 0.0
        %3313 = vmatprep.subr.mxu0 0.0
        %3314 = vmatpush1.xpose.msra.mxu0 0.0
        %3315 = vmatprep.subr.mxu0 0.0
        %3316 = vmatpush1.xpose.msra.mxu0 0.0
        %3317 = vmatprep.subr.mxu0 0.0
        %3318 = vmatpush1.xpose.msra.mxu0 0.0
        %3319 = vmatprep.subr.mxu0 0.0
        %3320 = vmatpush1.xpose.msra.mxu0 0.0
        %3321 = vmatprep.subr.mxu0 0.0
        %3322 = vmatpush1.xpose.msra.mxu0 0.0
        %3323 = vmatprep.subr.mxu0 0.0
        %3324 = vmatpush1.xpose.msra.mxu0 0.0
        %3325 = vmatprep.mubr.f32.mxu0 0.0
        %3326 = vmatmul.mubr.f32.gmra.mrb[0].mxu0 %v3215
        %v3327 = vpop.f32.mrb[0].mxu0
        %v3328 = vadd.f32 0.0, %v3327
        %v3329 = vpop.f32.mrb[0].mxu0
        %3330 = vdwg.mxu0
        %v3331 = vmul.f32 %v3328, 0.088388346
        %vm3332 = vcmask 18432
        %v3333 = vsel %vm3332, %v3331, -inf
        %3334 = vmax.xlane.f32.xlu0 %v3333
        %v3335 = vpop.xlane.xlu0 %3334
        %v3336 = vsub.f32 %v3331, %v3335
        %v3337 = vmul.f32 %v3336, 1.442695
        %v3338 = vpow.pop %v3337
        %v3339 = vsel %vm3332, %v3338, 0.0
        %3340 = vadd.xlane.f32.xlu0 %v3339
        %v3341 = vpop.xlane.xlu0 %3340
        %v3342 = vrcp.pop %v3341
        %v3343 = vmul.f32 %v3338, %v3342
        %v3344 = vpack.c.bf16 %v3343, %v3343
        %v3345 = vpack.c.bf16 %v3256, %v3256
        %vm3346 = vcmask 23552
        %v3348 = vsel %vm3346, %v3344, 0
        %vm3350 = vcmask 1040384
        %v3351 = vsel %vm3350, 4294967295, 65535
        %v3352 = vsel %vm688, %v3351, 0
        %v3354 = vand.u32 %v3345, %v3352
        %3356 = vmatprep.subr.bf16.mxu0 0
        %3357 = vmatpush1.bf16.msra.mxu0 %v3354
        %3358 = vmatprep.subr.bf16.mxu0 0
        %3359 = vmatpush1.bf16.msra.mxu0 0
        %3360 = vmatprep.subr.bf16.mxu0 0
        %3361 = vmatpush1.bf16.msra.mxu0 0
        %3362 = vmatprep.subr.bf16.mxu0 0
        %3363 = vmatpush1.bf16.msra.mxu0 0
        %3364 = vmatprep.subr.bf16.mxu0 0
        %3365 = vmatpush1.bf16.msra.mxu0 0
        %3366 = vmatprep.subr.bf16.mxu0 0
        %3367 = vmatpush1.bf16.msra.mxu0 0
        %3368 = vmatprep.subr.bf16.mxu0 0
        %3369 = vmatpush1.bf16.msra.mxu0 0
        %3370 = vmatprep.subr.bf16.mxu0 0
        %3371 = vmatpush1.bf16.msra.mxu0 0
        %3372 = vmatprep.subr.bf16.mxu0 0
        %3373 = vmatpush1.bf16.msra.mxu0 0
        %3374 = vmatprep.subr.bf16.mxu0 0
        %3375 = vmatpush1.bf16.msra.mxu0 0
        %3376 = vmatprep.subr.bf16.mxu0 0
        %3377 = vmatpush1.bf16.msra.mxu0 0
        %3378 = vmatprep.subr.bf16.mxu0 0
        %3379 = vmatpush1.bf16.msra.mxu0 0
        %3380 = vmatprep.subr.bf16.mxu0 0
        %3381 = vmatpush1.bf16.msra.mxu0 0
        %3382 = vmatprep.subr.bf16.mxu0 0
        %3383 = vmatpush1.bf16.msra.mxu0 0
        %3384 = vmatprep.subr.bf16.mxu0 0
        %3385 = vmatpush1.bf16.msra.mxu0 0
        %3386 = vmatprep.subr.bf16.mxu0 0
        %3387 = vmatpush1.bf16.msra.mxu0 0
        %3388 = vmatprep.mubr.bf16.mxu0 0
        %3389 = vmatmul.mubr.bf16.gmra.mrb[0].mxu0 %v3348
        %v3390 = vpop.f32.mrb[0].mxu0
        %v3391 = vadd.f32 0.0, %v3390
        %v3392 = vpop.f32.mrb[0].mxu0
        %v3393 = vpop.f32.mrb[0].mxu0
        %v3394 = vpop.f32.mrb[0].mxu0
        %3395 = vdwg.mxu0
        %v3396 = vld [vmem:[%s14] sm:$0xf]
        %v3397 = vpack.c.bf16 %v3391, %v3391
        %v3398 = vld [vmem:[#allocation16] sm:$0xff]
        %v3399 = vld [vmem:[#allocation16 + $0x8] sm:$0xff]
        %v3400 = vld [vmem:[#allocation16 + $0x10] sm:$0xff]
        %v3401 = vld [vmem:[#allocation16 + $0x18] sm:$0xff]
        %v3402 = vld [vmem:[#allocation16 + $0x20] sm:$0xff]
        %v3403 = vld [vmem:[#allocation16 + $0x28] sm:$0xff]
        %v3404 = vld [vmem:[#allocation16 + $0x30] sm:$0xff]
        %v3405 = vld [vmem:[#allocation16 + $0x38] sm:$0xff]
        %v3406 = vld [vmem:[#allocation16 + $0x40] sm:$0xff]
        %v3407 = vld [vmem:[#allocation16 + $0x48] sm:$0xff]
        %v3408 = vld [vmem:[#allocation16 + $0x50] sm:$0xff]
        %v3409 = vld [vmem:[#allocation16 + $0x58] sm:$0xff]
        %v3410 = vld [vmem:[#allocation16 + $0x60] sm:$0xff]
        %v3411 = vld [vmem:[#allocation16 + $0x68] sm:$0xff]
        %v3412 = vld [vmem:[#allocation16 + $0x70] sm:$0xff]
        %v3413 = vld [vmem:[#allocation16 + $0x78] sm:$0xff]
        %v3414 = vld [vmem:[#allocation16 + $0x80] sm:$0xff]
        %v3415 = vld [vmem:[#allocation16 + $0x88] sm:$0xff]
        %v3416 = vld [vmem:[#allocation16 + $0x90] sm:$0xff]
        %v3417 = vld [vmem:[#allocation16 + $0x98] sm:$0xff]
        %v3418 = vld [vmem:[#allocation16 + $0xa0] sm:$0xff]
        %v3419 = vld [vmem:[#allocation16 + $0xa8] sm:$0xff]
        %v3420 = vld [vmem:[#allocation16 + $0xb0] sm:$0xff]
        %v3421 = vld [vmem:[#allocation16 + $0xb8] sm:$0xff]
        %v3422 = vld [vmem:[#allocation16 + $0xc0] sm:$0xff]
        %v3423 = vld [vmem:[#allocation16 + $0xc8] sm:$0xff]
        %v3424 = vld [vmem:[#allocation16 + $0xd0] sm:$0xff]
        %v3425 = vld [vmem:[#allocation16 + $0xd8] sm:$0xff]
        %v3426 = vld [vmem:[#allocation16 + $0xe0] sm:$0xff]
        %v3427 = vld [vmem:[#allocation16 + $0xe8] sm:$0xff]
        %v3428 = vld [vmem:[#allocation16 + $0xf0] sm:$0xff]
        %v3429 = vld [vmem:[#allocation16 + $0xf8] sm:$0xff]
        %v3462 = vunpack.c.l.b16 %v3398
        %v3463 = vunpack.c.h.b16 %v3398
        %v3464 = vunpack.c.l.b16 %v3399
        %v3465 = vunpack.c.h.b16 %v3399
        %v3466 = vunpack.c.l.b16 %v3400
        %v3467 = vunpack.c.h.b16 %v3400
        %v3468 = vunpack.c.l.b16 %v3401
        %v3469 = vunpack.c.h.b16 %v3401
        %v3470 = vunpack.c.l.b16 %v3402
        %v3471 = vunpack.c.h.b16 %v3402
        %v3472 = vunpack.c.l.b16 %v3403
        %v3473 = vunpack.c.h.b16 %v3403
        %v3474 = vunpack.c.l.b16 %v3404
        %v3475 = vunpack.c.h.b16 %v3404
        %v3476 = vunpack.c.l.b16 %v3405
        %v3477 = vunpack.c.h.b16 %v3405
        %v3478 = vunpack.c.l.b16 %v3406
        %v3479 = vunpack.c.h.b16 %v3406
        %v3480 = vunpack.c.l.b16 %v3407
        %v3481 = vunpack.c.h.b16 %v3407
        %v3482 = vunpack.c.l.b16 %v3408
        %v3483 = vunpack.c.h.b16 %v3408
        %v3484 = vunpack.c.l.b16 %v3409
        %v3485 = vunpack.c.h.b16 %v3409
        %v3486 = vunpack.c.l.b16 %v3410
        %v3487 = vunpack.c.h.b16 %v3410
        %v3488 = vunpack.c.l.b16 %v3411
        %v3489 = vunpack.c.h.b16 %v3411
        %v3490 = vunpack.c.l.b16 %v3412
        %v3491 = vunpack.c.h.b16 %v3412
        %v3492 = vunpack.c.l.b16 %v3413
        %v3493 = vunpack.c.h.b16 %v3413
        %v3494 = vunpack.c.l.b16 %v3414
        %v3495 = vunpack.c.h.b16 %v3414
        %v3496 = vunpack.c.l.b16 %v3415
        %v3497 = vunpack.c.h.b16 %v3415
        %v3498 = vunpack.c.l.b16 %v3416
        %v3499 = vunpack.c.h.b16 %v3416
        %v3500 = vunpack.c.l.b16 %v3417
        %v3501 = vunpack.c.h.b16 %v3417
        %v3502 = vunpack.c.l.b16 %v3418
        %v3503 = vunpack.c.h.b16 %v3418
        %v3504 = vunpack.c.l.b16 %v3419
        %v3505 = vunpack.c.h.b16 %v3419
        %v3506 = vunpack.c.l.b16 %v3420
        %v3507 = vunpack.c.h.b16 %v3420
        %v3508 = vunpack.c.l.b16 %v3421
        %v3509 = vunpack.c.h.b16 %v3421
        %v3510 = vunpack.c.l.b16 %v3422
        %v3511 = vunpack.c.h.b16 %v3422
        %v3512 = vunpack.c.l.b16 %v3423
        %v3513 = vunpack.c.h.b16 %v3423
        %v3514 = vunpack.c.l.b16 %v3424
        %v3515 = vunpack.c.h.b16 %v3424
        %v3516 = vunpack.c.l.b16 %v3425
        %v3517 = vunpack.c.h.b16 %v3425
        %v3518 = vunpack.c.l.b16 %v3426
        %v3519 = vunpack.c.h.b16 %v3426
        %v3520 = vunpack.c.l.b16 %v3427
        %v3521 = vunpack.c.h.b16 %v3427
        %v3522 = vunpack.c.l.b16 %v3428
        %v3523 = vunpack.c.h.b16 %v3428
        %v3524 = vunpack.c.l.b16 %v3429
        %v3525 = vunpack.c.h.b16 %v3429
        %v3526 = vpack.c.b16 %v3466, %v3462
        %v3527 = vpack.c.b16 %v3467, %v3463
        %v3528 = vpack.c.b16 %v3468, %v3464
        %v3529 = vpack.c.b16 %v3469, %v3465
        %v3530 = vpack.c.b16 %v3474, %v3470
        %v3531 = vpack.c.b16 %v3475, %v3471
        %v3532 = vpack.c.b16 %v3476, %v3472
        %v3533 = vpack.c.b16 %v3477, %v3473
        %v3534 = vpack.c.b16 %v3482, %v3478
        %v3535 = vpack.c.b16 %v3483, %v3479
        %v3536 = vpack.c.b16 %v3484, %v3480
        %v3537 = vpack.c.b16 %v3485, %v3481
        %v3538 = vpack.c.b16 %v3490, %v3486
        %v3539 = vpack.c.b16 %v3491, %v3487
        %v3540 = vpack.c.b16 %v3492, %v3488
        %v3541 = vpack.c.b16 %v3493, %v3489
        %v3542 = vpack.c.b16 %v3498, %v3494
        %v3543 = vpack.c.b16 %v3499, %v3495
        %v3544 = vpack.c.b16 %v3500, %v3496
        %v3545 = vpack.c.b16 %v3501, %v3497
        %v3546 = vpack.c.b16 %v3506, %v3502
        %v3547 = vpack.c.b16 %v3507, %v3503
        %v3548 = vpack.c.b16 %v3508, %v3504
        %v3549 = vpack.c.b16 %v3509, %v3505
        %v3550 = vpack.c.b16 %v3514, %v3510
        %v3551 = vpack.c.b16 %v3515, %v3511
        %v3552 = vpack.c.b16 %v3516, %v3512
        %v3553 = vpack.c.b16 %v3517, %v3513
        %v3554 = vpack.c.b16 %v3522, %v3518
        %v3555 = vpack.c.b16 %v3523, %v3519
        %v3556 = vpack.c.b16 %v3524, %v3520
        %v3557 = vpack.c.b16 %v3525, %v3521
        %3590 = vmatprep.subr.bf16.mxu0 %v3527
        %3591 = vmatpush1.bf16.msra.mxu0 %v3526
        %3592 = vmatprep.subr.bf16.mxu0 %v3531
        %3593 = vmatpush1.bf16.msra.mxu0 %v3530
        %3594 = vmatprep.subr.bf16.mxu0 %v3535
        %3595 = vmatpush1.bf16.msra.mxu0 %v3534
        %3596 = vmatprep.subr.bf16.mxu0 %v3539
        %3597 = vmatpush1.bf16.msra.mxu0 %v3538
        %3598 = vmatprep.subr.bf16.mxu0 %v3543
        %3599 = vmatpush1.bf16.msra.mxu0 %v3542
        %3600 = vmatprep.subr.bf16.mxu0 %v3547
        %3601 = vmatpush1.bf16.msra.mxu0 %v3546
        %3602 = vmatprep.subr.bf16.mxu0 %v3551
        %3603 = vmatpush1.bf16.msra.mxu0 %v3550
        %3604 = vmatprep.subr.bf16.mxu0 %v3555
        %3605 = vmatpush1.bf16.msra.mxu0 %v3554
        %3606 = vmatprep.subr.bf16.mxu0 0
        %3607 = vmatpush1.bf16.msra.mxu0 0
        %3608 = vmatprep.subr.bf16.mxu0 0
        %3609 = vmatpush1.bf16.msra.mxu0 0
        %3610 = vmatprep.subr.bf16.mxu0 0
        %3611 = vmatpush1.bf16.msra.mxu0 0
        %3612 = vmatprep.subr.bf16.mxu0 0
        %3613 = vmatpush1.bf16.msra.mxu0 0
        %3614 = vmatprep.subr.bf16.mxu0 0
        %3615 = vmatpush1.bf16.msra.mxu0 0
        %3616 = vmatprep.subr.bf16.mxu0 0
        %3617 = vmatpush1.bf16.msra.mxu0 0
        %3618 = vmatprep.subr.bf16.mxu0 0
        %3619 = vmatpush1.bf16.msra.mxu0 0
        %3620 = vmatprep.subr.bf16.mxu0 0
        %3621 = vmatpush1.bf16.msra.mxu0 0
        %3622 = vmatprep.mubr.bf16.mxu0 0
        %3623 = vmatmul.mubr.bf16.gmra.mrb[0].mxu0 %v3397
        %v3624 = vpop.f32.mrb[0].mxu0
        %v3625 = vadd.f32 0.0, %v3624
        %v3626 = vpop.f32.mrb[0].mxu0
        %v3627 = vadd.f32 0.0, %v3626
        %v3628 = vpop.f32.mrb[0].mxu0
        %v3629 = vpop.f32.mrb[0].mxu0
        %3630 = vdwg.mxu0
        %3631 = vmatprep.subr.bf16.mxu0 %v3529
        %3632 = vmatpush1.bf16.msra.mxu0 %v3528
        %3633 = vmatprep.subr.bf16.mxu0 %v3533
        %3634 = vmatpush1.bf16.msra.mxu0 %v3532
        %3635 = vmatprep.subr.bf16.mxu0 %v3537
        %3636 = vmatpush1.bf16.msra.mxu0 %v3536
        %3637 = vmatprep.subr.bf16.mxu0 %v3541
        %3638 = vmatpush1.bf16.msra.mxu0 %v3540
        %3639 = vmatprep.subr.bf16.mxu0 %v3545
        %3640 = vmatpush1.bf16.msra.mxu0 %v3544
        %3641 = vmatprep.subr.bf16.mxu0 %v3549
        %3642 = vmatpush1.bf16.msra.mxu0 %v3548
        %3643 = vmatprep.subr.bf16.mxu0 %v3553
        %3644 = vmatpush1.bf16.msra.mxu0 %v3552
        %3645 = vmatprep.subr.bf16.mxu0 %v3557
        %3646 = vmatpush1.bf16.msra.mxu0 %v3556
        %3647 = vmatprep.subr.bf16.mxu0 0
        %3648 = vmatpush1.bf16.msra.mxu0 0
        %3649 = vmatprep.subr.bf16.mxu0 0
        %3650 = vmatpush1.bf16.msra.mxu0 0
        %3651 = vmatprep.subr.bf16.mxu0 0
        %3652 = vmatpush1.bf16.msra.mxu0 0
        %3653 = vmatprep.subr.bf16.mxu0 0
        %3654 = vmatpush1.bf16.msra.mxu0 0
        %3655 = vmatprep.subr.bf16.mxu0 0
        %3656 = vmatpush1.bf16.msra.mxu0 0
        %3657 = vmatprep.subr.bf16.mxu0 0
        %3658 = vmatpush1.bf16.msra.mxu0 0
        %3659 = vmatprep.subr.bf16.mxu0 0
        %3660 = vmatpush1.bf16.msra.mxu0 0
        %3661 = vmatprep.subr.bf16.mxu0 0
        %3662 = vmatpush1.bf16.msra.mxu0 0
        %3663 = vmatprep.mubr.bf16.mxu0 0
        %3664 = vmatmul.mubr.bf16.gmra.mrb[0].mxu0 %v3397
        %v3665 = vpop.f32.mrb[0].mxu0
        %v3666 = vadd.f32 0.0, %v3665
        %v3667 = vpop.f32.mrb[0].mxu0
        %v3668 = vadd.f32 0.0, %v3667
        %v3669 = vpop.f32.mrb[0].mxu0
        %v3670 = vpop.f32.mrb[0].mxu0
        %3671 = vdwg.mxu0
        %v3676 = vcombine.low %v3625, %v3627
        %v3677 = vcombine.low %v3666, %v3668
        %v3679 = vunpack.c.l.s4 1966171168
        %v3680 = vunpack.c.0.s8 %v3679
        %v3681 = vlaneseq
        %v3682 = vshrl.u32 %v3681, 7
        %v3683 = vsub.s32 %v3680, %v3682
        %v3684 = vrot.slane %v3676, %v3683
        %v3686 = vunpack.c.l.s4 1966171168
        %v3687 = vunpack.c.0.s8 %v3686
        %v3688 = vlaneseq
        %v3689 = vshrl.u32 %v3688, 7
        %v3690 = vsub.s32 %v3687, %v3689
        %v3691 = vrot.slane %v3677, %v3690
        %v3692 = vcombine.low %v3684, %v3691
        %v3694 = vunpack.c.l.s4 1966171168
        %v3695 = vunpack.c.0.s8 %v3694
        %v3696 = vlaneseq
        %v3697 = vshrl.u32 %v3696, 7
        %v3698 = vsub.s32 %v3695, %v3697
        %v3699 = vrot.slane %v3692, %v3698
        %v3701 = vadd.f32 %v3396, %v3699
        %s3702 = scalar_lea.vmem [#allocation16], 256
        %v3703 = vld [vmem:[%s3702] sm:$0xff]
        %v3704 = vld [vmem:[%s3702 + $0x8] sm:$0xff]
        %v3705 = vld [vmem:[%s3702 + $0x10] sm:$0xff]
        %v3706 = vld [vmem:[%s3702 + $0x18] sm:$0xff]
        %v3707 = vld [vmem:[%s3702 + $0x20] sm:$0xff]
        %v3708 = vld [vmem:[%s3702 + $0x28] sm:$0xff]
        %v3709 = vld [vmem:[%s3702 + $0x30] sm:$0xff]
        %v3710 = vld [vmem:[%s3702 + $0x38] sm:$0xff]
        %v3711 = vld [vmem:[%s3702 + $0x40] sm:$0xff]
        %v3712 = vld [vmem:[%s3702 + $0x48] sm:$0xff]
        %v3713 = vld [vmem:[%s3702 + $0x50] sm:$0xff]
        %v3714 = vld [vmem:[%s3702 + $0x58] sm:$0xff]
        %v3715 = vld [vmem:[%s3702 + $0x60] sm:$0xff]
        %v3716 = vld [vmem:[%s3702 + $0x68] sm:$0xff]
        %v3717 = vld [vmem:[%s3702 + $0x70] sm:$0xff]
        %v3718 = vld [vmem:[%s3702 + $0x78] sm:$0xff]
        %v3719 = vld [vmem:[%s3702 + $0x80] sm:$0xff]
        %v3720 = vld [vmem:[%s3702 + $0x88] sm:$0xff]
        %v3721 = vld [vmem:[%s3702 + $0x90] sm:$0xff]
        %v3722 = vld [vmem:[%s3702 + $0x98] sm:$0xff]
        %v3723 = vld [vmem:[%s3702 + $0xa0] sm:$0xff]
        %v3724 = vld [vmem:[%s3702 + $0xa8] sm:$0xff]
        %v3725 = vld [vmem:[%s3702 + $0xb0] sm:$0xff]
        %v3726 = vld [vmem:[%s3702 + $0xb8] sm:$0xff]
        %v3727 = vld [vmem:[%s3702 + $0xc0] sm:$0xff]
        %v3728 = vld [vmem:[%s3702 + $0xc8] sm:$0xff]
        %v3729 = vld [vmem:[%s3702 + $0xd0] sm:$0xff]
        %v3730 = vld [vmem:[%s3702 + $0xd8] sm:$0xff]
        %v3731 = vld [vmem:[%s3702 + $0xe0] sm:$0xff]
        %v3732 = vld [vmem:[%s3702 + $0xe8] sm:$0xff]
        %v3733 = vld [vmem:[%s3702 + $0xf0] sm:$0xff]
        %v3734 = vld [vmem:[%s3702 + $0xf8] sm:$0xff]
        %v3736 = vshrl.u32 %v3397, 16
        %v3771 = vunpack.c.l.b16 %v3703
        %v3772 = vunpack.c.h.b16 %v3703
        %v3773 = vunpack.c.l.b16 %v3704
        %v3774 = vunpack.c.h.b16 %v3704
        %v3775 = vunpack.c.l.b16 %v3705
        %v3776 = vunpack.c.h.b16 %v3705
        %v3777 = vunpack.c.l.b16 %v3706
        %v3778 = vunpack.c.h.b16 %v3706
        %v3779 = vunpack.c.l.b16 %v3707
        %v3780 = vunpack.c.h.b16 %v3707
        %v3781 = vunpack.c.l.b16 %v3708
        %v3782 = vunpack.c.h.b16 %v3708
        %v3783 = vunpack.c.l.b16 %v3709
        %v3784 = vunpack.c.h.b16 %v3709
        %v3785 = vunpack.c.l.b16 %v3710
        %v3786 = vunpack.c.h.b16 %v3710
        %v3787 = vunpack.c.l.b16 %v3711
        %v3788 = vunpack.c.h.b16 %v3711
        %v3789 = vunpack.c.l.b16 %v3712
        %v3790 = vunpack.c.h.b16 %v3712
        %v3791 = vunpack.c.l.b16 %v3713
        %v3792 = vunpack.c.h.b16 %v3713
        %v3793 = vunpack.c.l.b16 %v3714
        %v3794 = vunpack.c.h.b16 %v3714
        %v3795 = vunpack.c.l.b16 %v3715
        %v3796 = vunpack.c.h.b16 %v3715
        %v3797 = vunpack.c.l.b16 %v3716
        %v3798 = vunpack.c.h.b16 %v3716
        %v3799 = vunpack.c.l.b16 %v3717
        %v3800 = vunpack.c.h.b16 %v3717
        %v3801 = vunpack.c.l.b16 %v3718
        %v3802 = vunpack.c.h.b16 %v3718
        %v3803 = vunpack.c.l.b16 %v3719
        %v3804 = vunpack.c.h.b16 %v3719
        %v3805 = vunpack.c.l.b16 %v3720
        %v3806 = vunpack.c.h.b16 %v3720
        %v3807 = vunpack.c.l.b16 %v3721
        %v3808 = vunpack.c.h.b16 %v3721
        %v3809 = vunpack.c.l.b16 %v3722
        %v3810 = vunpack.c.h.b16 %v3722
        %v3811 = vunpack.c.l.b16 %v3723
        %v3812 = vunpack.c.h.b16 %v3723
        %v3813 = vunpack.c.l.b16 %v3724
        %v3814 = vunpack.c.h.b16 %v3724
        %v3815 = vunpack.c.l.b16 %v3725
        %v3816 = vunpack.c.h.b16 %v3725
        %v3817 = vunpack.c.l.b16 %v3726
        %v3818 = vunpack.c.h.b16 %v3726
        %v3819 = vunpack.c.l.b16 %v3727
        %v3820 = vunpack.c.h.b16 %v3727
        %v3821 = vunpack.c.l.b16 %v3728
        %v3822 = vunpack.c.h.b16 %v3728
        %v3823 = vunpack.c.l.b16 %v3729
        %v3824 = vunpack.c.h.b16 %v3729
        %v3825 = vunpack.c.l.b16 %v3730
        %v3826 = vunpack.c.h.b16 %v3730
        %v3827 = vunpack.c.l.b16 %v3731
        %v3828 = vunpack.c.h.b16 %v3731
        %v3829 = vunpack.c.l.b16 %v3732
        %v3830 = vunpack.c.h.b16 %v3732
        %v3831 = vunpack.c.l.b16 %v3733
        %v3832 = vunpack.c.h.b16 %v3733
        %v3833 = vunpack.c.l.b16 %v3734
        %v3834 = vunpack.c.h.b16 %v3734
        %v3835 = vpack.c.b16 %v3775, %v3771
        %v3836 = vpack.c.b16 %v3776, %v3772
        %v3837 = vpack.c.b16 %v3777, %v3773
        %v3838 = vpack.c.b16 %v3778, %v3774
        %v3839 = vpack.c.b16 %v3783, %v3779
        %v3840 = vpack.c.b16 %v3784, %v3780
        %v3841 = vpack.c.b16 %v3785, %v3781
        %v3842 = vpack.c.b16 %v3786, %v3782
        %v3843 = vpack.c.b16 %v3791, %v3787
        %v3844 = vpack.c.b16 %v3792, %v3788
        %v3845 = vpack.c.b16 %v3793, %v3789
        %v3846 = vpack.c.b16 %v3794, %v3790
        %v3847 = vpack.c.b16 %v3799, %v3795
        %v3848 = vpack.c.b16 %v3800, %v3796
        %v3849 = vpack.c.b16 %v3801, %v3797
        %v3850 = vpack.c.b16 %v3802, %v3798
        %v3851 = vpack.c.b16 %v3807, %v3803
        %v3852 = vpack.c.b16 %v3808, %v3804
        %v3853 = vpack.c.b16 %v3809, %v3805
        %v3854 = vpack.c.b16 %v3810, %v3806
        %v3855 = vpack.c.b16 %v3815, %v3811
        %v3856 = vpack.c.b16 %v3816, %v3812
        %v3857 = vpack.c.b16 %v3817, %v3813
        %v3858 = vpack.c.b16 %v3818, %v3814
        %v3859 = vpack.c.b16 %v3823, %v3819
        %v3860 = vpack.c.b16 %v3824, %v3820
        %v3861 = vpack.c.b16 %v3825, %v3821
        %v3862 = vpack.c.b16 %v3826, %v3822
        %v3863 = vpack.c.b16 %v3831, %v3827
        %v3864 = vpack.c.b16 %v3832, %v3828
        %v3865 = vpack.c.b16 %v3833, %v3829
        %v3866 = vpack.c.b16 %v3834, %v3830
        %3899 = vmatprep.subr.bf16.mxu0 %v3836
        %3900 = vmatpush1.bf16.msra.mxu0 %v3835
        %3901 = vmatprep.subr.bf16.mxu0 %v3840
        %3902 = vmatpush1.bf16.msra.mxu0 %v3839
        %3903 = vmatprep.subr.bf16.mxu0 %v3844
        %3904 = vmatpush1.bf16.msra.mxu0 %v3843
        %3905 = vmatprep.subr.bf16.mxu0 %v3848
        %3906 = vmatpush1.bf16.msra.mxu0 %v3847
        %3907 = vmatprep.subr.bf16.mxu0 %v3852
        %3908 = vmatpush1.bf16.msra.mxu0 %v3851
        %3909 = vmatprep.subr.bf16.mxu0 %v3856
        %3910 = vmatpush1.bf16.msra.mxu0 %v3855
        %3911 = vmatprep.subr.bf16.mxu0 %v3860
        %3912 = vmatpush1.bf16.msra.mxu0 %v3859
        %3913 = vmatprep.subr.bf16.mxu0 %v3864
        %3914 = vmatpush1.bf16.msra.mxu0 %v3863
        %3915 = vmatprep.subr.bf16.mxu0 0
        %3916 = vmatpush1.bf16.msra.mxu0 0
        %3917 = vmatprep.subr.bf16.mxu0 0
        %3918 = vmatpush1.bf16.msra.mxu0 0
        %3919 = vmatprep.subr.bf16.mxu0 0
        %3920 = vmatpush1.bf16.msra.mxu0 0
        %3921 = vmatprep.subr.bf16.mxu0 0
        %3922 = vmatpush1.bf16.msra.mxu0 0
        %3923 = vmatprep.subr.bf16.mxu0 0
        %3924 = vmatpush1.bf16.msra.mxu0 0
        %3925 = vmatprep.subr.bf16.mxu0 0
        %3926 = vmatpush1.bf16.msra.mxu0 0
        %3927 = vmatprep.subr.bf16.mxu0 0
        %3928 = vmatpush1.bf16.msra.mxu0 0
        %3929 = vmatprep.subr.bf16.mxu0 0
        %3930 = vmatpush1.bf16.msra.mxu0 0
        %3931 = vmatprep.mubr.bf16.mxu0 0
        %3932 = vmatmul.mubr.bf16.gmra.mrb[0].mxu0 %v3736
        %v3933 = vpop.f32.mrb[0].mxu0
        %v3934 = vadd.f32 0.0, %v3933
        %v3935 = vpop.f32.mrb[0].mxu0
        %v3936 = vadd.f32 0.0, %v3935
        %v3937 = vpop.f32.mrb[0].mxu0
        %v3938 = vpop.f32.mrb[0].mxu0
        %3939 = vdwg.mxu0
        %3940 = vmatprep.subr.bf16.mxu0 %v3838
        %3941 = vmatpush1.bf16.msra.mxu0 %v3837
        %3942 = vmatprep.subr.bf16.mxu0 %v3842
        %3943 = vmatpush1.bf16.msra.mxu0 %v3841
        %3944 = vmatprep.subr.bf16.mxu0 %v3846
        %3945 = vmatpush1.bf16.msra.mxu0 %v3845
        %3946 = vmatprep.subr.bf16.mxu0 %v3850
        %3947 = vmatpush1.bf16.msra.mxu0 %v3849
        %3948 = vmatprep.subr.bf16.mxu0 %v3854
        %3949 = vmatpush1.bf16.msra.mxu0 %v3853
        %3950 = vmatprep.subr.bf16.mxu0 %v3858
        %3951 = vmatpush1.bf16.msra.mxu0 %v3857
        %3952 = vmatprep.subr.bf16.mxu0 %v3862
        %3953 = vmatpush1.bf16.msra.mxu0 %v3861
        %3954 = vmatprep.subr.bf16.mxu0 %v3866
        %3955 = vmatpush1.bf16.msra.mxu0 %v3865
        %3956 = vmatprep.subr.bf16.mxu0 0
        %3957 = vmatpush1.bf16.msra.mxu0 0
        %3958 = vmatprep.subr.bf16.mxu0 0
        %3959 = vmatpush1.bf16.msra.mxu0 0
        %3960 = vmatprep.subr.bf16.mxu0 0
        %3961 = vmatpush1.bf16.msra.mxu0 0
        %3962 = vmatprep.subr.bf16.mxu0 0
        %3963 = vmatpush1.bf16.msra.mxu0 0
        %3964 = vmatprep.subr.bf16.mxu0 0
        %3965 = vmatpush1.bf16.msra.mxu0 0
        %3966 = vmatprep.subr.bf16.mxu0 0
        %3967 = vmatpush1.bf16.msra.mxu0 0
        %3968 = vmatprep.subr.bf16.mxu0 0
        %3969 = vmatpush1.bf16.msra.mxu0 0
        %3970 = vmatprep.subr.bf16.mxu0 0
        %3971 = vmatpush1.bf16.msra.mxu0 0
        %3972 = vmatprep.mubr.bf16.mxu0 0
        %3973 = vmatmul.mubr.bf16.gmra.mrb[0].mxu0 %v3736
        %v3974 = vpop.f32.mrb[0].mxu0
        %v3975 = vadd.f32 0.0, %v3974
        %v3976 = vpop.f32.mrb[0].mxu0
        %v3977 = vadd.f32 0.0, %v3976
        %v3978 = vpop.f32.mrb[0].mxu0
        %v3979 = vpop.f32.mrb[0].mxu0
        %3980 = vdwg.mxu0
        %v3985 = vcombine.low %v3934, %v3936
        %v3986 = vcombine.low %v3975, %v3977
        %v3988 = vunpack.c.l.s4 1966171168
        %v3989 = vunpack.c.0.s8 %v3988
        %v3990 = vlaneseq
        %v3991 = vshrl.u32 %v3990, 7
        %v3992 = vsub.s32 %v3989, %v3991
        %v3993 = vrot.slane %v3985, %v3992
        %v3995 = vunpack.c.l.s4 1966171168
        %v3996 = vunpack.c.0.s8 %v3995
        %v3997 = vlaneseq
        %v3998 = vshrl.u32 %v3997, 7
        %v3999 = vsub.s32 %v3996, %v3998
        %v4000 = vrot.slane %v3986, %v3999
        %v4001 = vcombine.low %v3993, %v4000
        %v4003 = vunpack.c.l.s4 1966171168
        %v4004 = vunpack.c.0.s8 %v4003
        %v4005 = vlaneseq
        %v4006 = vshrl.u32 %v4005, 7
        %v4007 = vsub.s32 %v4004, %v4006
        %v4008 = vrot.slane %v4001, %v4007
        %v4010 = vadd.f32 %v3701, %v4008
        %s4011 = scalar_lea.vmem [#allocation16], 512
        %v4012 = vld [vmem:[%s4011] sm:$0xff]
        %v4013 = vld [vmem:[%s4011 + $0x8] sm:$0xff]
        %v4014 = vld [vmem:[%s4011 + $0x10] sm:$0xff]
        %v4015 = vld [vmem:[%s4011 + $0x18] sm:$0xff]
        %v4016 = vld [vmem:[%s4011 + $0x20] sm:$0xff]
        %v4017 = vld [vmem:[%s4011 + $0x28] sm:$0xff]
        %v4018 = vld [vmem:[%s4011 + $0x30] sm:$0xff]
        %v4019 = vld [vmem:[%s4011 + $0x38] sm:$0xff]
        %v4020 = vld [vmem:[%s4011 + $0x40] sm:$0xff]
        %v4021 = vld [vmem:[%s4011 + $0x48] sm:$0xff]
        %v4022 = vld [vmem:[%s4011 + $0x50] sm:$0xff]
        %v4023 = vld [vmem:[%s4011 + $0x58] sm:$0xff]
        %v4024 = vld [vmem:[%s4011 + $0x60] sm:$0xff]
        %v4025 = vld [vmem:[%s4011 + $0x68] sm:$0xff]
        %v4026 = vld [vmem:[%s4011 + $0x70] sm:$0xff]
        %v4027 = vld [vmem:[%s4011 + $0x78] sm:$0xff]
        %v4028 = vld [vmem:[%s4011 + $0x80] sm:$0xff]
        %v4029 = vld [vmem:[%s4011 + $0x88] sm:$0xff]
        %v4030 = vld [vmem:[%s4011 + $0x90] sm:$0xff]
        %v4031 = vld [vmem:[%s4011 + $0x98] sm:$0xff]
        %v4032 = vld [vmem:[%s4011 + $0xa0] sm:$0xff]
        %v4033 = vld [vmem:[%s4011 + $0xa8] sm:$0xff]
        %v4034 = vld [vmem:[%s4011 + $0xb0] sm:$0xff]
        %v4035 = vld [vmem:[%s4011 + $0xb8] sm:$0xff]
        %v4036 = vld [vmem:[%s4011 + $0xc0] sm:$0xff]
        %v4037 = vld [vmem:[%s4011 + $0xc8] sm:$0xff]
        %v4038 = vld [vmem:[%s4011 + $0xd0] sm:$0xff]
        %v4039 = vld [vmem:[%s4011 + $0xd8] sm:$0xff]
        %v4040 = vld [vmem:[%s4011 + $0xe0] sm:$0xff]
        %v4041 = vld [vmem:[%s4011 + $0xe8] sm:$0xff]
        %v4042 = vld [vmem:[%s4011 + $0xf0] sm:$0xff]
        %v4043 = vld [vmem:[%s4011 + $0xf8] sm:$0xff]
        %v4045 = vrot.slane %v3397, 1
        %v4079 = vunpack.c.l.b16 %v4012
        %v4080 = vunpack.c.h.b16 %v4012
        %v4081 = vunpack.c.l.b16 %v4013
        %v4082 = vunpack.c.h.b16 %v4013
        %v4083 = vunpack.c.l.b16 %v4014
        %v4084 = vunpack.c.h.b16 %v4014
        %v4085 = vunpack.c.l.b16 %v4015
        %v4086 = vunpack.c.h.b16 %v4015
        %v4087 = vunpack.c.l.b16 %v4016
        %v4088 = vunpack.c.h.b16 %v4016
        %v4089 = vunpack.c.l.b16 %v4017
        %v4090 = vunpack.c.h.b16 %v4017
        %v4091 = vunpack.c.l.b16 %v4018
        %v4092 = vunpack.c.h.b16 %v4018
        %v4093 = vunpack.c.l.b16 %v4019
        %v4094 = vunpack.c.h.b16 %v4019
        %v4095 = vunpack.c.l.b16 %v4020
        %v4096 = vunpack.c.h.b16 %v4020
        %v4097 = vunpack.c.l.b16 %v4021
        %v4098 = vunpack.c.h.b16 %v4021
        %v4099 = vunpack.c.l.b16 %v4022
        %v4100 = vunpack.c.h.b16 %v4022
        %v4101 = vunpack.c.l.b16 %v4023
        %v4102 = vunpack.c.h.b16 %v4023
        %v4103 = vunpack.c.l.b16 %v4024
        %v4104 = vunpack.c.h.b16 %v4024
        %v4105 = vunpack.c.l.b16 %v4025
        %v4106 = vunpack.c.h.b16 %v4025
        %v4107 = vunpack.c.l.b16 %v4026
        %v4108 = vunpack.c.h.b16 %v4026
        %v4109 = vunpack.c.l.b16 %v4027
        %v4110 = vunpack.c.h.b16 %v4027
        %v4111 = vunpack.c.l.b16 %v4028
        %v4112 = vunpack.c.h.b16 %v4028
        %v4113 = vunpack.c.l.b16 %v4029
        %v4114 = vunpack.c.h.b16 %v4029
        %v4115 = vunpack.c.l.b16 %v4030
        %v4116 = vunpack.c.h.b16 %v4030
        %v4117 = vunpack.c.l.b16 %v4031
        %v4118 = vunpack.c.h.b16 %v4031
        %v4119 = vunpack.c.l.b16 %v4032
        %v4120 = vunpack.c.h.b16 %v4032
        %v4121 = vunpack.c.l.b16 %v4033
        %v4122 = vunpack.c.h.b16 %v4033
        %v4123 = vunpack.c.l.b16 %v4034
        %v4124 = vunpack.c.h.b16 %v4034
        %v4125 = vunpack.c.l.b16 %v4035
        %v4126 = vunpack.c.h.b16 %v4035
        %v4127 = vunpack.c.l.b16 %v4036
        %v4128 = vunpack.c.h.b16 %v4036
        %v4129 = vunpack.c.l.b16 %v4037
        %v4130 = vunpack.c.h.b16 %v4037
        %v4131 = vunpack.c.l.b16 %v4038
        %v4132 = vunpack.c.h.b16 %v4038
        %v4133 = vunpack.c.l.b16 %v4039
        %v4134 = vunpack.c.h.b16 %v4039
        %v4135 = vunpack.c.l.b16 %v4040
        %v4136 = vunpack.c.h.b16 %v4040
        %v4137 = vunpack.c.l.b16 %v4041
        %v4138 = vunpack.c.h.b16 %v4041
        %v4139 = vunpack.c.l.b16 %v4042
        %v4140 = vunpack.c.h.b16 %v4042
        %v4141 = vunpack.c.l.b16 %v4043
        %v4142 = vunpack.c.h.b16 %v4043
        %v4143 = vpack.c.b16 %v4083, %v4079
        %v4144 = vpack.c.b16 %v4084, %v4080
        %v4145 = vpack.c.b16 %v4085, %v4081
        %v4146 = vpack.c.b16 %v4086, %v4082
        %v4147 = vpack.c.b16 %v4091, %v4087
        %v4148 = vpack.c.b16 %v4092, %v4088
        %v4149 = vpack.c.b16 %v4093, %v4089
        %v4150 = vpack.c.b16 %v4094, %v4090
        %v4151 = vpack.c.b16 %v4099, %v4095
        %v4152 = vpack.c.b16 %v4100, %v4096
        %v4153 = vpack.c.b16 %v4101, %v4097
        %v4154 = vpack.c.b16 %v4102, %v4098
        %v4155 = vpack.c.b16 %v4107, %v4103
        %v4156 = vpack.c.b16 %v4108, %v4104
        %v4157 = vpack.c.b16 %v4109, %v4105
        %v4158 = vpack.c.b16 %v4110, %v4106
        %v4159 = vpack.c.b16 %v4115, %v4111
        %v4160 = vpack.c.b16 %v4116, %v4112
        %v4161 = vpack.c.b16 %v4117, %v4113
        %v4162 = vpack.c.b16 %v4118, %v4114
        %v4163 = vpack.c.b16 %v4123, %v4119
        %v4164 = vpack.c.b16 %v4124, %v4120
        %v4165 = vpack.c.b16 %v4125, %v4121
        %v4166 = vpack.c.b16 %v4126, %v4122
        %v4167 = vpack.c.b16 %v4131, %v4127
        %v4168 = vpack.c.b16 %v4132, %v4128
        %v4169 = vpack.c.b16 %v4133, %v4129
        %v4170 = vpack.c.b16 %v4134, %v4130
        %v4171 = vpack.c.b16 %v4139, %v4135
        %v4172 = vpack.c.b16 %v4140, %v4136
        %v4173 = vpack.c.b16 %v4141, %v4137
        %v4174 = vpack.c.b16 %v4142, %v4138
        %4207 = vmatprep.subr.bf16.mxu0 %v4144
        %4208 = vmatpush1.bf16.msra.mxu0 %v4143
        %4209 = vmatprep.subr.bf16.mxu0 %v4148
        %4210 = vmatpush1.bf16.msra.mxu0 %v4147
        %4211 = vmatprep.subr.bf16.mxu0 %v4152
        %4212 = vmatpush1.bf16.msra.mxu0 %v4151
        %4213 = vmatprep.subr.bf16.mxu0 %v4156
        %4214 = vmatpush1.bf16.msra.mxu0 %v4155
        %4215 = vmatprep.subr.bf16.mxu0 %v4160
        %4216 = vmatpush1.bf16.msra.mxu0 %v4159
        %4217 = vmatprep.subr.bf16.mxu0 %v4164
        %4218 = vmatpush1.bf16.msra.mxu0 %v4163
        %4219 = vmatprep.subr.bf16.mxu0 %v4168
        %4220 = vmatpush1.bf16.msra.mxu0 %v4167
        %4221 = vmatprep.subr.bf16.mxu0 %v4172
        %4222 = vmatpush1.bf16.msra.mxu0 %v4171
        %4223 = vmatprep.subr.bf16.mxu0 0
        %4224 = vmatpush1.bf16.msra.mxu0 0
        %4225 = vmatprep.subr.bf16.mxu0 0
        %4226 = vmatpush1.bf16.msra.mxu0 0
        %4227 = vmatprep.subr.bf16.mxu0 0
        %4228 = vmatpush1.bf16.msra.mxu0 0
        %4229 = vmatprep.subr.bf16.mxu0 0
        %4230 = vmatpush1.bf16.msra.mxu0 0
        %4231 = vmatprep.subr.bf16.mxu0 0
        %4232 = vmatpush1.bf16.msra.mxu0 0
        %4233 = vmatprep.subr.bf16.mxu0 0
        %4234 = vmatpush1.bf16.msra.mxu0 0
        %4235 = vmatprep.subr.bf16.mxu0 0
        %4236 = vmatpush1.bf16.msra.mxu0 0
        %4237 = vmatprep.subr.bf16.mxu0 0
        %4238 = vmatpush1.bf16.msra.mxu0 0
        %4239 = vmatprep.mubr.bf16.mxu0 0
        %4240 = vmatmul.mubr.bf16.gmra.mrb[0].mxu0 %v4045
        %v4241 = vpop.f32.mrb[0].mxu0
        %v4242 = vadd.f32 0.0, %v4241
        %v4243 = vpop.f32.mrb[0].mxu0
        %v4244 = vadd.f32 0.0, %v4243
        %v4245 = vpop.f32.mrb[0].mxu0
        %v4246 = vpop.f32.mrb[0].mxu0
        %4247 = vdwg.mxu0
        %4248 = vmatprep.subr.bf16.mxu0 %v4146
        %4249 = vmatpush1.bf16.msra.mxu0 %v4145
        %4250 = vmatprep.subr.bf16.mxu0 %v4150
        %4251 = vmatpush1.bf16.msra.mxu0 %v4149
        %4252 = vmatprep.subr.bf16.mxu0 %v4154
        %4253 = vmatpush1.bf16.msra.mxu0 %v4153
        %4254 = vmatprep.subr.bf16.mxu0 %v4158
        %4255 = vmatpush1.bf16.msra.mxu0 %v4157
        %4256 = vmatprep.subr.bf16.mxu0 %v4162
        %4257 = vmatpush1.bf16.msra.mxu0 %v4161
        %4258 = vmatprep.subr.bf16.mxu0 %v4166
        %4259 = vmatpush1.bf16.msra.mxu0 %v4165
        %4260 = vmatprep.subr.bf16.mxu0 %v4170
        %4261 = vmatpush1.bf16.msra.mxu0 %v4169
        %4262 = vmatprep.subr.bf16.mxu0 %v4174
        %4263 = vmatpush1.bf16.msra.mxu0 %v4173
        %4264 = vmatprep.subr.bf16.mxu0 0
        %4265 = vmatpush1.bf16.msra.mxu0 0
        %4266 = vmatprep.subr.bf16.mxu0 0
        %4267 = vmatpush1.bf16.msra.mxu0 0
        %4268 = vmatprep.subr.bf16.mxu0 0
        %4269 = vmatpush1.bf16.msra.mxu0 0
        %4270 = vmatprep.subr.bf16.mxu0 0
        %4271 = vmatpush1.bf16.msra.mxu0 0
        %4272 = vmatprep.subr.bf16.mxu0 0
        %4273 = vmatpush1.bf16.msra.mxu0 0
        %4274 = vmatprep.subr.bf16.mxu0 0
        %4275 = vmatpush1.bf16.msra.mxu0 0
        %4276 = vmatprep.subr.bf16.mxu0 0
        %4277 = vmatpush1.bf16.msra.mxu0 0
        %4278 = vmatprep.subr.bf16.mxu0 0
        %4279 = vmatpush1.bf16.msra.mxu0 0
        %4280 = vmatprep.mubr.bf16.mxu0 0
        %4281 = vmatmul.mubr.bf16.gmra.mrb[0].mxu0 %v4045
        %v4282 = vpop.f32.mrb[0].mxu0
        %v4283 = vadd.f32 0.0, %v4282
        %v4284 = vpop.f32.mrb[0].mxu0
        %v4285 = vadd.f32 0.0, %v4284
        %v4286 = vpop.f32.mrb[0].mxu0
        %v4287 = vpop.f32.mrb[0].mxu0
        %4288 = vdwg.mxu0
        %v4293 = vcombine.low %v4242, %v4244
        %v4294 = vcombine.low %v4283, %v4285
        %v4296 = vunpack.c.l.s4 1966171168
        %v4297 = vunpack.c.0.s8 %v4296
        %v4298 = vlaneseq
        %v4299 = vshrl.u32 %v4298, 7
        %v4300 = vsub.s32 %v4297, %v4299
        %v4301 = vrot.slane %v4293, %v4300
        %v4303 = vunpack.c.l.s4 1966171168
        %v4304 = vunpack.c.0.s8 %v4303
        %v4305 = vlaneseq
        %v4306 = vshrl.u32 %v4305, 7
        %v4307 = vsub.s32 %v4304, %v4306
        %v4308 = vrot.slane %v4294, %v4307
        %v4309 = vcombine.low %v4301, %v4308
        %v4311 = vunpack.c.l.s4 1966171168
        %v4312 = vunpack.c.0.s8 %v4311
        %v4313 = vlaneseq
        %v4314 = vshrl.u32 %v4313, 7
        %v4315 = vsub.s32 %v4312, %v4314
        %v4316 = vrot.slane %v4309, %v4315
        %v4318 = vadd.f32 %v4010, %v4316
        %v4319 = vmax.f32 %v4318, 0.0
        %v4321 = vlaneseq
        %v4322 = vshrl.u32 %v4321, 7
        %v4323 = vsub.s32 0, %v4322
        %v4324 = vrot.slane %v4319, %v4323
        %v4325 = vlaneseq
        %v4326 = vshrl.u32 %v4325, 7
        %v4327 = vsub.s32 1, %v4326
        %v4328 = vrot.slane %v4319, %v4327
        %v4329 = vlaneseq
        %v4330 = vshrl.u32 %v4329, 7
        %v4331 = vsub.s32 2, %v4330
        %v4332 = vrot.slane %v4319, %v4331
        %v4333 = vlaneseq
        %v4334 = vshrl.u32 %v4333, 7
        %v4335 = vsub.s32 3, %v4334
        %v4336 = vrot.slane %v4319, %v4335
        %v4341 = vpack.c.bf16 %v4324, %v4324
        %v4342 = vpack.c.bf16 %v4328, %v4328
        %v4343 = vpack.c.bf16 %v4332, %v4332
        %v4344 = vpack.c.bf16 %v4336, %v4336
        %v4345 = vld [vmem:[%s15] sm:$0xf]
        %v4346 = vld [vmem:[%s15 + $0x4] sm:$0xf]
        %v4347 = vld [vmem:[%s15 + $0x8] sm:$0xf]
        %v4348 = vld [vmem:[%s15 + $0xc] sm:$0xf]
        %v4349 = vld [vmem:[%s15 + $0x10] sm:$0xf]
        %v4350 = vld [vmem:[%s15 + $0x14] sm:$0xf]
        %v4351 = vld [vmem:[%s15 + $0x18] sm:$0xf]
        %v4352 = vld [vmem:[%s15 + $0x1c] sm:$0xf]
        %v4353 = vld [vmem:[%s15 + $0x20] sm:$0xf]
        %v4354 = vld [vmem:[%s15 + $0x24] sm:$0xf]
        %v4355 = vld [vmem:[%s15 + $0x28] sm:$0xf]
        %v4356 = vld [vmem:[%s15 + $0x2c] sm:$0xf]
        %v4357 = vld [vmem:[%s15 + $0x30] sm:$0xf]
        %v4358 = vld [vmem:[%s15 + $0x34] sm:$0xf]
        %v4359 = vld [vmem:[%s15 + $0x38] sm:$0xf]
        %v4360 = vld [vmem:[%s15 + $0x3c] sm:$0xf]
        %v4361 = vld [vmem:[%s15 + $0x40] sm:$0xf]
        %v4362 = vld [vmem:[%s15 + $0x44] sm:$0xf]
        %v4363 = vld [vmem:[%s15 + $0x48] sm:$0xf]
        %v4364 = vld [vmem:[%s15 + $0x4c] sm:$0xf]
        %v4365 = vld [vmem:[%s15 + $0x50] sm:$0xf]
        %v4366 = vld [vmem:[%s15 + $0x54] sm:$0xf]
        %v4367 = vld [vmem:[%s15 + $0x58] sm:$0xf]
        %v4368 = vld [vmem:[%s15 + $0x5c] sm:$0xf]
        %v4369 = vld [vmem:[%s15 + $0x60] sm:$0xf]
        %v4370 = vld [vmem:[%s15 + $0x64] sm:$0xf]
        %v4371 = vld [vmem:[%s15 + $0x68] sm:$0xf]
        %v4372 = vld [vmem:[%s15 + $0x6c] sm:$0xf]
        %v4373 = vld [vmem:[%s15 + $0x70] sm:$0xf]
        %v4374 = vld [vmem:[%s15 + $0x74] sm:$0xf]
        %v4375 = vld [vmem:[%s15 + $0x78] sm:$0xf]
        %v4376 = vld [vmem:[%s15 + $0x7c] sm:$0xf]
        %v4377 = vld [vmem:[%s15 + $0x80] sm:$0xf]
        %v4378 = vld [vmem:[%s15 + $0x84] sm:$0xf]
        %v4379 = vld [vmem:[%s15 + $0x88] sm:$0xf]
        %v4380 = vld [vmem:[%s15 + $0x8c] sm:$0xf]
        %v4381 = vld [vmem:[%s15 + $0x90] sm:$0xf]
        %v4382 = vld [vmem:[%s15 + $0x94] sm:$0xf]
        %v4383 = vld [vmem:[%s15 + $0x98] sm:$0xf]
        %v4384 = vld [vmem:[%s15 + $0x9c] sm:$0xf]
        %v4385 = vld [vmem:[%s15 + $0xa0] sm:$0xf]
        %v4386 = vld [vmem:[%s15 + $0xa4] sm:$0xf]
        %v4387 = vld [vmem:[%s15 + $0xa8] sm:$0xf]
        %v4388 = vld [vmem:[%s15 + $0xac] sm:$0xf]
        %v4389 = vld [vmem:[%s15 + $0xb0] sm:$0xf]
        %v4390 = vld [vmem:[%s15 + $0xb4] sm:$0xf]
        %v4391 = vld [vmem:[%s15 + $0xb8] sm:$0xf]
        %v4392 = vld [vmem:[%s15 + $0xbc] sm:$0xf]
        %v4393 = vld [vmem:[%s15 + $0xc0] sm:$0xf]
        %v4394 = vld [vmem:[%s15 + $0xc4] sm:$0xf]
        %v4395 = vld [vmem:[%s15 + $0xc8] sm:$0xf]
        %v4396 = vld [vmem:[%s15 + $0xcc] sm:$0xf]
        %v4397 = vld [vmem:[%s15 + $0xd0] sm:$0xf]
        %v4398 = vld [vmem:[%s15 + $0xd4] sm:$0xf]
        %v4399 = vld [vmem:[%s15 + $0xd8] sm:$0xf]
        %v4400 = vld [vmem:[%s15 + $0xdc] sm:$0xf]
        %v4401 = vld [vmem:[%s15 + $0xe0] sm:$0xf]
        %v4402 = vld [vmem:[%s15 + $0xe4] sm:$0xf]
        %v4403 = vld [vmem:[%s15 + $0xe8] sm:$0xf]
        %v4404 = vld [vmem:[%s15 + $0xec] sm:$0xf]
        %v4405 = vld [vmem:[%s15 + $0xf0] sm:$0xf]
        %v4406 = vld [vmem:[%s15 + $0xf4] sm:$0xf]
        %v4407 = vld [vmem:[%s15 + $0xf8] sm:$0xf]
        %v4408 = vld [vmem:[%s15 + $0xfc] sm:$0xf]
        %v4409 = vld [vmem:[%s16] sm:$0x1]
        %v4474 = vunpack.c.l.b16 %v4345
        %v4475 = vunpack.c.l.b16 %v4346
        %v4476 = vunpack.c.l.b16 %v4347
        %v4477 = vunpack.c.l.b16 %v4348
        %v4478 = vunpack.c.l.b16 %v4349
        %v4479 = vunpack.c.l.b16 %v4350
        %v4480 = vunpack.c.l.b16 %v4351
        %v4481 = vunpack.c.l.b16 %v4352
        %v4482 = vunpack.c.l.b16 %v4353
        %v4483 = vunpack.c.l.b16 %v4354
        %v4484 = vunpack.c.l.b16 %v4355
        %v4485 = vunpack.c.l.b16 %v4356
        %v4486 = vunpack.c.l.b16 %v4357
        %v4487 = vunpack.c.l.b16 %v4358
        %v4488 = vunpack.c.l.b16 %v4359
        %v4489 = vunpack.c.l.b16 %v4360
        %v4490 = vunpack.c.l.b16 %v4361
        %v4491 = vunpack.c.l.b16 %v4362
        %v4492 = vunpack.c.l.b16 %v4363
        %v4493 = vunpack.c.l.b16 %v4364
        %v4494 = vunpack.c.l.b16 %v4365
        %v4495 = vunpack.c.l.b16 %v4366
        %v4496 = vunpack.c.l.b16 %v4367
        %v4497 = vunpack.c.l.b16 %v4368
        %v4498 = vunpack.c.l.b16 %v4369
        %v4499 = vunpack.c.l.b16 %v4370
        %v4500 = vunpack.c.l.b16 %v4371
        %v4501 = vunpack.c.l.b16 %v4372
        %v4502 = vunpack.c.l.b16 %v4373
        %v4503 = vunpack.c.l.b16 %v4374
        %v4504 = vunpack.c.l.b16 %v4375
        %v4505 = vunpack.c.l.b16 %v4376
        %v4506 = vunpack.c.l.b16 %v4377
        %v4507 = vunpack.c.l.b16 %v4378
        %v4508 = vunpack.c.l.b16 %v4379
        %v4509 = vunpack.c.l.b16 %v4380
        %v4510 = vunpack.c.l.b16 %v4381
        %v4511 = vunpack.c.l.b16 %v4382
        %v4512 = vunpack.c.l.b16 %v4383
        %v4513 = vunpack.c.l.b16 %v4384
        %v4514 = vunpack.c.l.b16 %v4385
        %v4515 = vunpack.c.l.b16 %v4386
        %v4516 = vunpack.c.l.b16 %v4387
        %v4517 = vunpack.c.l.b16 %v4388
        %v4518 = vunpack.c.l.b16 %v4389
        %v4519 = vunpack.c.l.b16 %v4390
        %v4520 = vunpack.c.l.b16 %v4391
        %v4521 = vunpack.c.l.b16 %v4392
        %v4522 = vunpack.c.l.b16 %v4393
        %v4523 = vunpack.c.l.b16 %v4394
        %v4524 = vunpack.c.l.b16 %v4395
        %v4525 = vunpack.c.l.b16 %v4396
        %v4526 = vunpack.c.l.b16 %v4397
        %v4527 = vunpack.c.l.b16 %v4398
        %v4528 = vunpack.c.l.b16 %v4399
        %v4529 = vunpack.c.l.b16 %v4400
        %v4530 = vunpack.c.l.b16 %v4401
        %v4531 = vunpack.c.l.b16 %v4402
        %v4532 = vunpack.c.l.b16 %v4403
        %v4533 = vunpack.c.l.b16 %v4404
        %v4534 = vunpack.c.l.b16 %v4405
        %v4535 = vunpack.c.l.b16 %v4406
        %v4536 = vunpack.c.l.b16 %v4407
        %v4537 = vunpack.c.l.b16 %v4408
        %v4538 = vpack.c.b16 %v4475, %v4474
        %v4539 = vpack.c.b16 %v4477, %v4476
        %v4540 = vpack.c.b16 %v4479, %v4478
        %v4541 = vpack.c.b16 %v4481, %v4480
        %v4542 = vpack.c.b16 %v4483, %v4482
        %v4543 = vpack.c.b16 %v4485, %v4484
        %v4544 = vpack.c.b16 %v4487, %v4486
        %v4545 = vpack.c.b16 %v4489, %v4488
        %v4546 = vpack.c.b16 %v4491, %v4490
        %v4547 = vpack.c.b16 %v4493, %v4492
        %v4548 = vpack.c.b16 %v4495, %v4494
        %v4549 = vpack.c.b16 %v4497, %v4496
        %v4550 = vpack.c.b16 %v4499, %v4498
        %v4551 = vpack.c.b16 %v4501, %v4500
        %v4552 = vpack.c.b16 %v4503, %v4502
        %v4553 = vpack.c.b16 %v4505, %v4504
        %v4554 = vpack.c.b16 %v4507, %v4506
        %v4555 = vpack.c.b16 %v4509, %v4508
        %v4556 = vpack.c.b16 %v4511, %v4510
        %v4557 = vpack.c.b16 %v4513, %v4512
        %v4558 = vpack.c.b16 %v4515, %v4514
        %v4559 = vpack.c.b16 %v4517, %v4516
        %v4560 = vpack.c.b16 %v4519, %v4518
        %v4561 = vpack.c.b16 %v4521, %v4520
        %v4562 = vpack.c.b16 %v4523, %v4522
        %v4563 = vpack.c.b16 %v4525, %v4524
        %v4564 = vpack.c.b16 %v4527, %v4526
        %v4565 = vpack.c.b16 %v4529, %v4528
        %v4566 = vpack.c.b16 %v4531, %v4530
        %v4567 = vpack.c.b16 %v4533, %v4532
        %v4568 = vpack.c.b16 %v4535, %v4534
        %v4569 = vpack.c.b16 %v4537, %v4536
        %4602 = vmatprep.subr.bf16.mxu0 0
        %4603 = vmatpush1.bf16.msra.mxu0 %v4538
        %4604 = vmatprep.subr.bf16.mxu0 0
        %4605 = vmatpush1.bf16.msra.mxu0 %v4539
        %4606 = vmatprep.subr.bf16.mxu0 0
        %4607 = vmatpush1.bf16.msra.mxu0 %v4540
        %4608 = vmatprep.subr.bf16.mxu0 0
        %4609 = vmatpush1.bf16.msra.mxu0 %v4541
        %4610 = vmatprep.subr.bf16.mxu0 0
        %4611 = vmatpush1.bf16.msra.mxu0 %v4542
        %4612 = vmatprep.subr.bf16.mxu0 0
        %4613 = vmatpush1.bf16.msra.mxu0 %v4543
        %4614 = vmatprep.subr.bf16.mxu0 0
        %4615 = vmatpush1.bf16.msra.mxu0 %v4544
        %4616 = vmatprep.subr.bf16.mxu0 0
        %4617 = vmatpush1.bf16.msra.mxu0 %v4545
        %4618 = vmatprep.subr.bf16.mxu0 0
        %4619 = vmatpush1.bf16.msra.mxu0 %v4546
        %4620 = vmatprep.subr.bf16.mxu0 0
        %4621 = vmatpush1.bf16.msra.mxu0 %v4547
        %4622 = vmatprep.subr.bf16.mxu0 0
        %4623 = vmatpush1.bf16.msra.mxu0 %v4548
        %4624 = vmatprep.subr.bf16.mxu0 0
        %4625 = vmatpush1.bf16.msra.mxu0 %v4549
        %4626 = vmatprep.subr.bf16.mxu0 0
        %4627 = vmatpush1.bf16.msra.mxu0 %v4550
        %4628 = vmatprep.subr.bf16.mxu0 0
        %4629 = vmatpush1.bf16.msra.mxu0 %v4551
        %4630 = vmatprep.subr.bf16.mxu0 0
        %4631 = vmatpush1.bf16.msra.mxu0 %v4552
        %4632 = vmatprep.subr.bf16.mxu0 0
        %4633 = vmatpush1.bf16.msra.mxu0 %v4553
        %4634 = vmatprep.mubr.bf16.mxu0 %v4342
        %4635 = vmatmul.mubr.bf16.gmra.mrb[0].mxu0 %v4341
        %v4636 = vpop.f32.mrb[0].mxu0
        %v4637 = vadd.f32 %v4409, %v4636
        %v4638 = vpop.f32.mrb[0].mxu0
        %v4639 = vpop.f32.mrb[0].mxu0
        %v4640 = vpop.f32.mrb[0].mxu0
        %4641 = vdwg.mxu0
        %4642 = vmatprep.subr.bf16.mxu0 0
        %4643 = vmatpush1.bf16.msra.mxu0 %v4554
        %4644 = vmatprep.subr.bf16.mxu0 0
        %4645 = vmatpush1.bf16.msra.mxu0 %v4555
        %4646 = vmatprep.subr.bf16.mxu0 0
        %4647 = vmatpush1.bf16.msra.mxu0 %v4556
        %4648 = vmatprep.subr.bf16.mxu0 0
        %4649 = vmatpush1.bf16.msra.mxu0 %v4557
        %4650 = vmatprep.subr.bf16.mxu0 0
        %4651 = vmatpush1.bf16.msra.mxu0 %v4558
        %4652 = vmatprep.subr.bf16.mxu0 0
        %4653 = vmatpush1.bf16.msra.mxu0 %v4559
        %4654 = vmatprep.subr.bf16.mxu0 0
        %4655 = vmatpush1.bf16.msra.mxu0 %v4560
        %4656 = vmatprep.subr.bf16.mxu0 0
        %4657 = vmatpush1.bf16.msra.mxu0 %v4561
        %4658 = vmatprep.subr.bf16.mxu0 0
        %4659 = vmatpush1.bf16.msra.mxu0 %v4562
        %4660 = vmatprep.subr.bf16.mxu0 0
        %4661 = vmatpush1.bf16.msra.mxu0 %v4563
        %4662 = vmatprep.subr.bf16.mxu0 0
        %4663 = vmatpush1.bf16.msra.mxu0 %v4564
        %4664 = vmatprep.subr.bf16.mxu0 0
        %4665 = vmatpush1.bf16.msra.mxu0 %v4565
        %4666 = vmatprep.subr.bf16.mxu0 0
        %4667 = vmatpush1.bf16.msra.mxu0 %v4566
        %4668 = vmatprep.subr.bf16.mxu0 0
        %4669 = vmatpush1.bf16.msra.mxu0 %v4567
        %4670 = vmatprep.subr.bf16.mxu0 0
        %4671 = vmatpush1.bf16.msra.mxu0 %v4568
        %4672 = vmatprep.subr.bf16.mxu0 0
        %4673 = vmatpush1.bf16.msra.mxu0 %v4569
        %4674 = vmatprep.mubr.bf16.mxu0 %v4344
        %4675 = vmatmul.mubr.bf16.gmra.mrb[0].mxu0 %v4343
        %v4676 = vpop.f32.mrb[0].mxu0
        %v4677 = vadd.f32 %v4637, %v4676
        %v4678 = vpop.f32.mrb[0].mxu0
        %v4679 = vpop.f32.mrb[0].mxu0
        %v4680 = vpop.f32.mrb[0].mxu0
        %4681 = vdwg.mxu0
        %vm4682 = vcmask 40960
        %v4683 = vsel %vm4682, %v4677, -inf
        %4684 = vmax.xlane.f32.xlu0 %v4683
        %v4685 = vpop.xlane.xlu0 %4684
        %v4686 = vsub.f32 %v4677, %v4685
        %v4687 = vmul.f32 %v4686, 1.442695
        %v4688 = vpow.pop %v4687
        %v4689 = vsel %vm4682, %v4688, 0.0
        %4690 = vadd.xlane.f32.xlu0 %v4689
        %v4691 = vpop.xlane.xlu0 %4690
        %v4692 = vrcp.pop %v4691
        %v4693 = vmul.f32 %v4688, %v4692
        %4694 = vst.msk [vmem:[%s599] sm:$0x1] %vm4682, %v4693
        %s4695 = sand.u32 %s404, 1
        %s4696 = scalar_lea.sflag [#allocation12], %s4695
        %s4697 = sand.u32 %s404, 1
        %s4698 = scalar_lea.vmem [#allocation18], %s4697
        // Predicated region
        $region105: #{tpu_custom_call.1} parent=87 // pred_check
          %p4699 = pneg %p414
        $region106: #{tpu_custom_call.1} parent=87 // pred_check_branch
          %4701 = sbr.rel (%p4699) target = $region108
        $region107: #{tpu_custom_call.1} parent=87 // pred_region
          %s4703 = ssub.s32 16, 16
          %4704 = vsyncadd %s4696, %s4703
          %s4705 = smul.addr %s34, 16
          %s4706 = scalar_lea.hbm %s17, %s4705
          %s4708 = sshll.u32 %s4698, 4
          %s4709 = int_to_ptr.vmem [resolvable:$true] %s4708
          %4711 = dma.vmem_to_hbm [thread:$0]  %s4709, 16, %s4706, %s4696
        $region108: #{tpu_custom_call.1} parent=87 // pred_fallthru
          _
      $region88: #{tpu_custom_call.1} parent=5 // pred_fallthru
        _
      %p4712 = scmp.le.s32.totalorder 2, %s29
      // Predicated region
      $region109: #{tpu_custom_call.1} parent=5 // pred_check
        %p4713 = pneg %p4712
      $region110: #{tpu_custom_call.1} parent=5 // pred_check_branch
        %4715 = sbr.rel (%p4713) target = $region112
      $region111: #{tpu_custom_call.1} parent=5 // pred_region
        %s4716 = ssub.s32 %s29, 2
        // Predicated region
        $region113: #{tpu_custom_call.1} parent=111 // pred_check
          %p4717 = pneg %p420
        $region114: #{tpu_custom_call.1} parent=111 // pred_check_branch
          %4719 = sbr.rel (%p4717) target = $region116
        $region115: #{tpu_custom_call.1} parent=111 // pred_region
          %s4720 = sand.u32 %s405, 1
          %s4721 = scalar_lea.sflag [#allocation12], %s4720
          %s4722 = sand.u32 %s405, 1
          %s4723 = scalar_lea.vmem [#allocation18], %s4722
          %4724 = dma.done %s4721, 16
        $region116: #{tpu_custom_call.1} parent=111 // pred_fallthru
          _
      $region112: #{tpu_custom_call.1} parent=5 // pred_fallthru
        _
    $region6: #{tpu_custom_call.1} parent=1 // loop_footer
      %s33 = sadd.s32 1, %s29
    $region7: #{tpu_custom_call.1} parent=1 // loop_footer_branch
      %28 = sbr.rel target = $region3
    $region8: #{tpu_custom_call.1} parent=1 // loop_exit
      _
    %4725 = vsyncpa [#allocation11], 1
    %s4726 = scalar_lea.sflag [#allocation11], 1
    %4727 = vsyncpa %s4726, 1
    %4728 = vsyncpa [#allocation14], 1
    %4729 = vsyncpa [#allocation17], 1
    %4730 = vsyncpa [#allocation12], 1
    %s4731 = scalar_lea.sflag [#allocation12], 1
    %4732 = vsyncpa %s4731, 1

</llo_original>
